<compile_context>
chip_gen: v6e
topology: v6e:2x2x1
jax: 0.10.0
libtpu: 0.0.40
codegen_flags: <defaults>
</compile_context>

<pallas_src>
import functools

import jax
import jax.numpy as jnp
from jax.experimental import pallas as pl
from jax.experimental.pallas import tpu as pltpu

BN_EPS = 1e-5
_SINGLE_STEP_BUDGET = 24 << 20     # VMEM budget under which the 1-step path is used
_TILED_STEP_BUDGET = 44 << 20      # per-step VMEM budget for the tiled fallback


def _round_up(x, m):
    return ((x + m - 1) // m) * m


def _weights_bytes(ch, cout):
    cmid = max(cout // 4, 1)
    return (ch * 3 * cout * 2          # wsp (bf16, concat along N)
            + 3 * ch * cout * 2        # wcp (bf16)
            + 3 * cout * 4             # bias
            + 3 * cout * cmid * 4      # w1
            + 3 * cmid * cout * 4)     # w2


def _single_vmem_estimate(hw, ch, cout):
    io = 2 * (4 * hw * ch * 4 + 3 * hw * cout * 4)   # double-buffered ins + outs
    tmp = hw * 3 * cout * 4 + 3 * hw * cout * 4      # shared fsp product + feat temps
    return io + tmp + _weights_bytes(ch, cout)


def _tiled_vmem_estimate(hwp, tm, ch, cout):
    cache = 3 * hwp * cout * 2                        # bf16 feat caches
    io = 2 * (4 * tm * ch * 4 + 3 * tm * cout * 4)
    tmp = tm * 3 * cout * 4 + 3 * tm * cout * 4
    return cache + io + tmp + _weights_bytes(ch, cout) + 6 * cout * 4


# ---------------------------------------------------------------------------
# Path A kernel: one grid step per batch image (full-HW tile, all 3 branches)
# ---------------------------------------------------------------------------
def _ffm_single_kernel(fsp_ref, fseg_ref, fdep_ref, fnor_ref,
                       wsp_ref, wcp_ref, bias_ref, w1_ref, w2_ref,
                       oseg_ref, odep_ref, onor_ref, *, cout, inv_hw):
    """fsp_ref / f*_ref : (1, HW, Ch) input tiles (any float dtype; cast here).
    wsp_ref : (Ch, 3*Cout) bf16  BN-folded fsp-half weights, branches concat on N.
    wcp_ref : (3, Ch, Cout) bf16 BN-folded fcp-half weights per branch.
    bias_ref: (3, Cout) f32 folded-BN bias.   w1/w2: (3, Cout, Cmid)/(3, Cmid, Cout) f32.
    o*_ref  : (1, HW, Cout) f32 per-branch outputs.
    """
    fsp = fsp_ref[0].astype(jnp.bfloat16)                             # (HW, Ch)
    # shared fsp product for all three branches in one wide MXU pass (N = 3*Cout)
    sp = jnp.dot(fsp, wsp_ref[...], preferred_element_type=jnp.float32)

    fcp_refs = (fseg_ref, fdep_ref, fnor_ref)
    out_refs = (oseg_ref, odep_ref, onor_ref)
    for r in range(3):
        fcp = fcp_refs[r][0].astype(jnp.bfloat16)
        acc = sp[:, r * cout:(r + 1) * cout] + jnp.dot(
            fcp, wcp_ref[r], preferred_element_type=jnp.float32)
        feat = jnp.maximum(acc + bias_ref[r:r + 1, :], 0.0)           # (HW, Cout)
        pooled = jnp.sum(feat, axis=0, keepdims=True) * inv_hw        # (1, Cout)
        a = jnp.maximum(jnp.dot(pooled, w1_ref[r],
                                preferred_element_type=jnp.float32), 0.0)
        a = jnp.dot(a, w2_ref[r], preferred_element_type=jnp.float32)
        scale = 1.0 + jax.nn.sigmoid(a)                # feat*atten + feat, fused
        out_refs[r][0] = (feat * scale).astype(out_refs[r].dtype)


def _ffm_single_call(fsp2, fcps2, pk, n, hw, ch, cout):
    est = _single_vmem_estimate(hw, ch, cout)
    vmem_limit = min(max(int(est * 1.5) + (4 << 20), 32 << 20), 120 << 20)

    in_spec = pl.BlockSpec((1, hw, ch), lambda b: (b, 0, 0))
    out_spec = pl.BlockSpec((1, hw, cout), lambda b: (b, 0, 0))

    def wspec(a):
        return pl.BlockSpec(a.shape, lambda b, _nd=a.ndim: (0,) * _nd)

    outs = pl.pallas_call(
        functools.partial(_ffm_single_kernel, cout=cout, inv_hw=1.0 / hw),
        out_shape=[jax.ShapeDtypeStruct((n, hw, cout), jnp.float32)
                   for _ in range(3)],
        grid=(n,),
        in_specs=[in_spec] * 4 + [wspec(pk["wsp"]), wspec(pk["wcp"]),
                                  wspec(pk["bias"]), wspec(pk["w1"]),
                                  wspec(pk["w2"])],
        out_specs=[out_spec] * 3,
        compiler_params=pltpu.CompilerParams(
            dimension_semantics=("parallel",),      # batch across TCs (v7x megacore)
            vmem_limit_bytes=vmem_limit),
    )(fsp2, *fcps2, pk["wsp"], pk["wcp"], pk["bias"], pk["w1"], pk["w2"])
    return list(outs)


# ---------------------------------------------------------------------------
# Path B kernel: spatial tiling + VMEM feat cache (large HW fallback)
# grid = (batch, phase, hw_tile); phase 0 computes feat / pool / attention and
# caches feat in VMEM; phase 1 only reads the cache, scales, and writes.
# ---------------------------------------------------------------------------
def _ffm_tiled_kernel(fsp_ref, fseg_ref, fdep_ref, fnor_ref,
                      wsp_ref, wcp_ref, bias_ref, w1_ref, w2_ref,
                      oseg_ref, odep_ref, onor_ref,
                      cseg_ref, cdep_ref, cnor_ref, pool_ref, scale_ref,
                      *, cout, hw, tm, pad_rows):
    ph = pl.program_id(1)
    t = pl.program_id(2)
    nt = pl.num_programs(2)

    fcp_refs = (fseg_ref, fdep_ref, fnor_ref)
    out_refs = (oseg_ref, odep_ref, onor_ref)
    cache_refs = (cseg_ref, cdep_ref, cnor_ref)

    @pl.when(ph == 0)
    def _compute_phase():
        @pl.when(t == 0)
        def _():
            pool_ref[...] = jnp.zeros_like(pool_ref)

        row0 = pl.multiple_of(t * tm, tm)
        fsp = fsp_ref[0].astype(jnp.bfloat16)                         # (tm, Ch)
        sp = jnp.dot(fsp, wsp_ref[...], preferred_element_type=jnp.float32)
        for r in range(3):
            fcp = fcp_refs[r][0].astype(jnp.bfloat16)
            acc = sp[:, r * cout:(r + 1) * cout] + jnp.dot(
                fcp, wcp_ref[r], preferred_element_type=jnp.float32)
            feat = jnp.maximum(acc + bias_ref[r:r + 1, :], 0.0)       # (tm, Cout)
            cache_refs[r][pl.ds(row0, tm), :] = feat.astype(cache_refs[r].dtype)
            pool_ref[r:r + 1, :] += jnp.sum(feat, axis=0, keepdims=True)

        @pl.when(t == nt - 1)
        def _attention():
            for r in range(3):
                psum = pool_ref[r:r + 1, :]
                if pad_rows:
                    # zero-padded input rows contribute exactly relu(bias) per
                    # channel -> analytic correction instead of per-tile masking
                    psum = psum - pad_rows * jnp.maximum(bias_ref[r:r + 1, :], 0.0)
                pooled = psum * (1.0 / hw)
                a = jnp.maximum(jnp.dot(pooled, w1_ref[r],
                                        preferred_element_type=jnp.float32), 0.0)
                a = jnp.dot(a, w2_ref[r], preferred_element_type=jnp.float32)
                scale_ref[r:r + 1, :] = 1.0 + jax.nn.sigmoid(a)

    @pl.when(ph == 1)
    def _write_phase():
        row0 = pl.multiple_of(t * tm, tm)
        for r in range(3):
            feat = cache_refs[r][pl.ds(row0, tm), :].astype(jnp.float32)
            out_refs[r][0] = (feat * scale_ref[r:r + 1, :]).astype(out_refs[r].dtype)


def _ffm_tiled_call(fsp2, fcps2, pk, n, hw, ch, cout, tile_rows):
    tm = _round_up(max(16, min(tile_rows, hw)), 16)     # bf16 sublane packing: x16
    while tm > 128 and _tiled_vmem_estimate(_round_up(hw, tm), tm, ch, cout) > _TILED_STEP_BUDGET:
        tm = _round_up(tm // 2, 16)
    hwp = _round_up(hw, tm)
    nt = hwp // tm
    pad_rows = hwp - hw
    # TODO(synk): if the bf16 feat cache (3*hwp*cout*2 B) alone exceeds VMEM
    #             (extreme HW), a recompute variant would be needed.

    est = _tiled_vmem_estimate(hwp, tm, ch, cout)
    vmem_limit = min(max(int(est * 1.3) + (4 << 20), 32 << 20), 120 << 20)

    def _pad(x):
        return jnp.pad(x, ((0, 0), (0, pad_rows), (0, 0))) if pad_rows else x

    fsp_p = _pad(fsp2)
    fcps_p = [_pad(x) for x in fcps2]

    # phase 0 streams tile t; phase 1 parks the (unused) input on the last tile
    # so no extra input DMAs happen while the cached feat is being written out.
    in_spec = pl.BlockSpec(
        (1, tm, ch), lambda b, ph, t: (b, t * (1 - ph) + (nt - 1) * ph, 0))
    # phase 0 parks the output on block (b,0) (written later at ph=1,t=0), so
    # every output tile is flushed to HBM exactly once, after being written.
    out_spec = pl.BlockSpec((1, tm, cout), lambda b, ph, t: (b, t * ph, 0))

    def wspec(a):
        return pl.BlockSpec(a.shape, lambda b, ph, t, _nd=a.ndim: (0,) * _nd)

    outs = pl.pallas_call(
        functools.partial(_ffm_tiled_kernel, cout=cout, hw=hw, tm=tm,
                          pad_rows=pad_rows),
        out_shape=[jax.ShapeDtypeStruct((n, hwp, cout), jnp.float32)
                   for _ in range(3)],
        grid=(n, 2, nt),
        in_specs=[in_spec] * 4 + [wspec(pk["wsp"]), wspec(pk["wcp"]),
                                  wspec(pk["bias"]), wspec(pk["w1"]),
                                  wspec(pk["w2"])],
        out_specs=[out_spec] * 3,
        scratch_shapes=[pltpu.VMEM((hwp, cout), jnp.bfloat16) for _ in range(3)]
                       + [pltpu.VMEM((3, cout), jnp.float32),     # pool accum
                          pltpu.VMEM((3, cout), jnp.float32)],    # 1 + sigmoid(att)
        compiler_params=pltpu.CompilerParams(
            dimension_semantics=("parallel", "arbitrary", "arbitrary"),
            vmem_limit_bytes=vmem_limit),
    )(fsp_p, *fcps_p, pk["wsp"], pk["wcp"], pk["bias"], pk["w1"], pk["w2"])
    return [o[:, :hw, :] for o in outs]


# ---------------------------------------------------------------------------
# parameter packing: fold BN scale into the 1x1 weights, stack the 3 branches
# ---------------------------------------------------------------------------
def _pack_params(params, ch):
    wsp_cols, wcp_list, bias_list, w1_list, w2_list = [], [], [], [], []
    for name in ("seg", "depth", "normal"):
        p = params[name]
        s, b = p["bn"][0], p["bn"][1]               # folded BN scale / bias
        w = p["w"]                                   # (2*ch, cout), bias=False
        wsp_cols.append(w[:ch] * s[None, :])         # BN scale folded into weights
        wcp_list.append(w[ch:] * s[None, :])
        bias_list.append(b)
        w1_list.append(p["w1"])
        w2_list.append(p["w2"])
    return dict(
        wsp=jnp.concatenate(wsp_cols, axis=1).astype(jnp.bfloat16),   # (ch, 3*cout)
        wcp=jnp.stack(wcp_list, axis=0).astype(jnp.bfloat16),         # (3, ch, cout)
        bias=jnp.stack(bias_list, axis=0).astype(jnp.float32),        # (3, cout)
        w1=jnp.stack(w1_list, axis=0).astype(jnp.float32),            # (3, cout, cmid)
        w2=jnp.stack(w2_list, axis=0).astype(jnp.float32),            # (3, cmid, cout)
    )


def ffm_forward(fsp, fcp_seg, fcp_depth, fcp_normal, params, *,
                force_tiled=False, tile_rows=512):
    """MultiModalDistillationFeatureFusionModule.forward (NHWC).

    fcp_others is dead in the reference forward (convOthers is non-empty since
    num_others=2, so the `else` branch always runs): out_r = feat_r*(1+atten_r).
    Returns [out_seg, out_depth, out_normal], each (N, H, W, out_chan) f32.
    """
    n, h, w, ch = fsp.shape
    hw = h * w
    cout = params["seg"]["w"].shape[1]
    pk = _pack_params(params, ch)

    to2d = lambda x: x.reshape(n, hw, ch)            # free (contiguous merge)
    fsp2 = to2d(fsp)
    fcps2 = [to2d(fcp_seg), to2d(fcp_depth), to2d(fcp_normal)]

    if (not force_tiled) and _single_vmem_estimate(hw, ch, cout) <= _SINGLE_STEP_BUDGET:
        outs = _ffm_single_call(fsp2, fcps2, pk, n, hw, ch, cout)
    else:
        outs = _ffm_tiled_call(fsp2, fcps2, pk, n, hw, ch, cout, tile_rows)
    return [o.reshape(n, h, w, cout) for o in outs]


# ---------------------------------------------------------------------------
# deterministic parameter init (mirrors the module's shapes; kaiming a=1)
# ---------------------------------------------------------------------------
def _kaiming(key, shape, fan_in):
    # nn.init.kaiming_normal_(w, a=1): std = sqrt(2/(1+1)) / sqrt(fan_in)
    return jax.random.normal(key, shape, jnp.float32) * (1.0 / fan_in) ** 0.5


def _bn_params(key, c):
    k1, k2, k3, k4 = jax.random.split(key, 4)
    gamma = 1.0 + 0.1 * jax.random.normal(k1, (c,), jnp.float32)
    beta = 0.1 * jax.random.normal(k2, (c,), jnp.float32)
    mean = 0.1 * jax.random.normal(k3, (c,), jnp.float32)
    var = 1.0 + 0.1 * jax.random.uniform(k4, (c,), jnp.float32)
    scale = gamma / jnp.sqrt(var + BN_EPS)
    bias = beta - mean * scale
    return jnp.stack([scale, bias], axis=0)           # packed (2, C) eval-mode fold


def init_mmd_params(key, in_chan, out_chan):
    cmid = out_chan // 4
    k1, k2, k3, k4 = jax.random.split(key, 4)
    return dict(
        w=_kaiming(k1, (in_chan, out_chan), in_chan),      # convblk 1x1, bias=False
        bn=_bn_params(k2, out_chan),                        # folded BN (eval mode)
        w1=_kaiming(k3, (out_chan, cmid), out_chan),        # conv1 1x1, bias=False
        w2=_kaiming(k4, (cmid, out_chan), cmid),            # conv2 1x1, bias=False
    )
    # convOthers: never used in forward (else branch) -> not materialized.


# ---------------------------------------------------------------------------
# pure-JAX f32 reference
# ---------------------------------------------------------------------------
def _ref_mmd(fsp, fcp, prm):
    n, h, w, ch = fsp.shape
    cout = prm["w"].shape[1]
    x = jnp.concatenate([fsp, fcp], axis=-1).reshape(n, h * w, 2 * ch)
    feat = jnp.maximum(x @ prm["w"] * prm["bn"][0] + prm["bn"][1], 0.0)
    pooled = feat.mean(axis=1)
    att = jax.nn.sigmoid(jnp.maximum(pooled @ prm["w1"], 0.0) @ prm["w2"])
    return (feat * (1.0 + att)[:, None, :]).reshape(n, h, w, cout)


def _ref_ffm(fsp, fcp_seg, fcp_depth, fcp_normal, params):
    return [_ref_mmd(fsp, fcp_seg, params["seg"]),
            _ref_mmd(fsp, fcp_depth, params["depth"]),
            _ref_mmd(fsp, fcp_normal, params["normal"])]


# ---------------------------------------------------------------------------
if __name__ == "__main__":
    keys = jax.random.split(jax.random.PRNGKey(0), 7)

    N, H, W = 2, 24, 24                 # HW = 576
    in_chan, out_chan = 256, 128        # fsp/fcp each carry in_chan//2 channels
    ch = in_chan // 2

    fsp = jax.random.normal(keys[0], (N, H, W, ch), jnp.float32)
    fcp_seg = jax.random.normal(keys[1], (N, H, W, ch), jnp.float32)
    fcp_depth = jax.random.normal(keys[2], (N, H, W, ch), jnp.float32)
    fcp_normal = jax.random.normal(keys[3], (N, H, W, ch), jnp.float32)

    params = {
        "seg": init_mmd_params(keys[4], in_chan, out_chan),
        "depth": init_mmd_params(keys[5], in_chan, out_chan),
        "normal": init_mmd_params(keys[6], in_chan, out_chan),
    }

    fused = jax.jit(ffm_forward, static_argnames=("force_tiled", "tile_rows"))

    # Path A: single grid step per batch image (no phases, no recompute).
    outs_a = jax.block_until_ready(
        fused(fsp, fcp_seg, fcp_depth, fcp_normal, params))
    # Path B: force the tiled / feat-cache fallback so it is also validated
    # (tile_rows=128 exercises padding, multi-tile pooling and both phases).
    outs_b = jax.block_until_ready(
        fused(fsp, fcp_seg, fcp_depth, fcp_normal, params,
              force_tiled=True, tile_rows=128))
    refs = jax.block_until_ready(
        _ref_ffm(fsp, fcp_seg, fcp_depth, fcp_normal, params))

    for tag, outs in (("single", outs_a), ("tiled", outs_b)):
        for name, o, r in zip(("seg", "depth", "normal"), outs, refs):
            assert o.shape == r.shape, (tag, name, o.shape, r.shape)
            err = float(jnp.max(jnp.abs(o - r)))
            assert jnp.allclose(o, r, rtol=3e-2, atol=3e-2), (tag, name, err)

    print("KERNEL_OK")
</pallas_src>

<mosaic_0001>
module attributes {stable_mosaic.version = 11 : i64} {
  func.func @_ffm_single_kernel(%arg0: i32, %arg1: memref<1x576x128xf32, #tpu.memory_space<vmem>>, %arg2: memref<1x576x128xf32, #tpu.memory_space<vmem>>, %arg3: memref<1x576x128xf32, #tpu.memory_space<vmem>>, %arg4: memref<1x576x128xf32, #tpu.memory_space<vmem>>, %arg5: memref<128x384xbf16, #tpu.memory_space<vmem>>, %arg6: memref<3x128x128xbf16, #tpu.memory_space<vmem>>, %arg7: memref<3x128xf32, #tpu.memory_space<vmem>>, %arg8: memref<3x128x32xf32, #tpu.memory_space<vmem>>, %arg9: memref<3x32x128xf32, #tpu.memory_space<vmem>>, %arg10: memref<1x576x128xf32, #tpu.memory_space<vmem>>, %arg11: memref<1x576x128xf32, #tpu.memory_space<vmem>>, %arg12: memref<1x576x128xf32, #tpu.memory_space<vmem>>) attributes {dimension_semantics = [#tpu.dimension_semantics<parallel>], iteration_bounds = array<i64: 2>, scalar_prefetch = 0 : i64, scratch_operands = 0 : i64, tpu.core_type = #tpu.core_type<tc>, window_params = [{transform_indices = @transform_0, window_bounds = array<i64: 1, 576, 128>}, {transform_indices = @transform_1, window_bounds = array<i64: 1, 576, 128>}, {transform_indices = @transform_2, window_bounds = array<i64: 1, 576, 128>}, {transform_indices = @transform_3, window_bounds = array<i64: 1, 576, 128>}, {pipeline_mode = #tpu.pipeline_mode<synchronous>, transform_indices = @transform_4, window_bounds = array<i64: 128, 384>}, {pipeline_mode = #tpu.pipeline_mode<synchronous>, transform_indices = @transform_5, window_bounds = array<i64: 3, 128, 128>}, {pipeline_mode = #tpu.pipeline_mode<synchronous>, transform_indices = @transform_6, window_bounds = array<i64: 3, 128>}, {pipeline_mode = #tpu.pipeline_mode<synchronous>, transform_indices = @transform_7, window_bounds = array<i64: 3, 128, 32>}, {pipeline_mode = #tpu.pipeline_mode<synchronous>, transform_indices = @transform_8, window_bounds = array<i64: 3, 32, 128>}, {transform_indices = @transform_9, window_bounds = array<i64: 1, 576, 128>}, {transform_indices = @transform_10, window_bounds = array<i64: 1, 576, 128>}, {transform_indices = @transform_11, window_bounds = array<i64: 1, 576, 128>}]} {
    %c0 = arith.constant 0 : index
    %c0_0 = arith.constant 0 : index
    %c0_1 = arith.constant 0 : index
    %0 = vector.load %arg1[%c0, %c0_0, %c0_1] : memref<1x576x128xf32, #tpu.memory_space<vmem>>, vector<1x576x128xf32>
    %1 = vector.shape_cast %0 : vector<1x576x128xf32> to vector<576x128xf32>
    %2 = arith.truncf %1 : vector<576x128xf32> to vector<576x128xbf16>
    %c0_2 = arith.constant 0 : index
    %c0_3 = arith.constant 0 : index
    %3 = vector.load %arg5[%c0_2, %c0_3] : memref<128x384xbf16, #tpu.memory_space<vmem>>, vector<128x384xbf16>
    %cst = arith.constant dense<0.000000e+00> : vector<576x384xf32>
    %4 = tpu.matmul %2, %3, %cst {dimension_numbers = #tpu.dot_dimension_numbers<[1], [0], [0], [1], [0, 0, 1, 1], [], []>} : vector<576x128xbf16>, vector<128x384xbf16>, vector<576x384xf32> -> vector<576x384xf32>
    %c0_4 = arith.constant 0 : index
    %c0_5 = arith.constant 0 : index
    %c0_6 = arith.constant 0 : index
    %5 = vector.load %arg2[%c0_4, %c0_5, %c0_6] : memref<1x576x128xf32, #tpu.memory_space<vmem>>, vector<1x576x128xf32>
    %6 = vector.shape_cast %5 : vector<1x576x128xf32> to vector<576x128xf32>
    %7 = arith.truncf %6 : vector<576x128xf32> to vector<576x128xbf16>
    %8 = vector.extract_strided_slice %4 {offsets = [0, 0], sizes = [576, 128], strides = [1, 1]} : vector<576x384xf32> to vector<576x128xf32>
    %c0_7 = arith.constant 0 : index
    %c0_8 = arith.constant 0 : index
    %c0_9 = arith.constant 0 : index
    %9 = vector.load %arg6[%c0_7, %c0_8, %c0_9] : memref<3x128x128xbf16, #tpu.memory_space<vmem>>, vector<1x128x128xbf16>
    %10 = vector.shape_cast %9 : vector<1x128x128xbf16> to vector<128x128xbf16>
    %cst_10 = arith.constant dense<0.000000e+00> : vector<576x128xf32>
    %11 = tpu.matmul %7, %10, %cst_10 {dimension_numbers = #tpu.dot_dimension_numbers<[1], [0], [0], [1], [0, 0, 1, 1], [], []>} : vector<576x128xbf16>, vector<128x128xbf16>, vector<576x128xf32> -> vector<576x128xf32>
    %12 = arith.addf %8, %11 : vector<576x128xf32>
    %c0_11 = arith.constant 0 : index
    %c0_12 = arith.constant 0 : index
    %13 = vector.load %arg7[%c0_11, %c0_12] : memref<3x128xf32, #tpu.memory_space<vmem>>, vector<1x128xf32>
    %14 = vector.broadcast %13 : vector<1x128xf32> to vector<576x128xf32>
    %15 = arith.addf %12, %14 : vector<576x128xf32>
    %cst_13 = arith.constant 0.000000e+00 : f32
    %16 = vector.broadcast %cst_13 : f32 to vector<576x128xf32>
    %17 = arith.maximumf %15, %16 : vector<576x128xf32>
    %cst_14 = arith.constant dense<0.000000e+00> : vector<128xf32>
    %18 = vector.multi_reduction <add>, %17, %cst_14 [0] : vector<576x128xf32> to vector<128xf32>
    %19 = vector.shape_cast %18 : vector<128xf32> to vector<1x128xf32>
    %cst_15 = arith.constant 0.00173611112 : f32
    %20 = vector.broadcast %cst_15 : f32 to vector<1x128xf32>
    %21 = arith.mulf %19, %20 : vector<1x128xf32>
    %c0_16 = arith.constant 0 : index
    %c0_17 = arith.constant 0 : index
    %c0_18 = arith.constant 0 : index
    %22 = vector.load %arg8[%c0_16, %c0_17, %c0_18] : memref<3x128x32xf32, #tpu.memory_space<vmem>>, vector<1x128x32xf32>
    %23 = vector.shape_cast %22 : vector<1x128x32xf32> to vector<128x32xf32>
    %cst_19 = arith.constant dense<0.000000e+00> : vector<1x32xf32>
    %24 = tpu.matmul %21, %23, %cst_19 {dimension_numbers = #tpu.dot_dimension_numbers<[1], [0], [0], [1], [0, 0, 1, 1], [], []>} : vector<1x128xf32>, vector<128x32xf32>, vector<1x32xf32> -> vector<1x32xf32>
    %cst_20 = arith.constant 0.000000e+00 : f32
    %25 = vector.broadcast %cst_20 : f32 to vector<1x32xf32>
    %26 = arith.maximumf %24, %25 : vector<1x32xf32>
    %c0_21 = arith.constant 0 : index
    %c0_22 = arith.constant 0 : index
    %c0_23 = arith.constant 0 : index
    %27 = vector.load %arg9[%c0_21, %c0_22, %c0_23] : memref<3x32x128xf32, #tpu.memory_space<vmem>>, vector<1x32x128xf32>
    %28 = vector.shape_cast %27 : vector<1x32x128xf32> to vector<32x128xf32>
    %cst_24 = arith.constant dense<0.000000e+00> : vector<1x128xf32>
    %29 = tpu.matmul %26, %28, %cst_24 {dimension_numbers = #tpu.dot_dimension_numbers<[1], [0], [0], [1], [0, 0, 1, 1], [], []>} : vector<1x32xf32>, vector<32x128xf32>, vector<1x128xf32> -> vector<1x128xf32>
    %30 = arith.negf %29 : vector<1x128xf32>
    %31 = math.exp %30 : vector<1x128xf32>
    %cst_25 = arith.constant 1.000000e+00 : f32
    %32 = vector.broadcast %cst_25 : f32 to vector<1x128xf32>
    %33 = arith.addf %32, %31 : vector<1x128xf32>
    %34 = arith.divf %32, %33 : vector<1x128xf32>
    %cst_26 = arith.constant 1.000000e+00 : f32
    %35 = vector.broadcast %cst_26 : f32 to vector<1x128xf32>
    %36 = arith.addf %35, %34 : vector<1x128xf32>
    %37 = vector.broadcast %36 : vector<1x128xf32> to vector<576x128xf32>
    %38 = arith.mulf %17, %37 : vector<576x128xf32>
    %c0_27 = arith.constant 0 : index
    %c0_28 = arith.constant 0 : index
    %c0_29 = arith.constant 0 : index
    %39 = vector.load %arg10[%c0_27, %c0_28, %c0_29] : memref<1x576x128xf32, #tpu.memory_space<vmem>>, vector<1x576x128xf32>
    %40 = vector.shape_cast %39 : vector<1x576x128xf32> to vector<576x128xf32>
    %41 = vector.shape_cast %38 : vector<576x128xf32> to vector<1x576x128xf32>
    tpu.vector_store %arg10[%c0_27, %c0_28, %c0_29], %41 {strides = array<i32>} : memref<1x576x128xf32, #tpu.memory_space<vmem>>, vector<1x576x128xf32>,
    %c0_30 = arith.constant 0 : index
    %c0_31 = arith.constant 0 : index
    %c0_32 = arith.constant 0 : index
    %42 = vector.load %arg3[%c0_30, %c0_31, %c0_32] : memref<1x576x128xf32, #tpu.memory_space<vmem>>, vector<1x576x128xf32>
    %43 = vector.shape_cast %42 : vector<1x576x128xf32> to vector<576x128xf32>
    %44 = arith.truncf %43 : vector<576x128xf32> to vector<576x128xbf16>
    %45 = vector.extract_strided_slice %4 {offsets = [0, 128], sizes = [576, 128], strides = [1, 1]} : vector<576x384xf32> to vector<576x128xf32>
    %c1 = arith.constant 1 : index
    %c0_33 = arith.constant 0 : index
    %c0_34 = arith.constant 0 : index
    %46 = vector.load %arg6[%c1, %c0_33, %c0_34] : memref<3x128x128xbf16, #tpu.memory_space<vmem>>, vector<1x128x128xbf16>
    %47 = vector.shape_cast %46 : vector<1x128x128xbf16> to vector<128x128xbf16>
    %cst_35 = arith.constant dense<0.000000e+00> : vector<576x128xf32>
    %48 = tpu.matmul %44, %47, %cst_35 {dimension_numbers = #tpu.dot_dimension_numbers<[1], [0], [0], [1], [0, 0, 1, 1], [], []>} : vector<576x128xbf16>, vector<128x128xbf16>, vector<576x128xf32> -> vector<576x128xf32>
    %49 = arith.addf %45, %48 : vector<576x128xf32>
    %c1_36 = arith.constant 1 : index
    %c0_37 = arith.constant 0 : index
    %50 = vector.load %arg7[%c1_36, %c0_37] : memref<3x128xf32, #tpu.memory_space<vmem>>, vector<1x128xf32>
    %51 = vector.broadcast %50 : vector<1x128xf32> to vector<576x128xf32>
    %52 = arith.addf %49, %51 : vector<576x128xf32>
    %cst_38 = arith.constant 0.000000e+00 : f32
    %53 = vector.broadcast %cst_38 : f32 to vector<576x128xf32>
    %54 = arith.maximumf %52, %53 : vector<576x128xf32>
    %cst_39 = arith.constant dense<0.000000e+00> : vector<128xf32>
    %55 = vector.multi_reduction <add>, %54, %cst_39 [0] : vector<576x128xf32> to vector<128xf32>
    %56 = vector.shape_cast %55 : vector<128xf32> to vector<1x128xf32>
    %cst_40 = arith.constant 0.00173611112 : f32
    %57 = vector.broadcast %cst_40 : f32 to vector<1x128xf32>
    %58 = arith.mulf %56, %57 : vector<1x128xf32>
    %c1_41 = arith.constant 1 : index
    %c0_42 = arith.constant 0 : index
    %c0_43 = arith.constant 0 : index
    %59 = vector.load %arg8[%c1_41, %c0_42, %c0_43] : memref<3x128x32xf32, #tpu.memory_space<vmem>>, vector<1x128x32xf32>
    %60 = vector.shape_cast %59 : vector<1x128x32xf32> to vector<128x32xf32>
    %cst_44 = arith.constant dense<0.000000e+00> : vector<1x32xf32>
    %61 = tpu.matmul %58, %60, %cst_44 {dimension_numbers = #tpu.dot_dimension_numbers<[1], [0], [0], [1], [0, 0, 1, 1], [], []>} : vector<1x128xf32>, vector<128x32xf32>, vector<1x32xf32> -> vector<1x32xf32>
    %cst_45 = arith.constant 0.000000e+00 : f32
    %62 = vector.broadcast %cst_45 : f32 to vector<1x32xf32>
    %63 = arith.maximumf %61, %62 : vector<1x32xf32>
    %c1_46 = arith.constant 1 : index
    %c0_47 = arith.constant 0 : index
    %c0_48 = arith.constant 0 : index
    %64 = vector.load %arg9[%c1_46, %c0_47, %c0_48] : memref<3x32x128xf32, #tpu.memory_space<vmem>>, vector<1x32x128xf32>
    %65 = vector.shape_cast %64 : vector<1x32x128xf32> to vector<32x128xf32>
    %cst_49 = arith.constant dense<0.000000e+00> : vector<1x128xf32>
    %66 = tpu.matmul %63, %65, %cst_49 {dimension_numbers = #tpu.dot_dimension_numbers<[1], [0], [0], [1], [0, 0, 1, 1], [], []>} : vector<1x32xf32>, vector<32x128xf32>, vector<1x128xf32> -> vector<1x128xf32>
    %67 = arith.negf %66 : vector<1x128xf32>
    %68 = math.exp %67 : vector<1x128xf32>
    %cst_50 = arith.constant 1.000000e+00 : f32
    %69 = vector.broadcast %cst_50 : f32 to vector<1x128xf32>
    %70 = arith.addf %69, %68 : vector<1x128xf32>
    %71 = arith.divf %69, %70 : vector<1x128xf32>
    %cst_51 = arith.constant 1.000000e+00 : f32
    %72 = vector.broadcast %cst_51 : f32 to vector<1x128xf32>
    %73 = arith.addf %72, %71 : vector<1x128xf32>
    %74 = vector.broadcast %73 : vector<1x128xf32> to vector<576x128xf32>
    %75 = arith.mulf %54, %74 : vector<576x128xf32>
    %c0_52 = arith.constant 0 : index
    %c0_53 = arith.constant 0 : index
    %c0_54 = arith.constant 0 : index
    %76 = vector.load %arg11[%c0_52, %c0_53, %c0_54] : memref<1x576x128xf32, #tpu.memory_space<vmem>>, vector<1x576x128xf32>
    %77 = vector.shape_cast %76 : vector<1x576x128xf32> to vector<576x128xf32>
    %78 = vector.shape_cast %75 : vector<576x128xf32> to vector<1x576x128xf32>
    tpu.vector_store %arg11[%c0_52, %c0_53, %c0_54], %78 {strides = array<i32>} : memref<1x576x128xf32, #tpu.memory_space<vmem>>, vector<1x576x128xf32>,
    %c0_55 = arith.constant 0 : index
    %c0_56 = arith.constant 0 : index
    %c0_57 = arith.constant 0 : index
    %79 = vector.load %arg4[%c0_55, %c0_56, %c0_57] : memref<1x576x128xf32, #tpu.memory_space<vmem>>, vector<1x576x128xf32>
    %80 = vector.shape_cast %79 : vector<1x576x128xf32> to vector<576x128xf32>
    %81 = arith.truncf %80 : vector<576x128xf32> to vector<576x128xbf16>
    %82 = vector.extract_strided_slice %4 {offsets = [0, 256], sizes = [576, 128], strides = [1, 1]} : vector<576x384xf32> to vector<576x128xf32>
    %c2 = arith.constant 2 : index
    %c0_58 = arith.constant 0 : index
    %c0_59 = arith.constant 0 : index
    %83 = vector.load %arg6[%c2, %c0_58, %c0_59] : memref<3x128x128xbf16, #tpu.memory_space<vmem>>, vector<1x128x128xbf16>
    %84 = vector.shape_cast %83 : vector<1x128x128xbf16> to vector<128x128xbf16>
    %cst_60 = arith.constant dense<0.000000e+00> : vector<576x128xf32>
    %85 = tpu.matmul %81, %84, %cst_60 {dimension_numbers = #tpu.dot_dimension_numbers<[1], [0], [0], [1], [0, 0, 1, 1], [], []>} : vector<576x128xbf16>, vector<128x128xbf16>, vector<576x128xf32> -> vector<576x128xf32>
    %86 = arith.addf %82, %85 : vector<576x128xf32>
    %c2_61 = arith.constant 2 : index
    %c0_62 = arith.constant 0 : index
    %87 = vector.load %arg7[%c2_61, %c0_62] : memref<3x128xf32, #tpu.memory_space<vmem>>, vector<1x128xf32>
    %88 = vector.broadcast %87 : vector<1x128xf32> to vector<576x128xf32>
    %89 = arith.addf %86, %88 : vector<576x128xf32>
    %cst_63 = arith.constant 0.000000e+00 : f32
    %90 = vector.broadcast %cst_63 : f32 to vector<576x128xf32>
    %91 = arith.maximumf %89, %90 : vector<576x128xf32>
    %cst_64 = arith.constant dense<0.000000e+00> : vector<128xf32>
    %92 = vector.multi_reduction <add>, %91, %cst_64 [0] : vector<576x128xf32> to vector<128xf32>
    %93 = vector.shape_cast %92 : vector<128xf32> to vector<1x128xf32>
    %cst_65 = arith.constant 0.00173611112 : f32
    %94 = vector.broadcast %cst_65 : f32 to vector<1x128xf32>
    %95 = arith.mulf %93, %94 : vector<1x128xf32>
    %c2_66 = arith.constant 2 : index
    %c0_67 = arith.constant 0 : index
    %c0_68 = arith.constant 0 : index
    %96 = vector.load %arg8[%c2_66, %c0_67, %c0_68] : memref<3x128x32xf32, #tpu.memory_space<vmem>>, vector<1x128x32xf32>
    %97 = vector.shape_cast %96 : vector<1x128x32xf32> to vector<128x32xf32>
    %cst_69 = arith.constant dense<0.000000e+00> : vector<1x32xf32>
    %98 = tpu.matmul %95, %97, %cst_69 {dimension_numbers = #tpu.dot_dimension_numbers<[1], [0], [0], [1], [0, 0, 1, 1], [], []>} : vector<1x128xf32>, vector<128x32xf32>, vector<1x32xf32> -> vector<1x32xf32>
    %cst_70 = arith.constant 0.000000e+00 : f32
    %99 = vector.broadcast %cst_70 : f32 to vector<1x32xf32>
    %100 = arith.maximumf %98, %99 : vector<1x32xf32>
    %c2_71 = arith.constant 2 : index
    %c0_72 = arith.constant 0 : index
    %c0_73 = arith.constant 0 : index
    %101 = vector.load %arg9[%c2_71, %c0_72, %c0_73] : memref<3x32x128xf32, #tpu.memory_space<vmem>>, vector<1x32x128xf32>
    %102 = vector.shape_cast %101 : vector<1x32x128xf32> to vector<32x128xf32>
    %cst_74 = arith.constant dense<0.000000e+00> : vector<1x128xf32>
    %103 = tpu.matmul %100, %102, %cst_74 {dimension_numbers = #tpu.dot_dimension_numbers<[1], [0], [0], [1], [0, 0, 1, 1], [], []>} : vector<1x32xf32>, vector<32x128xf32>, vector<1x128xf32> -> vector<1x128xf32>
    %104 = arith.negf %103 : vector<1x128xf32>
    %105 = math.exp %104 : vector<1x128xf32>
    %cst_75 = arith.constant 1.000000e+00 : f32
    %106 = vector.broadcast %cst_75 : f32 to vector<1x128xf32>
    %107 = arith.addf %106, %105 : vector<1x128xf32>
    %108 = arith.divf %106, %107 : vector<1x128xf32>
    %cst_76 = arith.constant 1.000000e+00 : f32
    %109 = vector.broadcast %cst_76 : f32 to vector<1x128xf32>
    %110 = arith.addf %109, %108 : vector<1x128xf32>
    %111 = vector.broadcast %110 : vector<1x128xf32> to vector<576x128xf32>
    %112 = arith.mulf %91, %111 : vector<576x128xf32>
    %c0_77 = arith.constant 0 : index
    %c0_78 = arith.constant 0 : index
    %c0_79 = arith.constant 0 : index
    %113 = vector.load %arg12[%c0_77, %c0_78, %c0_79] : memref<1x576x128xf32, #tpu.memory_space<vmem>>, vector<1x576x128xf32>
    %114 = vector.shape_cast %113 : vector<1x576x128xf32> to vector<576x128xf32>
    %115 = vector.shape_cast %112 : vector<576x128xf32> to vector<1x576x128xf32>
    tpu.vector_store %arg12[%c0_77, %c0_78, %c0_79], %115 {strides = array<i32>} : memref<1x576x128xf32, #tpu.memory_space<vmem>>, vector<1x576x128xf32>,
    return
  }
  func.func @transform_0(%arg0: i32) -> (i32, i32, i32) {
    %c0_i32 = arith.constant 0 : i32
    %c0_i32_0 = arith.constant 0 : i32
    %c0_i32_1 = arith.constant 0 : i32
    return %arg0, %c0_i32, %c0_i32_0 : i32, i32, i32
  }
  func.func @transform_1(%arg0: i32) -> (i32, i32, i32) {
    %c0_i32 = arith.constant 0 : i32
    %c0_i32_0 = arith.constant 0 : i32
    %c0_i32_1 = arith.constant 0 : i32
    return %arg0, %c0_i32, %c0_i32_0 : i32, i32, i32
  }
  func.func @transform_2(%arg0: i32) -> (i32, i32, i32) {
    %c0_i32 = arith.constant 0 : i32
    %c0_i32_0 = arith.constant 0 : i32
    %c0_i32_1 = arith.constant 0 : i32
    return %arg0, %c0_i32, %c0_i32_0 : i32, i32, i32
  }
  func.func @transform_3(%arg0: i32) -> (i32, i32, i32) {
    %c0_i32 = arith.constant 0 : i32
    %c0_i32_0 = arith.constant 0 : i32
    %c0_i32_1 = arith.constant 0 : i32
    return %arg0, %c0_i32, %c0_i32_0 : i32, i32, i32
  }
  func.func @transform_4(%arg0: i32) -> (i32, i32) {
    %c0_i32 = arith.constant 0 : i32
    %c0_i32_0 = arith.constant 0 : i32
    %c0_i32_1 = arith.constant 0 : i32
    return %c0_i32, %c0_i32_0 : i32, i32
  }
  func.func @transform_5(%arg0: i32) -> (i32, i32, i32) {
    %c0_i32 = arith.constant 0 : i32
    %c0_i32_0 = arith.constant 0 : i32
    %c0_i32_1 = arith.constant 0 : i32
    %c0_i32_2 = arith.constant 0 : i32
    return %c0_i32, %c0_i32_0, %c0_i32_1 : i32, i32, i32
  }
  func.func @transform_6(%arg0: i32) -> (i32, i32) {
    %c0_i32 = arith.constant 0 : i32
    %c0_i32_0 = arith.constant 0 : i32
    %c0_i32_1 = arith.constant 0 : i32
    return %c0_i32, %c0_i32_0 : i32, i32
  }
  func.func @transform_7(%arg0: i32) -> (i32, i32, i32) {
    %c0_i32 = arith.constant 0 : i32
    %c0_i32_0 = arith.constant 0 : i32
    %c0_i32_1 = arith.constant 0 : i32
    %c0_i32_2 = arith.constant 0 : i32
    return %c0_i32, %c0_i32_0, %c0_i32_1 : i32, i32, i32
  }
  func.func @transform_8(%arg0: i32) -> (i32, i32, i32) {
    %c0_i32 = arith.constant 0 : i32
    %c0_i32_0 = arith.constant 0 : i32
    %c0_i32_1 = arith.constant 0 : i32
    %c0_i32_2 = arith.constant 0 : i32
    return %c0_i32, %c0_i32_0, %c0_i32_1 : i32, i32, i32
  }
  func.func @transform_9(%arg0: i32) -> (i32, i32, i32) {
    %c0_i32 = arith.constant 0 : i32
    %c0_i32_0 = arith.constant 0 : i32
    %c0_i32_1 = arith.constant 0 : i32
    return %arg0, %c0_i32, %c0_i32_0 : i32, i32, i32
  }
  func.func @transform_10(%arg0: i32) -> (i32, i32, i32) {
    %c0_i32 = arith.constant 0 : i32
    %c0_i32_0 = arith.constant 0 : i32
    %c0_i32_1 = arith.constant 0 : i32
    return %arg0, %c0_i32, %c0_i32_0 : i32, i32, i32
  }
  func.func @transform_11(%arg0: i32) -> (i32, i32, i32) {
    %c0_i32 = arith.constant 0 : i32
    %c0_i32_0 = arith.constant 0 : i32
    %c0_i32_1 = arith.constant 0 : i32
    return %arg0, %c0_i32, %c0_i32_0 : i32, i32, i32
  }
}

</mosaic_0001>

<llo_original>
// kernel: ffm_forward.1
$region0: #{ffm_forward.1}
  #allocation0 [shape = 'u32[]', space=smem, size = 0x4, offset = 0x4, fixed_abs, tag = 'smem constant byte address 0x4 - core index']
  #allocation1 [shape = 'u32[144,128]{1,0:T(1,128)}', space=vmem, size = 0x12000, scoped, tag = 'internal scratch']
  %s0 = inlined_call_operand.vmem [shape: f32[2,576,128], index: 0, kind: input, shape index: {}]
  %s1 = inlined_call_operand.vmem [shape: f32[2,576,128], index: 1, kind: input, shape index: {}]
  %s2 = inlined_call_operand.hbm [shape: f32[2,576,128], index: 2, kind: input, shape index: {}]
  %s3 = inlined_call_operand.hbm [shape: f32[2,576,128], index: 3, kind: input, shape index: {}]
  %s4 = inlined_call_operand.vmem [shape: bf16[128,384], index: 4, kind: input, shape index: {}]
  %s5 = inlined_call_operand.vmem [shape: bf16[3,128,128], index: 5, kind: input, shape index: {}]
  %s6 = inlined_call_operand.vmem [shape: f32[3,128], index: 6, kind: input, shape index: {}]
  %s7 = inlined_call_operand.vmem [shape: f32[3,128,32], index: 7, kind: input, shape index: {}]
  %s8 = inlined_call_operand.vmem [shape: f32[3,32,128], index: 8, kind: input, shape index: {}]
  %s9 = inlined_call_operand.hbm [shape: f32[2,576,128], index: 9, kind: output, shape index: {0}]
  %s10 = inlined_call_operand.hbm [shape: f32[2,576,128], index: 10, kind: output, shape index: {1}]
  %s11 = inlined_call_operand.hbm [shape: f32[2,576,128], index: 11, kind: output, shape index: {2}]
  %12 = xla_tuple %s9, %s10, %s11
  %s13 = sld [smem:[#allocation0]]
  $region93: #{ffm_forward.1} parent=0
    _
  %s15 = ssub.s32 1, %s13
  %s16 = scalar_select 0, %s15, %s13
  $region1: #{ffm_forward.1} parent=0
    #allocation2 [shape = 'u8[589824]{0}', space=vmem, size = 0x90000, scoped, tag = 'input window, operand 2']
    #allocation3 [shape = 's32[2]{0}', space=sflag, size = 0x8, scoped, tag = 'scoped memory for ffm_forward.1']
    #allocation4 [shape = 's32[2]{0}', space=sflag, size = 0x8, scoped, tag = 'scoped memory for ffm_forward.1']
    #allocation5 [shape = 'u8[589824]{0}', space=vmem, size = 0x90000, scoped, tag = 'input window, operand 3']
    #allocation6 [shape = 's32[2]{0}', space=sflag, size = 0x8, scoped, tag = 'scoped memory for ffm_forward.1']
    #allocation7 [shape = 'u8[589824]{0}', space=vmem, size = 0x90000, scoped, tag = 'output window, operand 0']
    #allocation8 [shape = 'u8[589824]{0}', space=vmem, size = 0x90000, scoped, tag = 'output window, operand 1']
    #allocation9 [shape = 's32[2]{0}', space=sflag, size = 0x8, scoped, tag = 'scoped memory for ffm_forward.1']
    #allocation10 [shape = 'u8[589824]{0}', space=vmem, size = 0x90000, scoped, tag = 'output window, operand 2']
    %17 = vsyncpa [#allocation3], 0
    %s18 = scalar_lea.sflag [#allocation3], 1
    %19 = vsyncpa %s18, 0
    %20 = vsyncpa [#allocation6], 0
    %s21 = scalar_lea.sflag [#allocation6], 1
    %22 = vsyncpa %s21, 0
    %23 = vsyncpa [#allocation4], 0
    %s24 = scalar_lea.sflag [#allocation4], 1
    %25 = vsyncpa %s24, 0
    %26 = vsyncpa [#allocation9], 0
    %s27 = scalar_lea.sflag [#allocation9], 1
    %28 = vsyncpa %s27, 0
    loop: start=0, step=1, limit=4
    $region2: #{ffm_forward.1} parent=1 // loop_pre_header
      _
    $region3: #{ffm_forward.1} parent=1 // loop_header
      %s30 = sphi 0, %s34
      %p31 = scmp.ge.s32.totalorder %s30, 4
      %s40 = sphi 0, %s42
      %s43 = sphi 0, %s40
      %s44 = sphi 0, %s43
      %s60 = sphi 0, %s44
      %s66 = sphi 0, %s68
      %s69 = sphi 0, %s66
      %s70 = sphi 0, %s69
      %s86 = sphi 0, %s70
      %s92 = sphi 0, %s94
      %s95 = sphi 0, %s92
      %s96 = sphi 0, %s95
      %s112 = sphi 0, %s96
      %s118 = sphi 0, %s120
      %s121 = sphi 0, %s118
      %s122 = sphi 0, %s121
      %s138 = sphi 0, %s122
      %s142 = sphi 0, %s142
      %s144 = sphi 0, %s142
      %s145 = sphi 0, %s144
      %s159 = sphi 0, %s145
      %s163 = sphi 0, %s163
      %s165 = sphi 0, %s163
      %s166 = sphi 0, %s165
      %s180 = sphi 0, %s166
      %s184 = sphi 0, %s184
      %s186 = sphi 0, %s184
      %s187 = sphi 0, %s186
      %s201 = sphi 0, %s187
      %s205 = sphi 0, %s205
      %s207 = sphi 0, %s205
      %s208 = sphi 0, %s207
      %s222 = sphi 0, %s208
      %s226 = sphi 0, %s226
      %s228 = sphi 0, %s226
      %s229 = sphi 0, %s228
      %s243 = sphi 0, %s229
      %s249 = sphi 0, %s251
      %s252 = sphi 0, %s249
      %s253 = sphi 0, %s252
      %s269 = sphi 0, %s253
      %s275 = sphi 0, %s277
      %s278 = sphi 0, %s275
      %s279 = sphi 0, %s278
      %s295 = sphi 0, %s279
      %s301 = sphi 0, %s303
      %s304 = sphi 0, %s301
      %s305 = sphi 0, %s304
      %s321 = sphi 0, %s305
    $region4: #{ffm_forward.1} parent=1 // loop_header_branch
      %33 = sbr.rel (%p31) target = $region8
    $region5: #{ffm_forward.1} parent=1 // loop_body
      %s35 = ssub.s32 %s30, 1
      %s36 = ssub.s32 %s30, 2
      %s37 = sadd.s32 %s30, 1
      %s38 = ssub.s32 %s30, %s37
      %p39 = scmp.eq.s32.totalorder %s38, 0
      %s41 = sadd.s32 %s40, 1
      %s42 = scalar_select %p39, %s40, %s41
      %p45 = pneg %p39
      %p46 = scmp.eq.s32.totalorder %s30, 1
      %p47 = por %p45, %p46
      %p48 = scmp.ne.s32.totalorder %s40, %s43
      %p49 = scmp.eq.s32.totalorder %s30, 0
      %p50 = por %p48, %p49
      %p51 = scmp.ne.s32.totalorder %s40, %s43
      %p52 = scmp.eq.s32.totalorder %s35, 1
      %p53 = por %p51, %p52
      %p54 = scmp.ne.s32.totalorder %s43, %s44
      %p55 = scmp.eq.s32.totalorder %s35, 0
      %p56 = por %p54, %p55
      %p57 = scmp.ne.s32.totalorder %s43, %s44
      %p58 = scmp.eq.s32.totalorder %s36, 1
      %p59 = por %p57, %p58
      %p61 = scmp.ne.s32.totalorder %s44, %s60
      %p62 = scmp.eq.s32.totalorder %s36, 0
      %p63 = por %p61, %p62
      %s64 = ssub.s32 %s30, %s37
      %p65 = scmp.eq.s32.totalorder %s64, 0
      %s67 = sadd.s32 %s66, 1
      %s68 = scalar_select %p65, %s66, %s67
      %p71 = pneg %p65
      %p72 = scmp.eq.s32.totalorder %s30, 1
      %p73 = por %p71, %p72
      %p74 = scmp.ne.s32.totalorder %s66, %s69
      %p75 = scmp.eq.s32.totalorder %s30, 0
      %p76 = por %p74, %p75
      %p77 = scmp.ne.s32.totalorder %s66, %s69
      %p78 = scmp.eq.s32.totalorder %s35, 1
      %p79 = por %p77, %p78
      %p80 = scmp.ne.s32.totalorder %s69, %s70
      %p81 = scmp.eq.s32.totalorder %s35, 0
      %p82 = por %p80, %p81
      %p83 = scmp.ne.s32.totalorder %s69, %s70
      %p84 = scmp.eq.s32.totalorder %s36, 1
      %p85 = por %p83, %p84
      %p87 = scmp.ne.s32.totalorder %s70, %s86
      %p88 = scmp.eq.s32.totalorder %s36, 0
      %p89 = por %p87, %p88
      %s90 = ssub.s32 %s30, %s37
      %p91 = scmp.eq.s32.totalorder %s90, 0
      %s93 = sadd.s32 %s92, 1
      %s94 = scalar_select %p91, %s92, %s93
      %p97 = pneg %p91
      %p98 = scmp.eq.s32.totalorder %s30, 1
      %p99 = por %p97, %p98
      %p100 = scmp.ne.s32.totalorder %s92, %s95
      %p101 = scmp.eq.s32.totalorder %s30, 0
      %p102 = por %p100, %p101
      %p103 = scmp.ne.s32.totalorder %s92, %s95
      %p104 = scmp.eq.s32.totalorder %s35, 1
      %p105 = por %p103, %p104
      %p106 = scmp.ne.s32.totalorder %s95, %s96
      %p107 = scmp.eq.s32.totalorder %s35, 0
      %p108 = por %p106, %p107
      %p109 = scmp.ne.s32.totalorder %s95, %s96
      %p110 = scmp.eq.s32.totalorder %s36, 1
      %p111 = por %p109, %p110
      %p113 = scmp.ne.s32.totalorder %s96, %s112
      %p114 = scmp.eq.s32.totalorder %s36, 0
      %p115 = por %p113, %p114
      %s116 = ssub.s32 %s30, %s37
      %p117 = scmp.eq.s32.totalorder %s116, 0
      %s119 = sadd.s32 %s118, 1
      %s120 = scalar_select %p117, %s118, %s119
      %p123 = pneg %p117
      %p124 = scmp.eq.s32.totalorder %s30, 1
      %p125 = por %p123, %p124
      %p126 = scmp.ne.s32.totalorder %s118, %s121
      %p127 = scmp.eq.s32.totalorder %s30, 0
      %p128 = por %p126, %p127
      %p129 = scmp.ne.s32.totalorder %s118, %s121
      %p130 = scmp.eq.s32.totalorder %s35, 1
      %p131 = por %p129, %p130
      %p132 = scmp.ne.s32.totalorder %s121, %s122
      %p133 = scmp.eq.s32.totalorder %s35, 0
      %p134 = por %p132, %p133
      %p135 = scmp.ne.s32.totalorder %s121, %s122
      %p136 = scmp.eq.s32.totalorder %s36, 1
      %p137 = por %p135, %p136
      %p139 = scmp.ne.s32.totalorder %s122, %s138
      %p140 = scmp.eq.s32.totalorder %s36, 0
      %p141 = por %p139, %p140
      %s143 = sadd.s32 %s142, 1
      %p146 = scmp.eq.s32.totalorder %s30, 1
      %p147 = scmp.ne.s32.totalorder %s142, %s144
      %p148 = scmp.eq.s32.totalorder %s30, 0
      %p149 = por %p147, %p148
      %p150 = scmp.ne.s32.totalorder %s142, %s144
      %p151 = scmp.eq.s32.totalorder %s35, 1
      %p152 = por %p150, %p151
      %p153 = scmp.ne.s32.totalorder %s144, %s145
      %p154 = scmp.eq.s32.totalorder %s35, 0
      %p155 = por %p153, %p154
      %p156 = scmp.ne.s32.totalorder %s144, %s145
      %p157 = scmp.eq.s32.totalorder %s36, 1
      %p158 = por %p156, %p157
      %p160 = scmp.ne.s32.totalorder %s145, %s159
      %p161 = scmp.eq.s32.totalorder %s36, 0
      %p162 = por %p160, %p161
      %s164 = sadd.s32 %s163, 1
      %p167 = scmp.eq.s32.totalorder %s30, 1
      %p168 = scmp.ne.s32.totalorder %s163, %s165
      %p169 = scmp.eq.s32.totalorder %s30, 0
      %p170 = por %p168, %p169
      %p171 = scmp.ne.s32.totalorder %s163, %s165
      %p172 = scmp.eq.s32.totalorder %s35, 1
      %p173 = por %p171, %p172
      %p174 = scmp.ne.s32.totalorder %s165, %s166
      %p175 = scmp.eq.s32.totalorder %s35, 0
      %p176 = por %p174, %p175
      %p177 = scmp.ne.s32.totalorder %s165, %s166
      %p178 = scmp.eq.s32.totalorder %s36, 1
      %p179 = por %p177, %p178
      %p181 = scmp.ne.s32.totalorder %s166, %s180
      %p182 = scmp.eq.s32.totalorder %s36, 0
      %p183 = por %p181, %p182
      %s185 = sadd.s32 %s184, 1
      %p188 = scmp.eq.s32.totalorder %s30, 1
      %p189 = scmp.ne.s32.totalorder %s184, %s186
      %p190 = scmp.eq.s32.totalorder %s30, 0
      %p191 = por %p189, %p190
      %p192 = scmp.ne.s32.totalorder %s184, %s186
      %p193 = scmp.eq.s32.totalorder %s35, 1
      %p194 = por %p192, %p193
      %p195 = scmp.ne.s32.totalorder %s186, %s187
      %p196 = scmp.eq.s32.totalorder %s35, 0
      %p197 = por %p195, %p196
      %p198 = scmp.ne.s32.totalorder %s186, %s187
      %p199 = scmp.eq.s32.totalorder %s36, 1
      %p200 = por %p198, %p199
      %p202 = scmp.ne.s32.totalorder %s187, %s201
      %p203 = scmp.eq.s32.totalorder %s36, 0
      %p204 = por %p202, %p203
      %s206 = sadd.s32 %s205, 1
      %p209 = scmp.eq.s32.totalorder %s30, 1
      %p210 = scmp.ne.s32.totalorder %s205, %s207
      %p211 = scmp.eq.s32.totalorder %s30, 0
      %p212 = por %p210, %p211
      %p213 = scmp.ne.s32.totalorder %s205, %s207
      %p214 = scmp.eq.s32.totalorder %s35, 1
      %p215 = por %p213, %p214
      %p216 = scmp.ne.s32.totalorder %s207, %s208
      %p217 = scmp.eq.s32.totalorder %s35, 0
      %p218 = por %p216, %p217
      %p219 = scmp.ne.s32.totalorder %s207, %s208
      %p220 = scmp.eq.s32.totalorder %s36, 1
      %p221 = por %p219, %p220
      %p223 = scmp.ne.s32.totalorder %s208, %s222
      %p224 = scmp.eq.s32.totalorder %s36, 0
      %p225 = por %p223, %p224
      %s227 = sadd.s32 %s226, 1
      %p230 = scmp.eq.s32.totalorder %s30, 1
      %p231 = scmp.ne.s32.totalorder %s226, %s228
      %p232 = scmp.eq.s32.totalorder %s30, 0
      %p233 = por %p231, %p232
      %p234 = scmp.ne.s32.totalorder %s226, %s228
      %p235 = scmp.eq.s32.totalorder %s35, 1
      %p236 = por %p234, %p235
      %p237 = scmp.ne.s32.totalorder %s228, %s229
      %p238 = scmp.eq.s32.totalorder %s35, 0
      %p239 = por %p237, %p238
      %p240 = scmp.ne.s32.totalorder %s228, %s229
      %p241 = scmp.eq.s32.totalorder %s36, 1
      %p242 = por %p240, %p241
      %p244 = scmp.ne.s32.totalorder %s229, %s243
      %p245 = scmp.eq.s32.totalorder %s36, 0
      %p246 = por %p244, %p245
      %s247 = ssub.s32 %s30, %s37
      %p248 = scmp.eq.s32.totalorder %s247, 0
      %s250 = sadd.s32 %s249, 1
      %s251 = scalar_select %p248, %s249, %s250
      %p254 = pneg %p248
      %p255 = scmp.eq.s32.totalorder %s30, 1
      %p256 = por %p254, %p255
      %p257 = scmp.ne.s32.totalorder %s249, %s252
      %p258 = scmp.eq.s32.totalorder %s30, 0
      %p259 = por %p257, %p258
      %p260 = scmp.ne.s32.totalorder %s249, %s252
      %p261 = scmp.eq.s32.totalorder %s35, 1
      %p262 = por %p260, %p261
      %p263 = scmp.ne.s32.totalorder %s252, %s253
      %p264 = scmp.eq.s32.totalorder %s35, 0
      %p265 = por %p263, %p264
      %p266 = scmp.ne.s32.totalorder %s252, %s253
      %p267 = scmp.eq.s32.totalorder %s36, 1
      %p268 = por %p266, %p267
      %p270 = scmp.ne.s32.totalorder %s253, %s269
      %p271 = scmp.eq.s32.totalorder %s36, 0
      %p272 = por %p270, %p271
      %s273 = ssub.s32 %s30, %s37
      %p274 = scmp.eq.s32.totalorder %s273, 0
      %s276 = sadd.s32 %s275, 1
      %s277 = scalar_select %p274, %s275, %s276
      %p280 = pneg %p274
      %p281 = scmp.eq.s32.totalorder %s30, 1
      %p282 = por %p280, %p281
      %p283 = scmp.ne.s32.totalorder %s275, %s278
      %p284 = scmp.eq.s32.totalorder %s30, 0
      %p285 = por %p283, %p284
      %p286 = scmp.ne.s32.totalorder %s275, %s278
      %p287 = scmp.eq.s32.totalorder %s35, 1
      %p288 = por %p286, %p287
      %p289 = scmp.ne.s32.totalorder %s278, %s279
      %p290 = scmp.eq.s32.totalorder %s35, 0
      %p291 = por %p289, %p290
      %p292 = scmp.ne.s32.totalorder %s278, %s279
      %p293 = scmp.eq.s32.totalorder %s36, 1
      %p294 = por %p292, %p293
      %p296 = scmp.ne.s32.totalorder %s279, %s295
      %p297 = scmp.eq.s32.totalorder %s36, 0
      %p298 = por %p296, %p297
      %s299 = ssub.s32 %s30, %s37
      %p300 = scmp.eq.s32.totalorder %s299, 0
      %s302 = sadd.s32 %s301, 1
      %s303 = scalar_select %p300, %s301, %s302
      %p306 = pneg %p300
      %p307 = scmp.eq.s32.totalorder %s30, 1
      %p308 = por %p306, %p307
      %p309 = scmp.ne.s32.totalorder %s301, %s304
      %p310 = scmp.eq.s32.totalorder %s30, 0
      %p311 = por %p309, %p310
      %p312 = scmp.ne.s32.totalorder %s301, %s304
      %p313 = scmp.eq.s32.totalorder %s35, 1
      %p314 = por %p312, %p313
      %p315 = scmp.ne.s32.totalorder %s304, %s305
      %p316 = scmp.eq.s32.totalorder %s35, 0
      %p317 = por %p315, %p316
      %p318 = scmp.ne.s32.totalorder %s304, %s305
      %p319 = scmp.eq.s32.totalorder %s36, 1
      %p320 = por %p318, %p319
      %p322 = scmp.ne.s32.totalorder %s305, %s321
      %p323 = scmp.eq.s32.totalorder %s36, 0
      %p324 = por %p322, %p323
      %p325 = scmp.le.s32.totalorder 1, %s30
      %p326 = scmp.lt.s32.totalorder %s30, 3
      %p327 = pnand %p325, %p326
      %p328 = pneg %p327
      // Predicated region
      $region9: #{ffm_forward.1} parent=5 // pred_check
        _
      $region10: #{ffm_forward.1} parent=5 // pred_check_branch
        %330 = sbr.rel (%p327) target = $region12
      $region11: #{ffm_forward.1} parent=5 // pred_region
        %s331 = ssub.s32 %s30, 1
        // Predicated region
        $region13: #{ffm_forward.1} parent=11 // pred_check
          %p332 = pneg %p155
        $region14: #{ffm_forward.1} parent=11 // pred_check_branch
          %334 = sbr.rel (%p332) target = $region16
        $region15: #{ffm_forward.1} parent=11 // pred_region
          _
        $region16: #{ffm_forward.1} parent=11 // pred_fallthru
          _
        // Predicated region
        $region17: #{ffm_forward.1} parent=11 // pred_check
          %p335 = pneg %p176
        $region18: #{ffm_forward.1} parent=11 // pred_check_branch
          %337 = sbr.rel (%p335) target = $region20
        $region19: #{ffm_forward.1} parent=11 // pred_region
          _
        $region20: #{ffm_forward.1} parent=11 // pred_fallthru
          _
        // Predicated region
        $region21: #{ffm_forward.1} parent=11 // pred_check
          %p338 = pneg %p197
        $region22: #{ffm_forward.1} parent=11 // pred_check_branch
          %340 = sbr.rel (%p338) target = $region24
        $region23: #{ffm_forward.1} parent=11 // pred_region
          _
        $region24: #{ffm_forward.1} parent=11 // pred_fallthru
          _
        // Predicated region
        $region25: #{ffm_forward.1} parent=11 // pred_check
          %p341 = pneg %p218
        $region26: #{ffm_forward.1} parent=11 // pred_check_branch
          %343 = sbr.rel (%p341) target = $region28
        $region27: #{ffm_forward.1} parent=11 // pred_region
          _
        $region28: #{ffm_forward.1} parent=11 // pred_fallthru
          _
        // Predicated region
        $region29: #{ffm_forward.1} parent=11 // pred_check
          %p344 = pneg %p239
        $region30: #{ffm_forward.1} parent=11 // pred_check_branch
          %346 = sbr.rel (%p344) target = $region32
        $region31: #{ffm_forward.1} parent=11 // pred_region
          _
        $region32: #{ffm_forward.1} parent=11 // pred_fallthru
          _
      $region12: #{ffm_forward.1} parent=5 // pred_fallthru
        _
      %p347 = scmp.lt.s32.totalorder %s30, 2
      // Predicated region
      $region33: #{ffm_forward.1} parent=5 // pred_check
        %p348 = pneg %p347
      $region34: #{ffm_forward.1} parent=5 // pred_check_branch
        %350 = sbr.rel (%p348) target = $region36
      $region35: #{ffm_forward.1} parent=5 // pred_region
        // Predicated region
        $region37: #{ffm_forward.1} parent=35 // pred_check
          %p351 = pneg %p50
        $region38: #{ffm_forward.1} parent=35 // pred_check_branch
          %353 = sbr.rel (%p351) target = $region40
        $region39: #{ffm_forward.1} parent=35 // pred_region
          %p354 = scmp.lt.s32.totalorder %s30, 1
          %s355 = scalar_select %p354, %s30, 1
          %s356 = smul.addr %s355, 72
          %s357 = smul.addr %s356, 8
          %s358 = scalar_lea.vmem %s0, %s357
        $region40: #{ffm_forward.1} parent=35 // pred_fallthru
          _
        // Predicated region
        $region41: #{ffm_forward.1} parent=35 // pred_check
          %p359 = pneg %p76
        $region42: #{ffm_forward.1} parent=35 // pred_check_branch
          %361 = sbr.rel (%p359) target = $region44
        $region43: #{ffm_forward.1} parent=35 // pred_region
          %p362 = scmp.lt.s32.totalorder %s30, 1
          %s363 = scalar_select %p362, %s30, 1
          %s364 = smul.addr %s363, 72
          %s365 = smul.addr %s364, 8
          %s366 = scalar_lea.vmem %s1, %s365
        $region44: #{ffm_forward.1} parent=35 // pred_fallthru
          _
        // Predicated region
        $region45: #{ffm_forward.1} parent=35 // pred_check
          %p367 = pneg %p102
        $region46: #{ffm_forward.1} parent=35 // pred_check_branch
          %369 = sbr.rel (%p367) target = $region48
        $region47: #{ffm_forward.1} parent=35 // pred_region
          %s370 = sand.u32 %s92, 1
          %s371 = scalar_lea.sflag [#allocation3], %s370
          %s372 = sand.u32 %s92, 1
          %s373 = smul.addr %s372, 576
          %s374 = scalar_lea.vmem [#allocation2], %s373
          %s376 = ssub.s32 9216, 9216
          %377 = vsyncadd %s371, %s376
          %s378 = smul.addr %s30, 72
          %s379 = smul.addr %s378, 128
          %s380 = scalar_lea.hbm %s2, %s379
          %s381 = sshll.u32 %s374, 4
          %s382 = int_to_ptr.vmem [resolvable:$true] %s381
          %387 = dma.hbm_to_vmem [thread:$0]  %s380, 9216, %s382, %s371, 128, 128, 8
        $region48: #{ffm_forward.1} parent=35 // pred_fallthru
          _
        // Predicated region
        $region49: #{ffm_forward.1} parent=35 // pred_check
          %p388 = pneg %p128
        $region50: #{ffm_forward.1} parent=35 // pred_check_branch
          %390 = sbr.rel (%p388) target = $region52
        $region51: #{ffm_forward.1} parent=35 // pred_region
          %s391 = sand.u32 %s118, 1
          %s392 = scalar_lea.sflag [#allocation6], %s391
          %s393 = sand.u32 %s118, 1
          %s394 = smul.addr %s393, 576
          %s395 = scalar_lea.vmem [#allocation5], %s394
          %s397 = ssub.s32 9216, 9216
          %398 = vsyncadd %s392, %s397
          %s399 = smul.addr %s30, 72
          %s400 = smul.addr %s399, 128
          %s401 = scalar_lea.hbm %s3, %s400
          %s402 = sshll.u32 %s395, 4
          %s403 = int_to_ptr.vmem [resolvable:$true] %s402
          %408 = dma.hbm_to_vmem [thread:$0]  %s401, 9216, %s403, %s392, 128, 128, 8
        $region52: #{ffm_forward.1} parent=35 // pred_fallthru
          _
      $region36: #{ffm_forward.1} parent=5 // pred_fallthru
        _
      %p409 = scmp.le.s32.totalorder 1, %s30
      %p410 = scmp.lt.s32.totalorder %s30, 3
      %p411 = pnand %p409, %p410
      %p412 = pneg %p411
      // Predicated region
      $region53: #{ffm_forward.1} parent=5 // pred_check
        _
      $region54: #{ffm_forward.1} parent=5 // pred_check_branch
        %414 = sbr.rel (%p411) target = $region56
      $region55: #{ffm_forward.1} parent=5 // pred_region
        %s415 = ssub.s32 %s30, 1
        %s416 = sand.u32 %s95, 1
        %s417 = scalar_lea.sflag [#allocation3], %s416
        %s418 = sand.u32 %s95, 1
        %s419 = smul.addr %s418, 576
        %s420 = scalar_lea.vmem [#allocation2], %s419
        // Predicated region
        $region57: #{ffm_forward.1} parent=55 // pred_check
          %p421 = pneg %p108
        $region58: #{ffm_forward.1} parent=55 // pred_check_branch
          %423 = sbr.rel (%p421) target = $region60
        $region59: #{ffm_forward.1} parent=55 // pred_region
          %424 = dma.done %s417, 9216
        $region60: #{ffm_forward.1} parent=55 // pred_fallthru
          _
        %s425 = sand.u32 %s121, 1
        %s426 = scalar_lea.sflag [#allocation6], %s425
        %s427 = sand.u32 %s121, 1
        %s428 = smul.addr %s427, 576
        %s429 = scalar_lea.vmem [#allocation5], %s428
        // Predicated region
        $region61: #{ffm_forward.1} parent=55 // pred_check
          %p430 = pneg %p134
        $region62: #{ffm_forward.1} parent=55 // pred_check_branch
          %432 = sbr.rel (%p430) target = $region64
        $region63: #{ffm_forward.1} parent=55 // pred_region
          %433 = dma.done %s426, 9216
        $region64: #{ffm_forward.1} parent=55 // pred_fallthru
          _
        %p434 = scmp.lt.s32.totalorder %s35, 1
        %s435 = scalar_select %p434, %s35, 1
        %s436 = smul.addr %s435, 72
        %s437 = smul.addr %s436, 8
        %s438 = scalar_lea.vmem %s0, %s437
        %p439 = pneg %p56
        %p440 = pneg %p53
        %p441 = scmp.lt.s32.totalorder %s35, 1
        %s442 = scalar_select %p441, %s35, 1
        %s443 = smul.addr %s442, 72
        %s444 = smul.addr %s443, 8
        %s445 = scalar_lea.vmem %s1, %s444
        %p446 = pneg %p82
        %p447 = pneg %p79
        %s448 = sand.u32 %s95, 1
        %s449 = scalar_lea.sflag [#allocation3], %s448
        %s450 = sand.u32 %s95, 1
        %s451 = smul.addr %s450, 576
        %s452 = scalar_lea.vmem [#allocation2], %s451
        %p453 = pneg %p108
        %p454 = pneg %p105
        %s455 = sand.u32 %s121, 1
        %s456 = scalar_lea.sflag [#allocation6], %s455
        %s457 = sand.u32 %s121, 1
        %s458 = smul.addr %s457, 576
        %s459 = scalar_lea.vmem [#allocation5], %s458
        %p460 = pneg %p134
        %p461 = pneg %p131
        %p462 = pneg %p155
        %p463 = pneg %p152
        %p464 = pneg %p176
        %p465 = pneg %p173
        %p466 = pneg %p197
        %p467 = pneg %p194
        %p468 = pneg %p218
        %p469 = pneg %p215
        %p470 = pneg %p239
        %p471 = pneg %p236
        %p472 = pneg %p265
        %p473 = pneg %p262
        %s474 = sand.u32 %s252, 1
        %s475 = scalar_lea.sflag [#allocation4], %s474
        %s476 = sand.u32 %s252, 1
        %s477 = smul.addr %s476, 576
        %s478 = scalar_lea.vmem [#allocation7], %s477
        %p479 = pneg %p291
        %p480 = pneg %p288
        %s481 = sand.u32 %s35, 1
        %s482 = scalar_lea.sflag [#allocation9], %s481
        %s483 = sand.u32 %s278, 1
        %s484 = smul.addr %s483, 576
        %s485 = scalar_lea.vmem [#allocation8], %s484
        %p486 = pneg %p317
        %p487 = pneg %p314
        %s488 = sand.u32 %s35, 1
        %s489 = scalar_lea.sflag [#allocation9], %s488
        %s490 = sand.u32 %s304, 1
        %s491 = smul.addr %s490, 576
        %s492 = scalar_lea.vmem [#allocation10], %s491
        %p493 = scmp.lt.s32.totalorder %s35, 1
        %s494 = scalar_select %p493, %s35, 1
        %s495 = smul.addr %s494, 72
        %s496 = smul.addr %s495, 8
        %s497 = scalar_lea.vmem %s0, %s496
        %p498 = scmp.lt.s32.totalorder %s35, 1
        %s499 = scalar_select %p498, %s35, 1
        %s500 = smul.addr %s499, 72
        %s501 = smul.addr %s500, 8
        %s502 = scalar_lea.vmem %s1, %s501
        %v504 = vld [vmem:[%s497] sm:$0xff]
        %v505 = vld [vmem:[%s497 + $0x8] sm:$0xff]
        %v506 = vld [vmem:[%s497 + $0x10] sm:$0xff]
        %v507 = vld [vmem:[%s497 + $0x18] sm:$0xff]
        %v508 = vld [vmem:[%s497 + $0x20] sm:$0xff]
        %v509 = vld [vmem:[%s497 + $0x28] sm:$0xff]
        %v510 = vld [vmem:[%s497 + $0x30] sm:$0xff]
        %v511 = vld [vmem:[%s497 + $0x38] sm:$0xff]
        %v512 = vld [vmem:[%s497 + $0x40] sm:$0xff]
        %v513 = vld [vmem:[%s497 + $0x48] sm:$0xff]
        %v514 = vld [vmem:[%s497 + $0x50] sm:$0xff]
        %v515 = vld [vmem:[%s497 + $0x58] sm:$0xff]
        %v516 = vld [vmem:[%s497 + $0x60] sm:$0xff]
        %v517 = vld [vmem:[%s497 + $0x68] sm:$0xff]
        %v518 = vld [vmem:[%s497 + $0x70] sm:$0xff]
        %v519 = vld [vmem:[%s497 + $0x78] sm:$0xff]
        %v520 = vld [vmem:[%s497 + $0x80] sm:$0xff]
        %v521 = vld [vmem:[%s497 + $0x88] sm:$0xff]
        %v522 = vld [vmem:[%s497 + $0x90] sm:$0xff]
        %v523 = vld [vmem:[%s497 + $0x98] sm:$0xff]
        %v524 = vld [vmem:[%s497 + $0xa0] sm:$0xff]
        %v525 = vld [vmem:[%s497 + $0xa8] sm:$0xff]
        %v526 = vld [vmem:[%s497 + $0xb0] sm:$0xff]
        %v527 = vld [vmem:[%s497 + $0xb8] sm:$0xff]
        %v528 = vld [vmem:[%s497 + $0xc0] sm:$0xff]
        %v529 = vld [vmem:[%s497 + $0xc8] sm:$0xff]
        %v530 = vld [vmem:[%s497 + $0xd0] sm:$0xff]
        %v531 = vld [vmem:[%s497 + $0xd8] sm:$0xff]
        %v532 = vld [vmem:[%s497 + $0xe0] sm:$0xff]
        %v533 = vld [vmem:[%s497 + $0xe8] sm:$0xff]
        %v534 = vld [vmem:[%s497 + $0xf0] sm:$0xff]
        %v535 = vld [vmem:[%s497 + $0xf8] sm:$0xff]
        %v536 = vld [vmem:[%s497 + $0x100] sm:$0xff]
        %v537 = vld [vmem:[%s497 + $0x108] sm:$0xff]
        %v538 = vld [vmem:[%s497 + $0x110] sm:$0xff]
        %v539 = vld [vmem:[%s497 + $0x118] sm:$0xff]
        %v540 = vld [vmem:[%s497 + $0x120] sm:$0xff]
        %v541 = vld [vmem:[%s497 + $0x128] sm:$0xff]
        %v542 = vld [vmem:[%s497 + $0x130] sm:$0xff]
        %v543 = vld [vmem:[%s497 + $0x138] sm:$0xff]
        %v544 = vld [vmem:[%s497 + $0x140] sm:$0xff]
        %v545 = vld [vmem:[%s497 + $0x148] sm:$0xff]
        %v546 = vld [vmem:[%s497 + $0x150] sm:$0xff]
        %v547 = vld [vmem:[%s497 + $0x158] sm:$0xff]
        %v548 = vld [vmem:[%s497 + $0x160] sm:$0xff]
        %v549 = vld [vmem:[%s497 + $0x168] sm:$0xff]
        %v550 = vld [vmem:[%s497 + $0x170] sm:$0xff]
        %v551 = vld [vmem:[%s497 + $0x178] sm:$0xff]
        %v552 = vld [vmem:[%s497 + $0x180] sm:$0xff]
        %v553 = vld [vmem:[%s497 + $0x188] sm:$0xff]
        %v554 = vld [vmem:[%s497 + $0x190] sm:$0xff]
        %v555 = vld [vmem:[%s497 + $0x198] sm:$0xff]
        %v556 = vld [vmem:[%s497 + $0x1a0] sm:$0xff]
        %v557 = vld [vmem:[%s497 + $0x1a8] sm:$0xff]
        %v558 = vld [vmem:[%s497 + $0x1b0] sm:$0xff]
        %v559 = vld [vmem:[%s497 + $0x1b8] sm:$0xff]
        %v560 = vld [vmem:[%s497 + $0x1c0] sm:$0xff]
        %v561 = vld [vmem:[%s497 + $0x1c8] sm:$0xff]
        %v562 = vld [vmem:[%s497 + $0x1d0] sm:$0xff]
        %v563 = vld [vmem:[%s497 + $0x1d8] sm:$0xff]
        %v564 = vld [vmem:[%s497 + $0x1e0] sm:$0xff]
        %v565 = vld [vmem:[%s497 + $0x1e8] sm:$0xff]
        %v566 = vld [vmem:[%s497 + $0x1f0] sm:$0xff]
        %v567 = vld [vmem:[%s497 + $0x1f8] sm:$0xff]
        %v568 = vld [vmem:[%s497 + $0x200] sm:$0xff]
        %v569 = vld [vmem:[%s497 + $0x208] sm:$0xff]
        %v570 = vld [vmem:[%s497 + $0x210] sm:$0xff]
        %v571 = vld [vmem:[%s497 + $0x218] sm:$0xff]
        %v572 = vld [vmem:[%s497 + $0x220] sm:$0xff]
        %v573 = vld [vmem:[%s497 + $0x228] sm:$0xff]
        %v574 = vld [vmem:[%s497 + $0x230] sm:$0xff]
        %v575 = vld [vmem:[%s497 + $0x238] sm:$0xff]
        %v576 = vpack.c.bf16 %v505, %v504
        %v577 = vpack.c.bf16 %v507, %v506
        %v578 = vpack.c.bf16 %v509, %v508
        %v579 = vpack.c.bf16 %v511, %v510
        %v580 = vpack.c.bf16 %v513, %v512
        %v581 = vpack.c.bf16 %v515, %v514
        %v582 = vpack.c.bf16 %v517, %v516
        %v583 = vpack.c.bf16 %v519, %v518
        %v584 = vpack.c.bf16 %v521, %v520
        %v585 = vpack.c.bf16 %v523, %v522
        %v586 = vpack.c.bf16 %v525, %v524
        %v587 = vpack.c.bf16 %v527, %v526
        %v588 = vpack.c.bf16 %v529, %v528
        %v589 = vpack.c.bf16 %v531, %v530
        %v590 = vpack.c.bf16 %v533, %v532
        %v591 = vpack.c.bf16 %v535, %v534
        %v592 = vpack.c.bf16 %v537, %v536
        %v593 = vpack.c.bf16 %v539, %v538
        %v594 = vpack.c.bf16 %v541, %v540
        %v595 = vpack.c.bf16 %v543, %v542
        %v596 = vpack.c.bf16 %v545, %v544
        %v597 = vpack.c.bf16 %v547, %v546
        %v598 = vpack.c.bf16 %v549, %v548
        %v599 = vpack.c.bf16 %v551, %v550
        %v600 = vpack.c.bf16 %v553, %v552
        %v601 = vpack.c.bf16 %v555, %v554
        %v602 = vpack.c.bf16 %v557, %v556
        %v603 = vpack.c.bf16 %v559, %v558
        %v604 = vpack.c.bf16 %v561, %v560
        %v605 = vpack.c.bf16 %v563, %v562
        %v606 = vpack.c.bf16 %v565, %v564
        %v607 = vpack.c.bf16 %v567, %v566
        %v608 = vpack.c.bf16 %v569, %v568
        %v609 = vpack.c.bf16 %v571, %v570
        %v610 = vpack.c.bf16 %v573, %v572
        %v611 = vpack.c.bf16 %v575, %v574
        %v612 = vld [vmem:[%s4] sm:$0xff]
        %v613 = vld [vmem:[%s4 + $0x8] sm:$0xf]
        %v614 = vld [vmem:[%s4 + $0xc] sm:$0xff]
        %v615 = vld [vmem:[%s4 + $0x14] sm:$0xf]
        %v616 = vld [vmem:[%s4 + $0x18] sm:$0xff]
        %v617 = vld [vmem:[%s4 + $0x20] sm:$0xf]
        %v618 = vld [vmem:[%s4 + $0x24] sm:$0xff]
        %v619 = vld [vmem:[%s4 + $0x2c] sm:$0xf]
        %v620 = vld [vmem:[%s4 + $0x30] sm:$0xff]
        %v621 = vld [vmem:[%s4 + $0x38] sm:$0xf]
        %v622 = vld [vmem:[%s4 + $0x3c] sm:$0xff]
        %v623 = vld [vmem:[%s4 + $0x44] sm:$0xf]
        %v624 = vld [vmem:[%s4 + $0x48] sm:$0xff]
        %v625 = vld [vmem:[%s4 + $0x50] sm:$0xf]
        %v626 = vld [vmem:[%s4 + $0x54] sm:$0xff]
        %v627 = vld [vmem:[%s4 + $0x5c] sm:$0xf]
        %v628 = vld [vmem:[%s4 + $0x60] sm:$0xff]
        %v629 = vld [vmem:[%s4 + $0x68] sm:$0xf]
        %v630 = vld [vmem:[%s4 + $0x6c] sm:$0xff]
        %v631 = vld [vmem:[%s4 + $0x74] sm:$0xf]
        %v632 = vld [vmem:[%s4 + $0x78] sm:$0xff]
        %v633 = vld [vmem:[%s4 + $0x80] sm:$0xf]
        %v634 = vld [vmem:[%s4 + $0x84] sm:$0xff]
        %v635 = vld [vmem:[%s4 + $0x8c] sm:$0xf]
        %v636 = vld [vmem:[%s4 + $0x90] sm:$0xff]
        %v637 = vld [vmem:[%s4 + $0x98] sm:$0xf]
        %v638 = vld [vmem:[%s4 + $0x9c] sm:$0xff]
        %v639 = vld [vmem:[%s4 + $0xa4] sm:$0xf]
        %v640 = vld [vmem:[%s4 + $0xa8] sm:$0xff]
        %v641 = vld [vmem:[%s4 + $0xb0] sm:$0xf]
        %v642 = vld [vmem:[%s4 + $0xb4] sm:$0xff]
        %v643 = vld [vmem:[%s4 + $0xbc] sm:$0xf]
        %v676 = vunpack.c.l.b16 %v612
        %v677 = vunpack.c.h.b16 %v612
        %v678 = vunpack.c.l.b16 %v613
        %v679 = vunpack.c.l.b16 %v614
        %v680 = vunpack.c.h.b16 %v614
        %v681 = vunpack.c.l.b16 %v615
        %v682 = vunpack.c.l.b16 %v616
        %v683 = vunpack.c.h.b16 %v616
        %v684 = vunpack.c.l.b16 %v617
        %v685 = vunpack.c.l.b16 %v618
        %v686 = vunpack.c.h.b16 %v618
        %v687 = vunpack.c.l.b16 %v619
        %v688 = vunpack.c.l.b16 %v620
        %v689 = vunpack.c.h.b16 %v620
        %v690 = vunpack.c.l.b16 %v621
        %v691 = vunpack.c.l.b16 %v622
        %v692 = vunpack.c.h.b16 %v622
        %v693 = vunpack.c.l.b16 %v623
        %v694 = vunpack.c.l.b16 %v624
        %v695 = vunpack.c.h.b16 %v624
        %v696 = vunpack.c.l.b16 %v625
        %v697 = vunpack.c.l.b16 %v626
        %v698 = vunpack.c.h.b16 %v626
        %v699 = vunpack.c.l.b16 %v627
        %v700 = vunpack.c.l.b16 %v628
        %v701 = vunpack.c.h.b16 %v628
        %v702 = vunpack.c.l.b16 %v629
        %v703 = vunpack.c.l.b16 %v630
        %v704 = vunpack.c.h.b16 %v630
        %v705 = vunpack.c.l.b16 %v631
        %v706 = vunpack.c.l.b16 %v632
        %v707 = vunpack.c.h.b16 %v632
        %v708 = vunpack.c.l.b16 %v633
        %v709 = vunpack.c.l.b16 %v634
        %v710 = vunpack.c.h.b16 %v634
        %v711 = vunpack.c.l.b16 %v635
        %v712 = vunpack.c.l.b16 %v636
        %v713 = vunpack.c.h.b16 %v636
        %v714 = vunpack.c.l.b16 %v637
        %v715 = vunpack.c.l.b16 %v638
        %v716 = vunpack.c.h.b16 %v638
        %v717 = vunpack.c.l.b16 %v639
        %v718 = vunpack.c.l.b16 %v640
        %v719 = vunpack.c.h.b16 %v640
        %v720 = vunpack.c.l.b16 %v641
        %v721 = vunpack.c.l.b16 %v642
        %v722 = vunpack.c.h.b16 %v642
        %v723 = vunpack.c.l.b16 %v643
        %v724 = vpack.c.b16 %v679, %v676
        %v725 = vpack.c.b16 %v680, %v677
        %v726 = vpack.c.b16 %v681, %v678
        %v727 = vpack.c.b16 %v685, %v682
        %v728 = vpack.c.b16 %v686, %v683
        %v729 = vpack.c.b16 %v687, %v684
        %v730 = vpack.c.b16 %v691, %v688
        %v731 = vpack.c.b16 %v692, %v689
        %v732 = vpack.c.b16 %v693, %v690
        %v733 = vpack.c.b16 %v697, %v694
        %v734 = vpack.c.b16 %v698, %v695
        %v735 = vpack.c.b16 %v699, %v696
        %v736 = vpack.c.b16 %v703, %v700
        %v737 = vpack.c.b16 %v704, %v701
        %v738 = vpack.c.b16 %v705, %v702
        %v739 = vpack.c.b16 %v709, %v706
        %v740 = vpack.c.b16 %v710, %v707
        %v741 = vpack.c.b16 %v711, %v708
        %v742 = vpack.c.b16 %v715, %v712
        %v743 = vpack.c.b16 %v716, %v713
        %v744 = vpack.c.b16 %v717, %v714
        %v745 = vpack.c.b16 %v721, %v718
        %v746 = vpack.c.b16 %v722, %v719
        %v747 = vpack.c.b16 %v723, %v720
        %772 = vmatprep.subr.bf16.mxu0 %v746
        %773 = vmatpush1.bf16.msra.mxu0 %v745
        %774 = vmatprep.subr.bf16.mxu0 %v743
        %775 = vmatpush1.bf16.msra.mxu0 %v742
        %776 = vmatprep.subr.bf16.mxu0 %v740
        %777 = vmatpush1.bf16.msra.mxu0 %v739
        %778 = vmatprep.subr.bf16.mxu0 %v737
        %779 = vmatpush1.bf16.msra.mxu0 %v736
        %780 = vmatprep.subr.bf16.mxu0 %v734
        %781 = vmatpush1.bf16.msra.mxu0 %v733
        %782 = vmatprep.subr.bf16.mxu0 %v731
        %783 = vmatpush1.bf16.msra.mxu0 %v730
        %784 = vmatprep.subr.bf16.mxu0 %v728
        %785 = vmatpush1.bf16.msra.mxu0 %v727
        %786 = vmatprep.subr.bf16.mxu0 %v725
        %787 = vmatpush1.bf16.msra.mxu0 %v724
        %788 = vmatprep.subr.bf16.mxu0 0
        %789 = vmatpush2.bf16.msra.mxu0 0
        %790 = vmatprep.subr.bf16.mxu0 0
        %791 = vmatpush2.bf16.msra.mxu0 0
        %792 = vmatprep.subr.bf16.mxu0 0
        %793 = vmatpush2.bf16.msra.mxu0 0
        %794 = vmatprep.subr.bf16.mxu0 0
        %795 = vmatpush2.bf16.msra.mxu0 0
        %796 = vmatprep.subr.bf16.mxu0 0
        %797 = vmatpush2.bf16.msra.mxu0 0
        %798 = vmatprep.subr.bf16.mxu0 0
        %799 = vmatpush2.bf16.msra.mxu0 0
        %800 = vmatprep.subr.bf16.mxu0 0
        %801 = vmatpush2.bf16.msra.mxu0 0
        %802 = vmatprep.subr.bf16.mxu0 0
        %803 = vmatpush2.bf16.msra.mxu0 0
        %804 = vmatprep.mubr.bf16.mxu0 0
        %805 = vmatmul.mubr.bf16.gmra.mxu0 %v576
        %v806 = vpop.f32.mrf.mxu0
        %v807 = vadd.f32 0.0, %v806
        %v808 = vpop.f32.mrf.mxu0
        %v809 = vadd.f32 0.0, %v808
        %v810 = vpop.f32.mrf.mxu0
        %v811 = vadd.f32 0.0, %v810
        %v812 = vpop.f32.mrf.mxu0
        %v813 = vadd.f32 0.0, %v812
        %814 = vmatprep.mubr.bf16.mxu0 0
        %815 = vmatmul.mubr.bf16.gmra.mxu0 %v577
        %v816 = vpop.f32.mrf.mxu0
        %v817 = vadd.f32 0.0, %v816
        %v818 = vpop.f32.mrf.mxu0
        %v819 = vadd.f32 0.0, %v818
        %v820 = vpop.f32.mrf.mxu0
        %v821 = vadd.f32 0.0, %v820
        %v822 = vpop.f32.mrf.mxu0
        %v823 = vadd.f32 0.0, %v822
        %824 = vmatprep.mubr.bf16.mxu0 0
        %825 = vmatmul.mubr.bf16.gmra.mxu0 %v578
        %v826 = vpop.f32.mrf.mxu0
        %v827 = vadd.f32 0.0, %v826
        %v828 = vpop.f32.mrf.mxu0
        %v829 = vadd.f32 0.0, %v828
        %v830 = vpop.f32.mrf.mxu0
        %v831 = vadd.f32 0.0, %v830
        %v832 = vpop.f32.mrf.mxu0
        %v833 = vadd.f32 0.0, %v832
        %834 = vmatprep.mubr.bf16.mxu0 0
        %835 = vmatmul.mubr.bf16.gmra.mxu0 %v579
        %v836 = vpop.f32.mrf.mxu0
        %v837 = vadd.f32 0.0, %v836
        %v838 = vpop.f32.mrf.mxu0
        %v839 = vadd.f32 0.0, %v838
        %v840 = vpop.f32.mrf.mxu0
        %v841 = vadd.f32 0.0, %v840
        %v842 = vpop.f32.mrf.mxu0
        %v843 = vadd.f32 0.0, %v842
        %844 = vmatprep.mubr.bf16.mxu0 0
        %845 = vmatmul.mubr.bf16.gmra.mxu0 %v580
        %v846 = vpop.f32.mrf.mxu0
        %v847 = vadd.f32 0.0, %v846
        %v848 = vpop.f32.mrf.mxu0
        %v849 = vadd.f32 0.0, %v848
        %v850 = vpop.f32.mrf.mxu0
        %v851 = vadd.f32 0.0, %v850
        %v852 = vpop.f32.mrf.mxu0
        %v853 = vadd.f32 0.0, %v852
        %854 = vmatprep.mubr.bf16.mxu0 0
        %855 = vmatmul.mubr.bf16.gmra.mxu0 %v581
        %v856 = vpop.f32.mrf.mxu0
        %v857 = vadd.f32 0.0, %v856
        %v858 = vpop.f32.mrf.mxu0
        %v859 = vadd.f32 0.0, %v858
        %v860 = vpop.f32.mrf.mxu0
        %v861 = vadd.f32 0.0, %v860
        %v862 = vpop.f32.mrf.mxu0
        %v863 = vadd.f32 0.0, %v862
        %864 = vmatprep.mubr.bf16.mxu0 0
        %865 = vmatmul.mubr.bf16.gmra.mxu0 %v582
        %v866 = vpop.f32.mrf.mxu0
        %v867 = vadd.f32 0.0, %v866
        %v868 = vpop.f32.mrf.mxu0
        %v869 = vadd.f32 0.0, %v868
        %v870 = vpop.f32.mrf.mxu0
        %v871 = vadd.f32 0.0, %v870
        %v872 = vpop.f32.mrf.mxu0
        %v873 = vadd.f32 0.0, %v872
        %874 = vmatprep.mubr.bf16.mxu0 0
        %875 = vmatmul.mubr.bf16.gmra.mxu0 %v583
        %v876 = vpop.f32.mrf.mxu0
        %v877 = vadd.f32 0.0, %v876
        %v878 = vpop.f32.mrf.mxu0
        %v879 = vadd.f32 0.0, %v878
        %v880 = vpop.f32.mrf.mxu0
        %v881 = vadd.f32 0.0, %v880
        %v882 = vpop.f32.mrf.mxu0
        %v883 = vadd.f32 0.0, %v882
        %884 = vmatprep.mubr.bf16.mxu0 0
        %885 = vmatmul.mubr.bf16.gmra.mxu0 %v584
        %v886 = vpop.f32.mrf.mxu0
        %v887 = vadd.f32 0.0, %v886
        %v888 = vpop.f32.mrf.mxu0
        %v889 = vadd.f32 0.0, %v888
        %v890 = vpop.f32.mrf.mxu0
        %v891 = vadd.f32 0.0, %v890
        %v892 = vpop.f32.mrf.mxu0
        %v893 = vadd.f32 0.0, %v892
        %894 = vmatprep.mubr.bf16.mxu0 0
        %895 = vmatmul.mubr.bf16.gmra.mxu0 %v585
        %v896 = vpop.f32.mrf.mxu0
        %v897 = vadd.f32 0.0, %v896
        %v898 = vpop.f32.mrf.mxu0
        %v899 = vadd.f32 0.0, %v898
        %v900 = vpop.f32.mrf.mxu0
        %v901 = vadd.f32 0.0, %v900
        %v902 = vpop.f32.mrf.mxu0
        %v903 = vadd.f32 0.0, %v902
        %904 = vmatprep.mubr.bf16.mxu0 0
        %905 = vmatmul.mubr.bf16.gmra.mxu0 %v586
        %v906 = vpop.f32.mrf.mxu0
        %v907 = vadd.f32 0.0, %v906
        %v908 = vpop.f32.mrf.mxu0
        %v909 = vadd.f32 0.0, %v908
        %v910 = vpop.f32.mrf.mxu0
        %v911 = vadd.f32 0.0, %v910
        %v912 = vpop.f32.mrf.mxu0
        %v913 = vadd.f32 0.0, %v912
        %914 = vmatprep.mubr.bf16.mxu0 0
        %915 = vmatmul.mubr.bf16.gmra.mxu0 %v587
        %v916 = vpop.f32.mrf.mxu0
        %v917 = vadd.f32 0.0, %v916
        %v918 = vpop.f32.mrf.mxu0
        %v919 = vadd.f32 0.0, %v918
        %v920 = vpop.f32.mrf.mxu0
        %v921 = vadd.f32 0.0, %v920
        %v922 = vpop.f32.mrf.mxu0
        %v923 = vadd.f32 0.0, %v922
        %924 = vmatprep.mubr.bf16.mxu0 0
        %925 = vmatmul.mubr.bf16.gmra.mxu0 %v588
        %v926 = vpop.f32.mrf.mxu0
        %v927 = vadd.f32 0.0, %v926
        %v928 = vpop.f32.mrf.mxu0
        %v929 = vadd.f32 0.0, %v928
        %v930 = vpop.f32.mrf.mxu0
        %v931 = vadd.f32 0.0, %v930
        %v932 = vpop.f32.mrf.mxu0
        %v933 = vadd.f32 0.0, %v932
        %934 = vmatprep.mubr.bf16.mxu0 0
        %935 = vmatmul.mubr.bf16.gmra.mxu0 %v589
        %v936 = vpop.f32.mrf.mxu0
        %v937 = vadd.f32 0.0, %v936
        %v938 = vpop.f32.mrf.mxu0
        %v939 = vadd.f32 0.0, %v938
        %v940 = vpop.f32.mrf.mxu0
        %v941 = vadd.f32 0.0, %v940
        %v942 = vpop.f32.mrf.mxu0
        %v943 = vadd.f32 0.0, %v942
        %944 = vmatprep.mubr.bf16.mxu0 0
        %945 = vmatmul.mubr.bf16.gmra.mxu0 %v590
        %v946 = vpop.f32.mrf.mxu0
        %v947 = vadd.f32 0.0, %v946
        %v948 = vpop.f32.mrf.mxu0
        %v949 = vadd.f32 0.0, %v948
        %v950 = vpop.f32.mrf.mxu0
        %v951 = vadd.f32 0.0, %v950
        %v952 = vpop.f32.mrf.mxu0
        %v953 = vadd.f32 0.0, %v952
        %954 = vmatprep.mubr.bf16.mxu0 0
        %955 = vmatmul.mubr.bf16.gmra.mxu0 %v591
        %v956 = vpop.f32.mrf.mxu0
        %v957 = vadd.f32 0.0, %v956
        %v958 = vpop.f32.mrf.mxu0
        %v959 = vadd.f32 0.0, %v958
        %v960 = vpop.f32.mrf.mxu0
        %v961 = vadd.f32 0.0, %v960
        %v962 = vpop.f32.mrf.mxu0
        %v963 = vadd.f32 0.0, %v962
        %964 = vmatprep.mubr.bf16.mxu0 0
        %965 = vmatmul.mubr.bf16.gmra.mxu0 %v592
        %v966 = vpop.f32.mrf.mxu0
        %v967 = vadd.f32 0.0, %v966
        %v968 = vpop.f32.mrf.mxu0
        %v969 = vadd.f32 0.0, %v968
        %v970 = vpop.f32.mrf.mxu0
        %v971 = vadd.f32 0.0, %v970
        %v972 = vpop.f32.mrf.mxu0
        %v973 = vadd.f32 0.0, %v972
        %974 = vmatprep.mubr.bf16.mxu0 0
        %975 = vmatmul.mubr.bf16.gmra.mxu0 %v593
        %v976 = vpop.f32.mrf.mxu0
        %v977 = vadd.f32 0.0, %v976
        %v978 = vpop.f32.mrf.mxu0
        %v979 = vadd.f32 0.0, %v978
        %v980 = vpop.f32.mrf.mxu0
        %v981 = vadd.f32 0.0, %v980
        %v982 = vpop.f32.mrf.mxu0
        %v983 = vadd.f32 0.0, %v982
        %984 = vmatprep.mubr.bf16.mxu0 0
        %985 = vmatmul.mubr.bf16.gmra.mxu0 %v594
        %v986 = vpop.f32.mrf.mxu0
        %v987 = vadd.f32 0.0, %v986
        %v988 = vpop.f32.mrf.mxu0
        %v989 = vadd.f32 0.0, %v988
        %v990 = vpop.f32.mrf.mxu0
        %v991 = vadd.f32 0.0, %v990
        %v992 = vpop.f32.mrf.mxu0
        %v993 = vadd.f32 0.0, %v992
        %994 = vmatprep.mubr.bf16.mxu0 0
        %995 = vmatmul.mubr.bf16.gmra.mxu0 %v595
        %v996 = vpop.f32.mrf.mxu0
        %v997 = vadd.f32 0.0, %v996
        %v998 = vpop.f32.mrf.mxu0
        %v999 = vadd.f32 0.0, %v998
        %v1000 = vpop.f32.mrf.mxu0
        %v1001 = vadd.f32 0.0, %v1000
        %v1002 = vpop.f32.mrf.mxu0
        %v1003 = vadd.f32 0.0, %v1002
        %1004 = vmatprep.mubr.bf16.mxu0 0
        %1005 = vmatmul.mubr.bf16.gmra.mxu0 %v596
        %v1006 = vpop.f32.mrf.mxu0
        %v1007 = vadd.f32 0.0, %v1006
        %v1008 = vpop.f32.mrf.mxu0
        %v1009 = vadd.f32 0.0, %v1008
        %v1010 = vpop.f32.mrf.mxu0
        %v1011 = vadd.f32 0.0, %v1010
        %v1012 = vpop.f32.mrf.mxu0
        %v1013 = vadd.f32 0.0, %v1012
        %1014 = vmatprep.mubr.bf16.mxu0 0
        %1015 = vmatmul.mubr.bf16.gmra.mxu0 %v597
        %v1016 = vpop.f32.mrf.mxu0
        %v1017 = vadd.f32 0.0, %v1016
        %v1018 = vpop.f32.mrf.mxu0
        %v1019 = vadd.f32 0.0, %v1018
        %v1020 = vpop.f32.mrf.mxu0
        %v1021 = vadd.f32 0.0, %v1020
        %v1022 = vpop.f32.mrf.mxu0
        %v1023 = vadd.f32 0.0, %v1022
        %1024 = vmatprep.mubr.bf16.mxu0 0
        %1025 = vmatmul.mubr.bf16.gmra.mxu0 %v598
        %v1026 = vpop.f32.mrf.mxu0
        %v1027 = vadd.f32 0.0, %v1026
        %v1028 = vpop.f32.mrf.mxu0
        %v1029 = vadd.f32 0.0, %v1028
        %v1030 = vpop.f32.mrf.mxu0
        %v1031 = vadd.f32 0.0, %v1030
        %v1032 = vpop.f32.mrf.mxu0
        %v1033 = vadd.f32 0.0, %v1032
        %1034 = vmatprep.mubr.bf16.mxu0 0
        %1035 = vmatmul.mubr.bf16.gmra.mxu0 %v599
        %v1036 = vpop.f32.mrf.mxu0
        %v1037 = vadd.f32 0.0, %v1036
        %v1038 = vpop.f32.mrf.mxu0
        %v1039 = vadd.f32 0.0, %v1038
        %v1040 = vpop.f32.mrf.mxu0
        %v1041 = vadd.f32 0.0, %v1040
        %v1042 = vpop.f32.mrf.mxu0
        %v1043 = vadd.f32 0.0, %v1042
        %1044 = vmatprep.mubr.bf16.mxu0 0
        %1045 = vmatmul.mubr.bf16.gmra.mxu0 %v600
        %v1046 = vpop.f32.mrf.mxu0
        %v1047 = vadd.f32 0.0, %v1046
        %v1048 = vpop.f32.mrf.mxu0
        %v1049 = vadd.f32 0.0, %v1048
        %v1050 = vpop.f32.mrf.mxu0
        %v1051 = vadd.f32 0.0, %v1050
        %v1052 = vpop.f32.mrf.mxu0
        %v1053 = vadd.f32 0.0, %v1052
        %1054 = vmatprep.mubr.bf16.mxu0 0
        %1055 = vmatmul.mubr.bf16.gmra.mxu0 %v601
        %v1056 = vpop.f32.mrf.mxu0
        %v1057 = vadd.f32 0.0, %v1056
        %v1058 = vpop.f32.mrf.mxu0
        %v1059 = vadd.f32 0.0, %v1058
        %v1060 = vpop.f32.mrf.mxu0
        %v1061 = vadd.f32 0.0, %v1060
        %v1062 = vpop.f32.mrf.mxu0
        %v1063 = vadd.f32 0.0, %v1062
        %1064 = vmatprep.mubr.bf16.mxu0 0
        %1065 = vmatmul.mubr.bf16.gmra.mxu0 %v602
        %v1066 = vpop.f32.mrf.mxu0
        %v1067 = vadd.f32 0.0, %v1066
        %v1068 = vpop.f32.mrf.mxu0
        %v1069 = vadd.f32 0.0, %v1068
        %v1070 = vpop.f32.mrf.mxu0
        %v1071 = vadd.f32 0.0, %v1070
        %v1072 = vpop.f32.mrf.mxu0
        %v1073 = vadd.f32 0.0, %v1072
        %1074 = vmatprep.mubr.bf16.mxu0 0
        %1075 = vmatmul.mubr.bf16.gmra.mxu0 %v603
        %v1076 = vpop.f32.mrf.mxu0
        %v1077 = vadd.f32 0.0, %v1076
        %v1078 = vpop.f32.mrf.mxu0
        %v1079 = vadd.f32 0.0, %v1078
        %v1080 = vpop.f32.mrf.mxu0
        %v1081 = vadd.f32 0.0, %v1080
        %v1082 = vpop.f32.mrf.mxu0
        %v1083 = vadd.f32 0.0, %v1082
        %1084 = vmatprep.mubr.bf16.mxu0 0
        %1085 = vmatmul.mubr.bf16.gmra.mxu0 %v604
        %v1086 = vpop.f32.mrf.mxu0
        %v1087 = vadd.f32 0.0, %v1086
        %v1088 = vpop.f32.mrf.mxu0
        %v1089 = vadd.f32 0.0, %v1088
        %v1090 = vpop.f32.mrf.mxu0
        %v1091 = vadd.f32 0.0, %v1090
        %v1092 = vpop.f32.mrf.mxu0
        %v1093 = vadd.f32 0.0, %v1092
        %1094 = vmatprep.mubr.bf16.mxu0 0
        %1095 = vmatmul.mubr.bf16.gmra.mxu0 %v605
        %v1096 = vpop.f32.mrf.mxu0
        %v1097 = vadd.f32 0.0, %v1096
        %v1098 = vpop.f32.mrf.mxu0
        %v1099 = vadd.f32 0.0, %v1098
        %v1100 = vpop.f32.mrf.mxu0
        %v1101 = vadd.f32 0.0, %v1100
        %v1102 = vpop.f32.mrf.mxu0
        %v1103 = vadd.f32 0.0, %v1102
        %1104 = vmatprep.mubr.bf16.mxu0 0
        %1105 = vmatmul.mubr.bf16.gmra.mxu0 %v606
        %v1106 = vpop.f32.mrf.mxu0
        %v1107 = vadd.f32 0.0, %v1106
        %v1108 = vpop.f32.mrf.mxu0
        %v1109 = vadd.f32 0.0, %v1108
        %v1110 = vpop.f32.mrf.mxu0
        %v1111 = vadd.f32 0.0, %v1110
        %v1112 = vpop.f32.mrf.mxu0
        %v1113 = vadd.f32 0.0, %v1112
        %1114 = vmatprep.mubr.bf16.mxu0 0
        %1115 = vmatmul.mubr.bf16.gmra.mxu0 %v607
        %v1116 = vpop.f32.mrf.mxu0
        %v1117 = vadd.f32 0.0, %v1116
        %v1118 = vpop.f32.mrf.mxu0
        %v1119 = vadd.f32 0.0, %v1118
        %v1120 = vpop.f32.mrf.mxu0
        %v1121 = vadd.f32 0.0, %v1120
        %v1122 = vpop.f32.mrf.mxu0
        %v1123 = vadd.f32 0.0, %v1122
        %1124 = vmatprep.mubr.bf16.mxu0 0
        %1125 = vmatmul.mubr.bf16.gmra.mxu0 %v608
        %v1126 = vpop.f32.mrf.mxu0
        %v1127 = vadd.f32 0.0, %v1126
        %v1128 = vpop.f32.mrf.mxu0
        %v1129 = vadd.f32 0.0, %v1128
        %v1130 = vpop.f32.mrf.mxu0
        %v1131 = vadd.f32 0.0, %v1130
        %v1132 = vpop.f32.mrf.mxu0
        %v1133 = vadd.f32 0.0, %v1132
        %1134 = vmatprep.mubr.bf16.mxu0 0
        %1135 = vmatmul.mubr.bf16.gmra.mxu0 %v609
        %v1136 = vpop.f32.mrf.mxu0
        %v1137 = vadd.f32 0.0, %v1136
        %v1138 = vpop.f32.mrf.mxu0
        %v1139 = vadd.f32 0.0, %v1138
        %v1140 = vpop.f32.mrf.mxu0
        %v1141 = vadd.f32 0.0, %v1140
        %v1142 = vpop.f32.mrf.mxu0
        %v1143 = vadd.f32 0.0, %v1142
        %1144 = vmatprep.mubr.bf16.mxu0 0
        %1145 = vmatmul.mubr.bf16.gmra.mxu0 %v610
        %v1146 = vpop.f32.mrf.mxu0
        %v1147 = vadd.f32 0.0, %v1146
        %v1148 = vpop.f32.mrf.mxu0
        %v1149 = vadd.f32 0.0, %v1148
        %v1150 = vpop.f32.mrf.mxu0
        %v1151 = vadd.f32 0.0, %v1150
        %v1152 = vpop.f32.mrf.mxu0
        %v1153 = vadd.f32 0.0, %v1152
        %1154 = vmatprep.mubr.bf16.mxu0 0
        %1155 = vmatmul.mubr.bf16.gmra.mxu0 %v611
        %v1156 = vpop.f32.mrf.mxu0
        %v1157 = vadd.f32 0.0, %v1156
        %v1158 = vpop.f32.mrf.mxu0
        %v1159 = vadd.f32 0.0, %v1158
        %v1160 = vpop.f32.mrf.mxu0
        %v1161 = vadd.f32 0.0, %v1160
        %v1162 = vpop.f32.mrf.mxu0
        %v1163 = vadd.f32 0.0, %v1162
        %1164 = vdwg.mxu0
        %1165 = vmatprep.subr.bf16.mxu0 0
        %1166 = vmatpush1.bf16.msra.mxu0 %v747
        %1167 = vmatprep.subr.bf16.mxu0 0
        %1168 = vmatpush1.bf16.msra.mxu0 %v744
        %1169 = vmatprep.subr.bf16.mxu0 0
        %1170 = vmatpush1.bf16.msra.mxu0 %v741
        %1171 = vmatprep.subr.bf16.mxu0 0
        %1172 = vmatpush1.bf16.msra.mxu0 %v738
        %1173 = vmatprep.subr.bf16.mxu0 0
        %1174 = vmatpush1.bf16.msra.mxu0 %v735
        %1175 = vmatprep.subr.bf16.mxu0 0
        %1176 = vmatpush1.bf16.msra.mxu0 %v732
        %1177 = vmatprep.subr.bf16.mxu0 0
        %1178 = vmatpush1.bf16.msra.mxu0 %v729
        %1179 = vmatprep.subr.bf16.mxu0 0
        %1180 = vmatpush1.bf16.msra.mxu0 %v726
        %1181 = vmatprep.subr.bf16.mxu0 0
        %1182 = vmatpush2.bf16.msra.mxu0 0
        %1183 = vmatprep.subr.bf16.mxu0 0
        %1184 = vmatpush2.bf16.msra.mxu0 0
        %1185 = vmatprep.subr.bf16.mxu0 0
        %1186 = vmatpush2.bf16.msra.mxu0 0
        %1187 = vmatprep.subr.bf16.mxu0 0
        %1188 = vmatpush2.bf16.msra.mxu0 0
        %1189 = vmatprep.subr.bf16.mxu0 0
        %1190 = vmatpush2.bf16.msra.mxu0 0
        %1191 = vmatprep.subr.bf16.mxu0 0
        %1192 = vmatpush2.bf16.msra.mxu0 0
        %1193 = vmatprep.subr.bf16.mxu0 0
        %1194 = vmatpush2.bf16.msra.mxu0 0
        %1195 = vmatprep.subr.bf16.mxu0 0
        %1196 = vmatpush2.bf16.msra.mxu0 0
        %1197 = vmatprep.mubr.bf16.mxu0 0
        %1198 = vmatmul.mubr.bf16.gmra.mxu0 %v576
        %v1199 = vpop.f32.mrf.mxu0
        %v1200 = vadd.f32 0.0, %v1199
        %v1201 = vpop.f32.mrf.mxu0
        %v1202 = vpop.f32.mrf.mxu0
        %v1203 = vadd.f32 0.0, %v1202
        %v1204 = vpop.f32.mrf.mxu0
        %1205 = vmatprep.mubr.bf16.mxu0 0
        %1206 = vmatmul.mubr.bf16.gmra.mxu0 %v577
        %v1207 = vpop.f32.mrf.mxu0
        %v1208 = vadd.f32 0.0, %v1207
        %v1209 = vpop.f32.mrf.mxu0
        %v1210 = vpop.f32.mrf.mxu0
        %v1211 = vadd.f32 0.0, %v1210
        %v1212 = vpop.f32.mrf.mxu0
        %1213 = vmatprep.mubr.bf16.mxu0 0
        %1214 = vmatmul.mubr.bf16.gmra.mxu0 %v578
        %v1215 = vpop.f32.mrf.mxu0
        %v1216 = vadd.f32 0.0, %v1215
        %v1217 = vpop.f32.mrf.mxu0
        %v1218 = vpop.f32.mrf.mxu0
        %v1219 = vadd.f32 0.0, %v1218
        %v1220 = vpop.f32.mrf.mxu0
        %1221 = vmatprep.mubr.bf16.mxu0 0
        %1222 = vmatmul.mubr.bf16.gmra.mxu0 %v579
        %v1223 = vpop.f32.mrf.mxu0
        %v1224 = vadd.f32 0.0, %v1223
        %v1225 = vpop.f32.mrf.mxu0
        %v1226 = vpop.f32.mrf.mxu0
        %v1227 = vadd.f32 0.0, %v1226
        %v1228 = vpop.f32.mrf.mxu0
        %1229 = vmatprep.mubr.bf16.mxu0 0
        %1230 = vmatmul.mubr.bf16.gmra.mxu0 %v580
        %v1231 = vpop.f32.mrf.mxu0
        %v1232 = vadd.f32 0.0, %v1231
        %v1233 = vpop.f32.mrf.mxu0
        %v1234 = vpop.f32.mrf.mxu0
        %v1235 = vadd.f32 0.0, %v1234
        %v1236 = vpop.f32.mrf.mxu0
        %1237 = vmatprep.mubr.bf16.mxu0 0
        %1238 = vmatmul.mubr.bf16.gmra.mxu0 %v581
        %v1239 = vpop.f32.mrf.mxu0
        %v1240 = vadd.f32 0.0, %v1239
        %v1241 = vpop.f32.mrf.mxu0
        %v1242 = vpop.f32.mrf.mxu0
        %v1243 = vadd.f32 0.0, %v1242
        %v1244 = vpop.f32.mrf.mxu0
        %1245 = vmatprep.mubr.bf16.mxu0 0
        %1246 = vmatmul.mubr.bf16.gmra.mxu0 %v582
        %v1247 = vpop.f32.mrf.mxu0
        %v1248 = vadd.f32 0.0, %v1247
        %v1249 = vpop.f32.mrf.mxu0
        %v1250 = vpop.f32.mrf.mxu0
        %v1251 = vadd.f32 0.0, %v1250
        %v1252 = vpop.f32.mrf.mxu0
        %1253 = vmatprep.mubr.bf16.mxu0 0
        %1254 = vmatmul.mubr.bf16.gmra.mxu0 %v583
        %v1255 = vpop.f32.mrf.mxu0
        %v1256 = vadd.f32 0.0, %v1255
        %v1257 = vpop.f32.mrf.mxu0
        %v1258 = vpop.f32.mrf.mxu0
        %v1259 = vadd.f32 0.0, %v1258
        %v1260 = vpop.f32.mrf.mxu0
        %1261 = vmatprep.mubr.bf16.mxu0 0
        %1262 = vmatmul.mubr.bf16.gmra.mxu0 %v584
        %v1263 = vpop.f32.mrf.mxu0
        %v1264 = vadd.f32 0.0, %v1263
        %v1265 = vpop.f32.mrf.mxu0
        %v1266 = vpop.f32.mrf.mxu0
        %v1267 = vadd.f32 0.0, %v1266
        %v1268 = vpop.f32.mrf.mxu0
        %1269 = vmatprep.mubr.bf16.mxu0 0
        %1270 = vmatmul.mubr.bf16.gmra.mxu0 %v585
        %v1271 = vpop.f32.mrf.mxu0
        %v1272 = vadd.f32 0.0, %v1271
        %v1273 = vpop.f32.mrf.mxu0
        %v1274 = vpop.f32.mrf.mxu0
        %v1275 = vadd.f32 0.0, %v1274
        %v1276 = vpop.f32.mrf.mxu0
        %1277 = vmatprep.mubr.bf16.mxu0 0
        %1278 = vmatmul.mubr.bf16.gmra.mxu0 %v586
        %v1279 = vpop.f32.mrf.mxu0
        %v1280 = vadd.f32 0.0, %v1279
        %v1281 = vpop.f32.mrf.mxu0
        %v1282 = vpop.f32.mrf.mxu0
        %v1283 = vadd.f32 0.0, %v1282
        %v1284 = vpop.f32.mrf.mxu0
        %1285 = vmatprep.mubr.bf16.mxu0 0
        %1286 = vmatmul.mubr.bf16.gmra.mxu0 %v587
        %v1287 = vpop.f32.mrf.mxu0
        %v1288 = vadd.f32 0.0, %v1287
        %v1289 = vpop.f32.mrf.mxu0
        %v1290 = vpop.f32.mrf.mxu0
        %v1291 = vadd.f32 0.0, %v1290
        %v1292 = vpop.f32.mrf.mxu0
        %1293 = vmatprep.mubr.bf16.mxu0 0
        %1294 = vmatmul.mubr.bf16.gmra.mxu0 %v588
        %v1295 = vpop.f32.mrf.mxu0
        %v1296 = vadd.f32 0.0, %v1295
        %v1297 = vpop.f32.mrf.mxu0
        %v1298 = vpop.f32.mrf.mxu0
        %v1299 = vadd.f32 0.0, %v1298
        %v1300 = vpop.f32.mrf.mxu0
        %1301 = vmatprep.mubr.bf16.mxu0 0
        %1302 = vmatmul.mubr.bf16.gmra.mxu0 %v589
        %v1303 = vpop.f32.mrf.mxu0
        %v1304 = vadd.f32 0.0, %v1303
        %v1305 = vpop.f32.mrf.mxu0
        %v1306 = vpop.f32.mrf.mxu0
        %v1307 = vadd.f32 0.0, %v1306
        %v1308 = vpop.f32.mrf.mxu0
        %1309 = vmatprep.mubr.bf16.mxu0 0
        %1310 = vmatmul.mubr.bf16.gmra.mxu0 %v590
        %v1311 = vpop.f32.mrf.mxu0
        %v1312 = vadd.f32 0.0, %v1311
        %v1313 = vpop.f32.mrf.mxu0
        %v1314 = vpop.f32.mrf.mxu0
        %v1315 = vadd.f32 0.0, %v1314
        %v1316 = vpop.f32.mrf.mxu0
        %1317 = vmatprep.mubr.bf16.mxu0 0
        %1318 = vmatmul.mubr.bf16.gmra.mxu0 %v591
        %v1319 = vpop.f32.mrf.mxu0
        %v1320 = vadd.f32 0.0, %v1319
        %v1321 = vpop.f32.mrf.mxu0
        %v1322 = vpop.f32.mrf.mxu0
        %v1323 = vadd.f32 0.0, %v1322
        %v1324 = vpop.f32.mrf.mxu0
        %1325 = vmatprep.mubr.bf16.mxu0 0
        %1326 = vmatmul.mubr.bf16.gmra.mxu0 %v592
        %v1327 = vpop.f32.mrf.mxu0
        %v1328 = vadd.f32 0.0, %v1327
        %v1329 = vpop.f32.mrf.mxu0
        %v1330 = vpop.f32.mrf.mxu0
        %v1331 = vadd.f32 0.0, %v1330
        %v1332 = vpop.f32.mrf.mxu0
        %1333 = vmatprep.mubr.bf16.mxu0 0
        %1334 = vmatmul.mubr.bf16.gmra.mxu0 %v593
        %v1335 = vpop.f32.mrf.mxu0
        %v1336 = vadd.f32 0.0, %v1335
        %v1337 = vpop.f32.mrf.mxu0
        %v1338 = vpop.f32.mrf.mxu0
        %v1339 = vadd.f32 0.0, %v1338
        %v1340 = vpop.f32.mrf.mxu0
        %1341 = vmatprep.mubr.bf16.mxu0 0
        %1342 = vmatmul.mubr.bf16.gmra.mxu0 %v594
        %v1343 = vpop.f32.mrf.mxu0
        %v1344 = vadd.f32 0.0, %v1343
        %v1345 = vpop.f32.mrf.mxu0
        %v1346 = vpop.f32.mrf.mxu0
        %v1347 = vadd.f32 0.0, %v1346
        %v1348 = vpop.f32.mrf.mxu0
        %1349 = vmatprep.mubr.bf16.mxu0 0
        %1350 = vmatmul.mubr.bf16.gmra.mxu0 %v595
        %v1351 = vpop.f32.mrf.mxu0
        %v1352 = vadd.f32 0.0, %v1351
        %v1353 = vpop.f32.mrf.mxu0
        %v1354 = vpop.f32.mrf.mxu0
        %v1355 = vadd.f32 0.0, %v1354
        %v1356 = vpop.f32.mrf.mxu0
        %1357 = vmatprep.mubr.bf16.mxu0 0
        %1358 = vmatmul.mubr.bf16.gmra.mxu0 %v596
        %v1359 = vpop.f32.mrf.mxu0
        %v1360 = vadd.f32 0.0, %v1359
        %v1361 = vpop.f32.mrf.mxu0
        %v1362 = vpop.f32.mrf.mxu0
        %v1363 = vadd.f32 0.0, %v1362
        %v1364 = vpop.f32.mrf.mxu0
        %1365 = vmatprep.mubr.bf16.mxu0 0
        %1366 = vmatmul.mubr.bf16.gmra.mxu0 %v597
        %v1367 = vpop.f32.mrf.mxu0
        %v1368 = vadd.f32 0.0, %v1367
        %v1369 = vpop.f32.mrf.mxu0
        %v1370 = vpop.f32.mrf.mxu0
        %v1371 = vadd.f32 0.0, %v1370
        %v1372 = vpop.f32.mrf.mxu0
        %1373 = vmatprep.mubr.bf16.mxu0 0
        %1374 = vmatmul.mubr.bf16.gmra.mxu0 %v598
        %v1375 = vpop.f32.mrf.mxu0
        %v1376 = vadd.f32 0.0, %v1375
        %v1377 = vpop.f32.mrf.mxu0
        %v1378 = vpop.f32.mrf.mxu0
        %v1379 = vadd.f32 0.0, %v1378
        %v1380 = vpop.f32.mrf.mxu0
        %1381 = vmatprep.mubr.bf16.mxu0 0
        %1382 = vmatmul.mubr.bf16.gmra.mxu0 %v599
        %v1383 = vpop.f32.mrf.mxu0
        %v1384 = vadd.f32 0.0, %v1383
        %v1385 = vpop.f32.mrf.mxu0
        %v1386 = vpop.f32.mrf.mxu0
        %v1387 = vadd.f32 0.0, %v1386
        %v1388 = vpop.f32.mrf.mxu0
        %1389 = vmatprep.mubr.bf16.mxu0 0
        %1390 = vmatmul.mubr.bf16.gmra.mxu0 %v600
        %v1391 = vpop.f32.mrf.mxu0
        %v1392 = vadd.f32 0.0, %v1391
        %v1393 = vpop.f32.mrf.mxu0
        %v1394 = vpop.f32.mrf.mxu0
        %v1395 = vadd.f32 0.0, %v1394
        %v1396 = vpop.f32.mrf.mxu0
        %1397 = vmatprep.mubr.bf16.mxu0 0
        %1398 = vmatmul.mubr.bf16.gmra.mxu0 %v601
        %v1399 = vpop.f32.mrf.mxu0
        %v1400 = vadd.f32 0.0, %v1399
        %v1401 = vpop.f32.mrf.mxu0
        %v1402 = vpop.f32.mrf.mxu0
        %v1403 = vadd.f32 0.0, %v1402
        %v1404 = vpop.f32.mrf.mxu0
        %1405 = vmatprep.mubr.bf16.mxu0 0
        %1406 = vmatmul.mubr.bf16.gmra.mxu0 %v602
        %v1407 = vpop.f32.mrf.mxu0
        %v1408 = vadd.f32 0.0, %v1407
        %v1409 = vpop.f32.mrf.mxu0
        %v1410 = vpop.f32.mrf.mxu0
        %v1411 = vadd.f32 0.0, %v1410
        %v1412 = vpop.f32.mrf.mxu0
        %1413 = vmatprep.mubr.bf16.mxu0 0
        %1414 = vmatmul.mubr.bf16.gmra.mxu0 %v603
        %v1415 = vpop.f32.mrf.mxu0
        %v1416 = vadd.f32 0.0, %v1415
        %v1417 = vpop.f32.mrf.mxu0
        %v1418 = vpop.f32.mrf.mxu0
        %v1419 = vadd.f32 0.0, %v1418
        %v1420 = vpop.f32.mrf.mxu0
        %1421 = vmatprep.mubr.bf16.mxu0 0
        %1422 = vmatmul.mubr.bf16.gmra.mxu0 %v604
        %v1423 = vpop.f32.mrf.mxu0
        %v1424 = vadd.f32 0.0, %v1423
        %v1425 = vpop.f32.mrf.mxu0
        %v1426 = vpop.f32.mrf.mxu0
        %v1427 = vadd.f32 0.0, %v1426
        %v1428 = vpop.f32.mrf.mxu0
        %1429 = vmatprep.mubr.bf16.mxu0 0
        %1430 = vmatmul.mubr.bf16.gmra.mxu0 %v605
        %v1431 = vpop.f32.mrf.mxu0
        %v1432 = vadd.f32 0.0, %v1431
        %v1433 = vpop.f32.mrf.mxu0
        %v1434 = vpop.f32.mrf.mxu0
        %v1435 = vadd.f32 0.0, %v1434
        %v1436 = vpop.f32.mrf.mxu0
        %1437 = vmatprep.mubr.bf16.mxu0 0
        %1438 = vmatmul.mubr.bf16.gmra.mxu0 %v606
        %v1439 = vpop.f32.mrf.mxu0
        %v1440 = vadd.f32 0.0, %v1439
        %v1441 = vpop.f32.mrf.mxu0
        %v1442 = vpop.f32.mrf.mxu0
        %v1443 = vadd.f32 0.0, %v1442
        %v1444 = vpop.f32.mrf.mxu0
        %1445 = vmatprep.mubr.bf16.mxu0 0
        %1446 = vmatmul.mubr.bf16.gmra.mxu0 %v607
        %v1447 = vpop.f32.mrf.mxu0
        %v1448 = vadd.f32 0.0, %v1447
        %v1449 = vpop.f32.mrf.mxu0
        %v1450 = vpop.f32.mrf.mxu0
        %v1451 = vadd.f32 0.0, %v1450
        %v1452 = vpop.f32.mrf.mxu0
        %1453 = vmatprep.mubr.bf16.mxu0 0
        %1454 = vmatmul.mubr.bf16.gmra.mxu0 %v608
        %v1455 = vpop.f32.mrf.mxu0
        %v1456 = vadd.f32 0.0, %v1455
        %v1457 = vpop.f32.mrf.mxu0
        %v1458 = vpop.f32.mrf.mxu0
        %v1459 = vadd.f32 0.0, %v1458
        %v1460 = vpop.f32.mrf.mxu0
        %1461 = vmatprep.mubr.bf16.mxu0 0
        %1462 = vmatmul.mubr.bf16.gmra.mxu0 %v609
        %v1463 = vpop.f32.mrf.mxu0
        %v1464 = vadd.f32 0.0, %v1463
        %v1465 = vpop.f32.mrf.mxu0
        %v1466 = vpop.f32.mrf.mxu0
        %v1467 = vadd.f32 0.0, %v1466
        %v1468 = vpop.f32.mrf.mxu0
        %1469 = vmatprep.mubr.bf16.mxu0 0
        %1470 = vmatmul.mubr.bf16.gmra.mxu0 %v610
        %v1471 = vpop.f32.mrf.mxu0
        %v1472 = vadd.f32 0.0, %v1471
        %v1473 = vpop.f32.mrf.mxu0
        %v1474 = vpop.f32.mrf.mxu0
        %v1475 = vadd.f32 0.0, %v1474
        %v1476 = vpop.f32.mrf.mxu0
        %1477 = vmatprep.mubr.bf16.mxu0 0
        %1478 = vmatmul.mubr.bf16.gmra.mxu0 %v611
        %v1479 = vpop.f32.mrf.mxu0
        %v1480 = vadd.f32 0.0, %v1479
        %v1481 = vpop.f32.mrf.mxu0
        %v1482 = vpop.f32.mrf.mxu0
        %v1483 = vadd.f32 0.0, %v1482
        %v1484 = vpop.f32.mrf.mxu0
        %1485 = vdwg.mxu0
        %v1486 = vld [vmem:[%s502] sm:$0xff]
        %v1487 = vld [vmem:[%s502 + $0x8] sm:$0xff]
        %v1488 = vld [vmem:[%s502 + $0x10] sm:$0xff]
        %v1489 = vld [vmem:[%s502 + $0x18] sm:$0xff]
        %v1490 = vld [vmem:[%s502 + $0x20] sm:$0xff]
        %v1491 = vld [vmem:[%s502 + $0x28] sm:$0xff]
        %v1492 = vld [vmem:[%s502 + $0x30] sm:$0xff]
        %v1493 = vld [vmem:[%s502 + $0x38] sm:$0xff]
        %v1494 = vld [vmem:[%s502 + $0x40] sm:$0xff]
        %v1495 = vld [vmem:[%s502 + $0x48] sm:$0xff]
        %v1496 = vld [vmem:[%s502 + $0x50] sm:$0xff]
        %v1497 = vld [vmem:[%s502 + $0x58] sm:$0xff]
        %v1498 = vld [vmem:[%s502 + $0x60] sm:$0xff]
        %v1499 = vld [vmem:[%s502 + $0x68] sm:$0xff]
        %v1500 = vld [vmem:[%s502 + $0x70] sm:$0xff]
        %v1501 = vld [vmem:[%s502 + $0x78] sm:$0xff]
        %v1502 = vld [vmem:[%s502 + $0x80] sm:$0xff]
        %v1503 = vld [vmem:[%s502 + $0x88] sm:$0xff]
        %v1504 = vld [vmem:[%s502 + $0x90] sm:$0xff]
        %v1505 = vld [vmem:[%s502 + $0x98] sm:$0xff]
        %v1506 = vld [vmem:[%s502 + $0xa0] sm:$0xff]
        %v1507 = vld [vmem:[%s502 + $0xa8] sm:$0xff]
        %v1508 = vld [vmem:[%s502 + $0xb0] sm:$0xff]
        %v1509 = vld [vmem:[%s502 + $0xb8] sm:$0xff]
        %v1510 = vld [vmem:[%s502 + $0xc0] sm:$0xff]
        %v1511 = vld [vmem:[%s502 + $0xc8] sm:$0xff]
        %v1512 = vld [vmem:[%s502 + $0xd0] sm:$0xff]
        %v1513 = vld [vmem:[%s502 + $0xd8] sm:$0xff]
        %v1514 = vld [vmem:[%s502 + $0xe0] sm:$0xff]
        %v1515 = vld [vmem:[%s502 + $0xe8] sm:$0xff]
        %v1516 = vld [vmem:[%s502 + $0xf0] sm:$0xff]
        %v1517 = vld [vmem:[%s502 + $0xf8] sm:$0xff]
        %v1518 = vld [vmem:[%s502 + $0x100] sm:$0xff]
        %v1519 = vld [vmem:[%s502 + $0x108] sm:$0xff]
        %v1520 = vld [vmem:[%s502 + $0x110] sm:$0xff]
        %v1521 = vld [vmem:[%s502 + $0x118] sm:$0xff]
        %v1522 = vld [vmem:[%s502 + $0x120] sm:$0xff]
        %v1523 = vld [vmem:[%s502 + $0x128] sm:$0xff]
        %v1524 = vld [vmem:[%s502 + $0x130] sm:$0xff]
        %v1525 = vld [vmem:[%s502 + $0x138] sm:$0xff]
        %v1526 = vld [vmem:[%s502 + $0x140] sm:$0xff]
        %v1527 = vld [vmem:[%s502 + $0x148] sm:$0xff]
        %v1528 = vld [vmem:[%s502 + $0x150] sm:$0xff]
        %v1529 = vld [vmem:[%s502 + $0x158] sm:$0xff]
        %v1530 = vld [vmem:[%s502 + $0x160] sm:$0xff]
        %v1531 = vld [vmem:[%s502 + $0x168] sm:$0xff]
        %v1532 = vld [vmem:[%s502 + $0x170] sm:$0xff]
        %v1533 = vld [vmem:[%s502 + $0x178] sm:$0xff]
        %v1534 = vld [vmem:[%s502 + $0x180] sm:$0xff]
        %v1535 = vld [vmem:[%s502 + $0x188] sm:$0xff]
        %v1536 = vld [vmem:[%s502 + $0x190] sm:$0xff]
        %v1537 = vld [vmem:[%s502 + $0x198] sm:$0xff]
        %v1538 = vld [vmem:[%s502 + $0x1a0] sm:$0xff]
        %v1539 = vld [vmem:[%s502 + $0x1a8] sm:$0xff]
        %v1540 = vld [vmem:[%s502 + $0x1b0] sm:$0xff]
        %v1541 = vld [vmem:[%s502 + $0x1b8] sm:$0xff]
        %v1542 = vld [vmem:[%s502 + $0x1c0] sm:$0xff]
        %v1543 = vld [vmem:[%s502 + $0x1c8] sm:$0xff]
        %v1544 = vld [vmem:[%s502 + $0x1d0] sm:$0xff]
        %v1545 = vld [vmem:[%s502 + $0x1d8] sm:$0xff]
        %v1546 = vld [vmem:[%s502 + $0x1e0] sm:$0xff]
        %v1547 = vld [vmem:[%s502 + $0x1e8] sm:$0xff]
        %v1548 = vld [vmem:[%s502 + $0x1f0] sm:$0xff]
        %v1549 = vld [vmem:[%s502 + $0x1f8] sm:$0xff]
        %v1550 = vld [vmem:[%s502 + $0x200] sm:$0xff]
        %v1551 = vld [vmem:[%s502 + $0x208] sm:$0xff]
        %v1552 = vld [vmem:[%s502 + $0x210] sm:$0xff]
        %v1553 = vld [vmem:[%s502 + $0x218] sm:$0xff]
        %v1554 = vld [vmem:[%s502 + $0x220] sm:$0xff]
        %v1555 = vld [vmem:[%s502 + $0x228] sm:$0xff]
        %v1556 = vld [vmem:[%s502 + $0x230] sm:$0xff]
        %v1557 = vld [vmem:[%s502 + $0x238] sm:$0xff]
        %v1558 = vpack.c.bf16 %v1487, %v1486
        %v1559 = vpack.c.bf16 %v1489, %v1488
        %v1560 = vpack.c.bf16 %v1491, %v1490
        %v1561 = vpack.c.bf16 %v1493, %v1492
        %v1562 = vpack.c.bf16 %v1495, %v1494
        %v1563 = vpack.c.bf16 %v1497, %v1496
        %v1564 = vpack.c.bf16 %v1499, %v1498
        %v1565 = vpack.c.bf16 %v1501, %v1500
        %v1566 = vpack.c.bf16 %v1503, %v1502
        %v1567 = vpack.c.bf16 %v1505, %v1504
        %v1568 = vpack.c.bf16 %v1507, %v1506
        %v1569 = vpack.c.bf16 %v1509, %v1508
        %v1570 = vpack.c.bf16 %v1511, %v1510
        %v1571 = vpack.c.bf16 %v1513, %v1512
        %v1572 = vpack.c.bf16 %v1515, %v1514
        %v1573 = vpack.c.bf16 %v1517, %v1516
        %v1574 = vpack.c.bf16 %v1519, %v1518
        %v1575 = vpack.c.bf16 %v1521, %v1520
        %v1576 = vpack.c.bf16 %v1523, %v1522
        %v1577 = vpack.c.bf16 %v1525, %v1524
        %v1578 = vpack.c.bf16 %v1527, %v1526
        %v1579 = vpack.c.bf16 %v1529, %v1528
        %v1580 = vpack.c.bf16 %v1531, %v1530
        %v1581 = vpack.c.bf16 %v1533, %v1532
        %v1582 = vpack.c.bf16 %v1535, %v1534
        %v1583 = vpack.c.bf16 %v1537, %v1536
        %v1584 = vpack.c.bf16 %v1539, %v1538
        %v1585 = vpack.c.bf16 %v1541, %v1540
        %v1586 = vpack.c.bf16 %v1543, %v1542
        %v1587 = vpack.c.bf16 %v1545, %v1544
        %v1588 = vpack.c.bf16 %v1547, %v1546
        %v1589 = vpack.c.bf16 %v1549, %v1548
        %v1590 = vpack.c.bf16 %v1551, %v1550
        %v1591 = vpack.c.bf16 %v1553, %v1552
        %v1592 = vpack.c.bf16 %v1555, %v1554
        %v1593 = vpack.c.bf16 %v1557, %v1556
        %v1594 = vld [vmem:[%s5] sm:$0xf]
        %v1595 = vld [vmem:[%s5 + $0x4] sm:$0xf]
        %v1596 = vld [vmem:[%s5 + $0x8] sm:$0xf]
        %v1597 = vld [vmem:[%s5 + $0xc] sm:$0xf]
        %v1598 = vld [vmem:[%s5 + $0x10] sm:$0xf]
        %v1599 = vld [vmem:[%s5 + $0x14] sm:$0xf]
        %v1600 = vld [vmem:[%s5 + $0x18] sm:$0xf]
        %v1601 = vld [vmem:[%s5 + $0x1c] sm:$0xf]
        %v1602 = vld [vmem:[%s5 + $0x20] sm:$0xf]
        %v1603 = vld [vmem:[%s5 + $0x24] sm:$0xf]
        %v1604 = vld [vmem:[%s5 + $0x28] sm:$0xf]
        %v1605 = vld [vmem:[%s5 + $0x2c] sm:$0xf]
        %v1606 = vld [vmem:[%s5 + $0x30] sm:$0xf]
        %v1607 = vld [vmem:[%s5 + $0x34] sm:$0xf]
        %v1608 = vld [vmem:[%s5 + $0x38] sm:$0xf]
        %v1609 = vld [vmem:[%s5 + $0x3c] sm:$0xf]
        %v1626 = vunpack.c.l.b16 %v1594
        %v1627 = vunpack.c.l.b16 %v1595
        %v1628 = vunpack.c.l.b16 %v1596
        %v1629 = vunpack.c.l.b16 %v1597
        %v1630 = vunpack.c.l.b16 %v1598
        %v1631 = vunpack.c.l.b16 %v1599
        %v1632 = vunpack.c.l.b16 %v1600
        %v1633 = vunpack.c.l.b16 %v1601
        %v1634 = vunpack.c.l.b16 %v1602
        %v1635 = vunpack.c.l.b16 %v1603
        %v1636 = vunpack.c.l.b16 %v1604
        %v1637 = vunpack.c.l.b16 %v1605
        %v1638 = vunpack.c.l.b16 %v1606
        %v1639 = vunpack.c.l.b16 %v1607
        %v1640 = vunpack.c.l.b16 %v1608
        %v1641 = vunpack.c.l.b16 %v1609
        %v1642 = vpack.c.b16 %v1627, %v1626
        %v1643 = vpack.c.b16 %v1629, %v1628
        %v1644 = vpack.c.b16 %v1631, %v1630
        %v1645 = vpack.c.b16 %v1633, %v1632
        %v1646 = vpack.c.b16 %v1635, %v1634
        %v1647 = vpack.c.b16 %v1637, %v1636
        %v1648 = vpack.c.b16 %v1639, %v1638
        %v1649 = vpack.c.b16 %v1641, %v1640
        %1658 = vmatprep.subr.bf16.mxu0 0
        %1659 = vmatpush1.bf16.msra.mxu0 %v1649
        %1660 = vmatprep.subr.bf16.mxu0 0
        %1661 = vmatpush1.bf16.msra.mxu0 %v1648
        %1662 = vmatprep.subr.bf16.mxu0 0
        %1663 = vmatpush1.bf16.msra.mxu0 %v1647
        %1664 = vmatprep.subr.bf16.mxu0 0
        %1665 = vmatpush1.bf16.msra.mxu0 %v1646
        %1666 = vmatprep.subr.bf16.mxu0 0
        %1667 = vmatpush1.bf16.msra.mxu0 %v1645
        %1668 = vmatprep.subr.bf16.mxu0 0
        %1669 = vmatpush1.bf16.msra.mxu0 %v1644
        %1670 = vmatprep.subr.bf16.mxu0 0
        %1671 = vmatpush1.bf16.msra.mxu0 %v1643
        %1672 = vmatprep.subr.bf16.mxu0 0
        %1673 = vmatpush1.bf16.msra.mxu0 %v1642
        %1674 = vmatprep.subr.bf16.mxu0 0
        %1675 = vmatpush2.bf16.msra.mxu0 0
        %1676 = vmatprep.subr.bf16.mxu0 0
        %1677 = vmatpush2.bf16.msra.mxu0 0
        %1678 = vmatprep.subr.bf16.mxu0 0
        %1679 = vmatpush2.bf16.msra.mxu0 0
        %1680 = vmatprep.subr.bf16.mxu0 0
        %1681 = vmatpush2.bf16.msra.mxu0 0
        %1682 = vmatprep.subr.bf16.mxu0 0
        %1683 = vmatpush2.bf16.msra.mxu0 0
        %1684 = vmatprep.subr.bf16.mxu0 0
        %1685 = vmatpush2.bf16.msra.mxu0 0
        %1686 = vmatprep.subr.bf16.mxu0 0
        %1687 = vmatpush2.bf16.msra.mxu0 0
        %1688 = vmatprep.subr.bf16.mxu0 0
        %1689 = vmatpush2.bf16.msra.mxu0 0
        %1690 = vmatprep.mubr.bf16.mxu0 0
        %1691 = vmatmul.mubr.bf16.gmra.mxu0 %v1558
        %v1692 = vpop.f32.mrf.mxu0
        %v1693 = vadd.f32 0.0, %v1692
        %v1694 = vpop.f32.mrf.mxu0
        %v1695 = vpop.f32.mrf.mxu0
        %v1696 = vadd.f32 0.0, %v1695
        %v1697 = vpop.f32.mrf.mxu0
        %1698 = vmatprep.mubr.bf16.mxu0 0
        %1699 = vmatmul.mubr.bf16.gmra.mxu0 %v1559
        %v1700 = vpop.f32.mrf.mxu0
        %v1701 = vadd.f32 0.0, %v1700
        %v1702 = vpop.f32.mrf.mxu0
        %v1703 = vpop.f32.mrf.mxu0
        %v1704 = vadd.f32 0.0, %v1703
        %v1705 = vpop.f32.mrf.mxu0
        %1706 = vmatprep.mubr.bf16.mxu0 0
        %1707 = vmatmul.mubr.bf16.gmra.mxu0 %v1560
        %v1708 = vpop.f32.mrf.mxu0
        %v1709 = vadd.f32 0.0, %v1708
        %v1710 = vpop.f32.mrf.mxu0
        %v1711 = vpop.f32.mrf.mxu0
        %v1712 = vadd.f32 0.0, %v1711
        %v1713 = vpop.f32.mrf.mxu0
        %1714 = vmatprep.mubr.bf16.mxu0 0
        %1715 = vmatmul.mubr.bf16.gmra.mxu0 %v1561
        %v1716 = vpop.f32.mrf.mxu0
        %v1717 = vadd.f32 0.0, %v1716
        %v1718 = vpop.f32.mrf.mxu0
        %v1719 = vpop.f32.mrf.mxu0
        %v1720 = vadd.f32 0.0, %v1719
        %v1721 = vpop.f32.mrf.mxu0
        %1722 = vmatprep.mubr.bf16.mxu0 0
        %1723 = vmatmul.mubr.bf16.gmra.mxu0 %v1562
        %v1724 = vpop.f32.mrf.mxu0
        %v1725 = vadd.f32 0.0, %v1724
        %v1726 = vpop.f32.mrf.mxu0
        %v1727 = vpop.f32.mrf.mxu0
        %v1728 = vadd.f32 0.0, %v1727
        %v1729 = vpop.f32.mrf.mxu0
        %1730 = vmatprep.mubr.bf16.mxu0 0
        %1731 = vmatmul.mubr.bf16.gmra.mxu0 %v1563
        %v1732 = vpop.f32.mrf.mxu0
        %v1733 = vadd.f32 0.0, %v1732
        %v1734 = vpop.f32.mrf.mxu0
        %v1735 = vpop.f32.mrf.mxu0
        %v1736 = vadd.f32 0.0, %v1735
        %v1737 = vpop.f32.mrf.mxu0
        %1738 = vmatprep.mubr.bf16.mxu0 0
        %1739 = vmatmul.mubr.bf16.gmra.mxu0 %v1564
        %v1740 = vpop.f32.mrf.mxu0
        %v1741 = vadd.f32 0.0, %v1740
        %v1742 = vpop.f32.mrf.mxu0
        %v1743 = vpop.f32.mrf.mxu0
        %v1744 = vadd.f32 0.0, %v1743
        %v1745 = vpop.f32.mrf.mxu0
        %1746 = vmatprep.mubr.bf16.mxu0 0
        %1747 = vmatmul.mubr.bf16.gmra.mxu0 %v1565
        %v1748 = vpop.f32.mrf.mxu0
        %v1749 = vadd.f32 0.0, %v1748
        %v1750 = vpop.f32.mrf.mxu0
        %v1751 = vpop.f32.mrf.mxu0
        %v1752 = vadd.f32 0.0, %v1751
        %v1753 = vpop.f32.mrf.mxu0
        %1754 = vmatprep.mubr.bf16.mxu0 0
        %1755 = vmatmul.mubr.bf16.gmra.mxu0 %v1566
        %v1756 = vpop.f32.mrf.mxu0
        %v1757 = vadd.f32 0.0, %v1756
        %v1758 = vpop.f32.mrf.mxu0
        %v1759 = vpop.f32.mrf.mxu0
        %v1760 = vadd.f32 0.0, %v1759
        %v1761 = vpop.f32.mrf.mxu0
        %1762 = vmatprep.mubr.bf16.mxu0 0
        %1763 = vmatmul.mubr.bf16.gmra.mxu0 %v1567
        %v1764 = vpop.f32.mrf.mxu0
        %v1765 = vadd.f32 0.0, %v1764
        %v1766 = vpop.f32.mrf.mxu0
        %v1767 = vpop.f32.mrf.mxu0
        %v1768 = vadd.f32 0.0, %v1767
        %v1769 = vpop.f32.mrf.mxu0
        %1770 = vmatprep.mubr.bf16.mxu0 0
        %1771 = vmatmul.mubr.bf16.gmra.mxu0 %v1568
        %v1772 = vpop.f32.mrf.mxu0
        %v1773 = vadd.f32 0.0, %v1772
        %v1774 = vpop.f32.mrf.mxu0
        %v1775 = vpop.f32.mrf.mxu0
        %v1776 = vadd.f32 0.0, %v1775
        %v1777 = vpop.f32.mrf.mxu0
        %1778 = vmatprep.mubr.bf16.mxu0 0
        %1779 = vmatmul.mubr.bf16.gmra.mxu0 %v1569
        %v1780 = vpop.f32.mrf.mxu0
        %v1781 = vadd.f32 0.0, %v1780
        %v1782 = vpop.f32.mrf.mxu0
        %v1783 = vpop.f32.mrf.mxu0
        %v1784 = vadd.f32 0.0, %v1783
        %v1785 = vpop.f32.mrf.mxu0
        %1786 = vmatprep.mubr.bf16.mxu0 0
        %1787 = vmatmul.mubr.bf16.gmra.mxu0 %v1570
        %v1788 = vpop.f32.mrf.mxu0
        %v1789 = vadd.f32 0.0, %v1788
        %v1790 = vpop.f32.mrf.mxu0
        %v1791 = vpop.f32.mrf.mxu0
        %v1792 = vadd.f32 0.0, %v1791
        %v1793 = vpop.f32.mrf.mxu0
        %1794 = vmatprep.mubr.bf16.mxu0 0
        %1795 = vmatmul.mubr.bf16.gmra.mxu0 %v1571
        %v1796 = vpop.f32.mrf.mxu0
        %v1797 = vadd.f32 0.0, %v1796
        %v1798 = vpop.f32.mrf.mxu0
        %v1799 = vpop.f32.mrf.mxu0
        %v1800 = vadd.f32 0.0, %v1799
        %v1801 = vpop.f32.mrf.mxu0
        %1802 = vmatprep.mubr.bf16.mxu0 0
        %1803 = vmatmul.mubr.bf16.gmra.mxu0 %v1572
        %v1804 = vpop.f32.mrf.mxu0
        %v1805 = vadd.f32 0.0, %v1804
        %v1806 = vpop.f32.mrf.mxu0
        %v1807 = vpop.f32.mrf.mxu0
        %v1808 = vadd.f32 0.0, %v1807
        %v1809 = vpop.f32.mrf.mxu0
        %1810 = vmatprep.mubr.bf16.mxu0 0
        %1811 = vmatmul.mubr.bf16.gmra.mxu0 %v1573
        %v1812 = vpop.f32.mrf.mxu0
        %v1813 = vadd.f32 0.0, %v1812
        %v1814 = vpop.f32.mrf.mxu0
        %v1815 = vpop.f32.mrf.mxu0
        %v1816 = vadd.f32 0.0, %v1815
        %v1817 = vpop.f32.mrf.mxu0
        %1818 = vmatprep.mubr.bf16.mxu0 0
        %1819 = vmatmul.mubr.bf16.gmra.mxu0 %v1574
        %v1820 = vpop.f32.mrf.mxu0
        %v1821 = vadd.f32 0.0, %v1820
        %v1822 = vpop.f32.mrf.mxu0
        %v1823 = vpop.f32.mrf.mxu0
        %v1824 = vadd.f32 0.0, %v1823
        %v1825 = vpop.f32.mrf.mxu0
        %1826 = vmatprep.mubr.bf16.mxu0 0
        %1827 = vmatmul.mubr.bf16.gmra.mxu0 %v1575
        %v1828 = vpop.f32.mrf.mxu0
        %v1829 = vadd.f32 0.0, %v1828
        %v1830 = vpop.f32.mrf.mxu0
        %v1831 = vpop.f32.mrf.mxu0
        %v1832 = vadd.f32 0.0, %v1831
        %v1833 = vpop.f32.mrf.mxu0
        %1834 = vmatprep.mubr.bf16.mxu0 0
        %1835 = vmatmul.mubr.bf16.gmra.mxu0 %v1576
        %v1836 = vpop.f32.mrf.mxu0
        %v1837 = vadd.f32 0.0, %v1836
        %v1838 = vpop.f32.mrf.mxu0
        %v1839 = vpop.f32.mrf.mxu0
        %v1840 = vadd.f32 0.0, %v1839
        %v1841 = vpop.f32.mrf.mxu0
        %1842 = vmatprep.mubr.bf16.mxu0 0
        %1843 = vmatmul.mubr.bf16.gmra.mxu0 %v1577
        %v1844 = vpop.f32.mrf.mxu0
        %v1845 = vadd.f32 0.0, %v1844
        %v1846 = vpop.f32.mrf.mxu0
        %v1847 = vpop.f32.mrf.mxu0
        %v1848 = vadd.f32 0.0, %v1847
        %v1849 = vpop.f32.mrf.mxu0
        %1850 = vmatprep.mubr.bf16.mxu0 0
        %1851 = vmatmul.mubr.bf16.gmra.mxu0 %v1578
        %v1852 = vpop.f32.mrf.mxu0
        %v1853 = vadd.f32 0.0, %v1852
        %v1854 = vpop.f32.mrf.mxu0
        %v1855 = vpop.f32.mrf.mxu0
        %v1856 = vadd.f32 0.0, %v1855
        %v1857 = vpop.f32.mrf.mxu0
        %1858 = vmatprep.mubr.bf16.mxu0 0
        %1859 = vmatmul.mubr.bf16.gmra.mxu0 %v1579
        %v1860 = vpop.f32.mrf.mxu0
        %v1861 = vadd.f32 0.0, %v1860
        %v1862 = vpop.f32.mrf.mxu0
        %v1863 = vpop.f32.mrf.mxu0
        %v1864 = vadd.f32 0.0, %v1863
        %v1865 = vpop.f32.mrf.mxu0
        %1866 = vmatprep.mubr.bf16.mxu0 0
        %1867 = vmatmul.mubr.bf16.gmra.mxu0 %v1580
        %v1868 = vpop.f32.mrf.mxu0
        %v1869 = vadd.f32 0.0, %v1868
        %v1870 = vpop.f32.mrf.mxu0
        %v1871 = vpop.f32.mrf.mxu0
        %v1872 = vadd.f32 0.0, %v1871
        %v1873 = vpop.f32.mrf.mxu0
        %1874 = vmatprep.mubr.bf16.mxu0 0
        %1875 = vmatmul.mubr.bf16.gmra.mxu0 %v1581
        %v1876 = vpop.f32.mrf.mxu0
        %v1877 = vadd.f32 0.0, %v1876
        %v1878 = vpop.f32.mrf.mxu0
        %v1879 = vpop.f32.mrf.mxu0
        %v1880 = vadd.f32 0.0, %v1879
        %v1881 = vpop.f32.mrf.mxu0
        %1882 = vmatprep.mubr.bf16.mxu0 0
        %1883 = vmatmul.mubr.bf16.gmra.mxu0 %v1582
        %v1884 = vpop.f32.mrf.mxu0
        %v1885 = vadd.f32 0.0, %v1884
        %v1886 = vpop.f32.mrf.mxu0
        %v1887 = vpop.f32.mrf.mxu0
        %v1888 = vadd.f32 0.0, %v1887
        %v1889 = vpop.f32.mrf.mxu0
        %1890 = vmatprep.mubr.bf16.mxu0 0
        %1891 = vmatmul.mubr.bf16.gmra.mxu0 %v1583
        %v1892 = vpop.f32.mrf.mxu0
        %v1893 = vadd.f32 0.0, %v1892
        %v1894 = vpop.f32.mrf.mxu0
        %v1895 = vpop.f32.mrf.mxu0
        %v1896 = vadd.f32 0.0, %v1895
        %v1897 = vpop.f32.mrf.mxu0
        %1898 = vmatprep.mubr.bf16.mxu0 0
        %1899 = vmatmul.mubr.bf16.gmra.mxu0 %v1584
        %v1900 = vpop.f32.mrf.mxu0
        %v1901 = vadd.f32 0.0, %v1900
        %v1902 = vpop.f32.mrf.mxu0
        %v1903 = vpop.f32.mrf.mxu0
        %v1904 = vadd.f32 0.0, %v1903
        %v1905 = vpop.f32.mrf.mxu0
        %1906 = vmatprep.mubr.bf16.mxu0 0
        %1907 = vmatmul.mubr.bf16.gmra.mxu0 %v1585
        %v1908 = vpop.f32.mrf.mxu0
        %v1909 = vadd.f32 0.0, %v1908
        %v1910 = vpop.f32.mrf.mxu0
        %v1911 = vpop.f32.mrf.mxu0
        %v1912 = vadd.f32 0.0, %v1911
        %v1913 = vpop.f32.mrf.mxu0
        %1914 = vmatprep.mubr.bf16.mxu0 0
        %1915 = vmatmul.mubr.bf16.gmra.mxu0 %v1586
        %v1916 = vpop.f32.mrf.mxu0
        %v1917 = vadd.f32 0.0, %v1916
        %v1918 = vpop.f32.mrf.mxu0
        %v1919 = vpop.f32.mrf.mxu0
        %v1920 = vadd.f32 0.0, %v1919
        %v1921 = vpop.f32.mrf.mxu0
        %1922 = vmatprep.mubr.bf16.mxu0 0
        %1923 = vmatmul.mubr.bf16.gmra.mxu0 %v1587
        %v1924 = vpop.f32.mrf.mxu0
        %v1925 = vadd.f32 0.0, %v1924
        %v1926 = vpop.f32.mrf.mxu0
        %v1927 = vpop.f32.mrf.mxu0
        %v1928 = vadd.f32 0.0, %v1927
        %v1929 = vpop.f32.mrf.mxu0
        %1930 = vmatprep.mubr.bf16.mxu0 0
        %1931 = vmatmul.mubr.bf16.gmra.mxu0 %v1588
        %v1932 = vpop.f32.mrf.mxu0
        %v1933 = vadd.f32 0.0, %v1932
        %v1934 = vpop.f32.mrf.mxu0
        %v1935 = vpop.f32.mrf.mxu0
        %v1936 = vadd.f32 0.0, %v1935
        %v1937 = vpop.f32.mrf.mxu0
        %1938 = vmatprep.mubr.bf16.mxu0 0
        %1939 = vmatmul.mubr.bf16.gmra.mxu0 %v1589
        %v1940 = vpop.f32.mrf.mxu0
        %v1941 = vadd.f32 0.0, %v1940
        %v1942 = vpop.f32.mrf.mxu0
        %v1943 = vpop.f32.mrf.mxu0
        %v1944 = vadd.f32 0.0, %v1943
        %v1945 = vpop.f32.mrf.mxu0
        %1946 = vmatprep.mubr.bf16.mxu0 0
        %1947 = vmatmul.mubr.bf16.gmra.mxu0 %v1590
        %v1948 = vpop.f32.mrf.mxu0
        %v1949 = vadd.f32 0.0, %v1948
        %v1950 = vpop.f32.mrf.mxu0
        %v1951 = vpop.f32.mrf.mxu0
        %v1952 = vadd.f32 0.0, %v1951
        %v1953 = vpop.f32.mrf.mxu0
        %1954 = vmatprep.mubr.bf16.mxu0 0
        %1955 = vmatmul.mubr.bf16.gmra.mxu0 %v1591
        %v1956 = vpop.f32.mrf.mxu0
        %v1957 = vadd.f32 0.0, %v1956
        %v1958 = vpop.f32.mrf.mxu0
        %v1959 = vpop.f32.mrf.mxu0
        %v1960 = vadd.f32 0.0, %v1959
        %v1961 = vpop.f32.mrf.mxu0
        %1962 = vmatprep.mubr.bf16.mxu0 0
        %1963 = vmatmul.mubr.bf16.gmra.mxu0 %v1592
        %v1964 = vpop.f32.mrf.mxu0
        %v1965 = vadd.f32 0.0, %v1964
        %v1966 = vpop.f32.mrf.mxu0
        %v1967 = vpop.f32.mrf.mxu0
        %v1968 = vadd.f32 0.0, %v1967
        %v1969 = vpop.f32.mrf.mxu0
        %1970 = vmatprep.mubr.bf16.mxu0 0
        %1971 = vmatmul.mubr.bf16.gmra.mxu0 %v1593
        %v1972 = vpop.f32.mrf.mxu0
        %v1973 = vadd.f32 0.0, %v1972
        %v1974 = vpop.f32.mrf.mxu0
        %v1975 = vpop.f32.mrf.mxu0
        %v1976 = vadd.f32 0.0, %v1975
        %v1977 = vpop.f32.mrf.mxu0
        %1978 = vdwg.mxu0
        %v1979 = vadd.f32 %v807, %v1693
        %v1980 = vadd.f32 %v811, %v1696
        %v1981 = vadd.f32 %v817, %v1701
        %v1982 = vadd.f32 %v821, %v1704
        %v1983 = vadd.f32 %v827, %v1709
        %v1984 = vadd.f32 %v831, %v1712
        %v1985 = vadd.f32 %v837, %v1717
        %v1986 = vadd.f32 %v841, %v1720
        %v1987 = vadd.f32 %v847, %v1725
        %v1988 = vadd.f32 %v851, %v1728
        %v1989 = vadd.f32 %v857, %v1733
        %v1990 = vadd.f32 %v861, %v1736
        %v1991 = vadd.f32 %v867, %v1741
        %v1992 = vadd.f32 %v871, %v1744
        %v1993 = vadd.f32 %v877, %v1749
        %v1994 = vadd.f32 %v881, %v1752
        %v1995 = vadd.f32 %v887, %v1757
        %v1996 = vadd.f32 %v891, %v1760
        %v1997 = vadd.f32 %v897, %v1765
        %v1998 = vadd.f32 %v901, %v1768
        %v1999 = vadd.f32 %v907, %v1773
        %v2000 = vadd.f32 %v911, %v1776
        %v2001 = vadd.f32 %v917, %v1781
        %v2002 = vadd.f32 %v921, %v1784
        %v2003 = vadd.f32 %v927, %v1789
        %v2004 = vadd.f32 %v931, %v1792
        %v2005 = vadd.f32 %v937, %v1797
        %v2006 = vadd.f32 %v941, %v1800
        %v2007 = vadd.f32 %v947, %v1805
        %v2008 = vadd.f32 %v951, %v1808
        %v2009 = vadd.f32 %v957, %v1813
        %v2010 = vadd.f32 %v961, %v1816
        %v2011 = vadd.f32 %v967, %v1821
        %v2012 = vadd.f32 %v971, %v1824
        %v2013 = vadd.f32 %v977, %v1829
        %v2014 = vadd.f32 %v981, %v1832
        %v2015 = vadd.f32 %v987, %v1837
        %v2016 = vadd.f32 %v991, %v1840
        %v2017 = vadd.f32 %v997, %v1845
        %v2018 = vadd.f32 %v1001, %v1848
        %v2019 = vadd.f32 %v1007, %v1853
        %v2020 = vadd.f32 %v1011, %v1856
        %v2021 = vadd.f32 %v1017, %v1861
        %v2022 = vadd.f32 %v1021, %v1864
        %v2023 = vadd.f32 %v1027, %v1869
        %v2024 = vadd.f32 %v1031, %v1872
        %v2025 = vadd.f32 %v1037, %v1877
        %v2026 = vadd.f32 %v1041, %v1880
        %v2027 = vadd.f32 %v1047, %v1885
        %v2028 = vadd.f32 %v1051, %v1888
        %v2029 = vadd.f32 %v1057, %v1893
        %v2030 = vadd.f32 %v1061, %v1896
        %v2031 = vadd.f32 %v1067, %v1901
        %v2032 = vadd.f32 %v1071, %v1904
        %v2033 = vadd.f32 %v1077, %v1909
        %v2034 = vadd.f32 %v1081, %v1912
        %v2035 = vadd.f32 %v1087, %v1917
        %v2036 = vadd.f32 %v1091, %v1920
        %v2037 = vadd.f32 %v1097, %v1925
        %v2038 = vadd.f32 %v1101, %v1928
        %v2039 = vadd.f32 %v1107, %v1933
        %v2040 = vadd.f32 %v1111, %v1936
        %v2041 = vadd.f32 %v1117, %v1941
        %v2042 = vadd.f32 %v1121, %v1944
        %v2043 = vadd.f32 %v1127, %v1949
        %v2044 = vadd.f32 %v1131, %v1952
        %v2045 = vadd.f32 %v1137, %v1957
        %v2046 = vadd.f32 %v1141, %v1960
        %v2047 = vadd.f32 %v1147, %v1965
        %v2048 = vadd.f32 %v1151, %v1968
        %v2049 = vadd.f32 %v1157, %v1973
        %v2050 = vadd.f32 %v1161, %v1976
        %v2051 = vld [vmem:[%s6] sm:$0x1]
        %v2052 = vlaneseq
        %v2053 = vshrl.u32 %v2052, 7
        %v2054 = vsub.s32 0, %v2053
        %v2055 = vrot.slane %v2051, %v2054
        %v2056 = vadd.f32 %v1979, %v2055
        %v2057 = vadd.f32 %v1980, %v2055
        %v2058 = vadd.f32 %v1981, %v2055
        %v2059 = vadd.f32 %v1982, %v2055
        %v2060 = vadd.f32 %v1983, %v2055
        %v2061 = vadd.f32 %v1984, %v2055
        %v2062 = vadd.f32 %v1985, %v2055
        %v2063 = vadd.f32 %v1986, %v2055
        %v2064 = vadd.f32 %v1987, %v2055
        %v2065 = vadd.f32 %v1988, %v2055
        %v2066 = vadd.f32 %v1989, %v2055
        %v2067 = vadd.f32 %v1990, %v2055
        %v2068 = vadd.f32 %v1991, %v2055
        %v2069 = vadd.f32 %v1992, %v2055
        %v2070 = vadd.f32 %v1993, %v2055
        %v2071 = vadd.f32 %v1994, %v2055
        %v2072 = vadd.f32 %v1995, %v2055
        %v2073 = vadd.f32 %v1996, %v2055
        %v2074 = vadd.f32 %v1997, %v2055
        %v2075 = vadd.f32 %v1998, %v2055
        %v2076 = vadd.f32 %v1999, %v2055
        %v2077 = vadd.f32 %v2000, %v2055
        %v2078 = vadd.f32 %v2001, %v2055
        %v2079 = vadd.f32 %v2002, %v2055
        %v2080 = vadd.f32 %v2003, %v2055
        %v2081 = vadd.f32 %v2004, %v2055
        %v2082 = vadd.f32 %v2005, %v2055
        %v2083 = vadd.f32 %v2006, %v2055
        %v2084 = vadd.f32 %v2007, %v2055
        %v2085 = vadd.f32 %v2008, %v2055
        %v2086 = vadd.f32 %v2009, %v2055
        %v2087 = vadd.f32 %v2010, %v2055
        %v2088 = vadd.f32 %v2011, %v2055
        %v2089 = vadd.f32 %v2012, %v2055
        %v2090 = vadd.f32 %v2013, %v2055
        %v2091 = vadd.f32 %v2014, %v2055
        %v2092 = vadd.f32 %v2015, %v2055
        %v2093 = vadd.f32 %v2016, %v2055
        %v2094 = vadd.f32 %v2017, %v2055
        %v2095 = vadd.f32 %v2018, %v2055
        %v2096 = vadd.f32 %v2019, %v2055
        %v2097 = vadd.f32 %v2020, %v2055
        %v2098 = vadd.f32 %v2021, %v2055
        %v2099 = vadd.f32 %v2022, %v2055
        %v2100 = vadd.f32 %v2023, %v2055
        %v2101 = vadd.f32 %v2024, %v2055
        %v2102 = vadd.f32 %v2025, %v2055
        %v2103 = vadd.f32 %v2026, %v2055
        %v2104 = vadd.f32 %v2027, %v2055
        %v2105 = vadd.f32 %v2028, %v2055
        %v2106 = vadd.f32 %v2029, %v2055
        %v2107 = vadd.f32 %v2030, %v2055
        %v2108 = vadd.f32 %v2031, %v2055
        %v2109 = vadd.f32 %v2032, %v2055
        %v2110 = vadd.f32 %v2033, %v2055
        %v2111 = vadd.f32 %v2034, %v2055
        %v2112 = vadd.f32 %v2035, %v2055
        %v2113 = vadd.f32 %v2036, %v2055
        %v2114 = vadd.f32 %v2037, %v2055
        %v2115 = vadd.f32 %v2038, %v2055
        %v2116 = vadd.f32 %v2039, %v2055
        %v2117 = vadd.f32 %v2040, %v2055
        %v2118 = vadd.f32 %v2041, %v2055
        %v2119 = vadd.f32 %v2042, %v2055
        %v2120 = vadd.f32 %v2043, %v2055
        %v2121 = vadd.f32 %v2044, %v2055
        %v2122 = vadd.f32 %v2045, %v2055
        %v2123 = vadd.f32 %v2046, %v2055
        %v2124 = vadd.f32 %v2047, %v2055
        %v2125 = vadd.f32 %v2048, %v2055
        %v2126 = vadd.f32 %v2049, %v2055
        %v2127 = vadd.f32 %v2050, %v2055
        %v2128 = vmax.f32 %v2056, 0.0
        %v2129 = vmax.f32 %v2057, 0.0
        %v2130 = vmax.f32 %v2058, 0.0
        %v2131 = vmax.f32 %v2059, 0.0
        %v2132 = vmax.f32 %v2060, 0.0
        %v2133 = vmax.f32 %v2061, 0.0
        %v2134 = vmax.f32 %v2062, 0.0
        %v2135 = vmax.f32 %v2063, 0.0
        %v2136 = vmax.f32 %v2064, 0.0
        %v2137 = vmax.f32 %v2065, 0.0
        %v2138 = vmax.f32 %v2066, 0.0
        %v2139 = vmax.f32 %v2067, 0.0
        %v2140 = vmax.f32 %v2068, 0.0
        %v2141 = vmax.f32 %v2069, 0.0
        %v2142 = vmax.f32 %v2070, 0.0
        %v2143 = vmax.f32 %v2071, 0.0
        %v2144 = vmax.f32 %v2072, 0.0
        %v2145 = vmax.f32 %v2073, 0.0
        %v2146 = vmax.f32 %v2074, 0.0
        %v2147 = vmax.f32 %v2075, 0.0
        %v2148 = vmax.f32 %v2076, 0.0
        %v2149 = vmax.f32 %v2077, 0.0
        %v2150 = vmax.f32 %v2078, 0.0
        %v2151 = vmax.f32 %v2079, 0.0
        %v2152 = vmax.f32 %v2080, 0.0
        %v2153 = vmax.f32 %v2081, 0.0
        %v2154 = vmax.f32 %v2082, 0.0
        %v2155 = vmax.f32 %v2083, 0.0
        %v2156 = vmax.f32 %v2084, 0.0
        %v2157 = vmax.f32 %v2085, 0.0
        %v2158 = vmax.f32 %v2086, 0.0
        %v2159 = vmax.f32 %v2087, 0.0
        %v2160 = vmax.f32 %v2088, 0.0
        %v2161 = vmax.f32 %v2089, 0.0
        %v2162 = vmax.f32 %v2090, 0.0
        %v2163 = vmax.f32 %v2091, 0.0
        %v2164 = vmax.f32 %v2092, 0.0
        %v2165 = vmax.f32 %v2093, 0.0
        %v2166 = vmax.f32 %v2094, 0.0
        %v2167 = vmax.f32 %v2095, 0.0
        %v2168 = vmax.f32 %v2096, 0.0
        %v2169 = vmax.f32 %v2097, 0.0
        %v2170 = vmax.f32 %v2098, 0.0
        %v2171 = vmax.f32 %v2099, 0.0
        %v2172 = vmax.f32 %v2100, 0.0
        %v2173 = vmax.f32 %v2101, 0.0
        %v2174 = vmax.f32 %v2102, 0.0
        %v2175 = vmax.f32 %v2103, 0.0
        %v2176 = vmax.f32 %v2104, 0.0
        %v2177 = vmax.f32 %v2105, 0.0
        %v2178 = vmax.f32 %v2106, 0.0
        %v2179 = vmax.f32 %v2107, 0.0
        %v2180 = vmax.f32 %v2108, 0.0
        %v2181 = vmax.f32 %v2109, 0.0
        %v2182 = vmax.f32 %v2110, 0.0
        %v2183 = vmax.f32 %v2111, 0.0
        %v2184 = vmax.f32 %v2112, 0.0
        %v2185 = vmax.f32 %v2113, 0.0
        %v2186 = vmax.f32 %v2114, 0.0
        %v2187 = vmax.f32 %v2115, 0.0
        %v2188 = vmax.f32 %v2116, 0.0
        %v2189 = vmax.f32 %v2117, 0.0
        %v2190 = vmax.f32 %v2118, 0.0
        %v2191 = vmax.f32 %v2119, 0.0
        %v2192 = vmax.f32 %v2120, 0.0
        %v2193 = vmax.f32 %v2121, 0.0
        %v2194 = vmax.f32 %v2122, 0.0
        %v2195 = vmax.f32 %v2123, 0.0
        %v2196 = vmax.f32 %v2124, 0.0
        %v2197 = vmax.f32 %v2125, 0.0
        %v2198 = vmax.f32 %v2126, 0.0
        %v2199 = vmax.f32 %v2127, 0.0
        %v2200 = vadd.f32 %v2128, %v2129
        %v2201 = vadd.f32 %v2200, %v2130
        %v2202 = vadd.f32 %v2201, %v2131
        %v2203 = vadd.f32 %v2202, %v2132
        %v2204 = vadd.f32 %v2203, %v2133
        %v2205 = vadd.f32 %v2204, %v2134
        %v2206 = vadd.f32 %v2205, %v2135
        %v2207 = vadd.f32 %v2206, %v2136
        %v2208 = vadd.f32 %v2207, %v2137
        %v2209 = vadd.f32 %v2208, %v2138
        %v2210 = vadd.f32 %v2209, %v2139
        %v2211 = vadd.f32 %v2210, %v2140
        %v2212 = vadd.f32 %v2211, %v2141
        %v2213 = vadd.f32 %v2212, %v2142
        %v2214 = vadd.f32 %v2213, %v2143
        %v2215 = vadd.f32 %v2214, %v2144
        %v2216 = vadd.f32 %v2215, %v2145
        %v2217 = vadd.f32 %v2216, %v2146
        %v2218 = vadd.f32 %v2217, %v2147
        %v2219 = vadd.f32 %v2218, %v2148
        %v2220 = vadd.f32 %v2219, %v2149
        %v2221 = vadd.f32 %v2220, %v2150
        %v2222 = vadd.f32 %v2221, %v2151
        %v2223 = vadd.f32 %v2222, %v2152
        %v2224 = vadd.f32 %v2223, %v2153
        %v2225 = vadd.f32 %v2224, %v2154
        %v2226 = vadd.f32 %v2225, %v2155
        %v2227 = vadd.f32 %v2226, %v2156
        %v2228 = vadd.f32 %v2227, %v2157
        %v2229 = vadd.f32 %v2228, %v2158
        %v2230 = vadd.f32 %v2229, %v2159
        %v2231 = vadd.f32 %v2230, %v2160
        %v2232 = vadd.f32 %v2231, %v2161
        %v2233 = vadd.f32 %v2232, %v2162
        %v2234 = vadd.f32 %v2233, %v2163
        %v2235 = vadd.f32 %v2234, %v2164
        %v2236 = vadd.f32 %v2235, %v2165
        %v2237 = vadd.f32 %v2236, %v2166
        %v2238 = vadd.f32 %v2237, %v2167
        %v2239 = vadd.f32 %v2238, %v2168
        %v2240 = vadd.f32 %v2239, %v2169
        %v2241 = vadd.f32 %v2240, %v2170
        %v2242 = vadd.f32 %v2241, %v2171
        %v2243 = vadd.f32 %v2242, %v2172
        %v2244 = vadd.f32 %v2243, %v2173
        %v2245 = vadd.f32 %v2244, %v2174
        %v2246 = vadd.f32 %v2245, %v2175
        %v2247 = vadd.f32 %v2246, %v2176
        %v2248 = vadd.f32 %v2247, %v2177
        %v2249 = vadd.f32 %v2248, %v2178
        %v2250 = vadd.f32 %v2249, %v2179
        %v2251 = vadd.f32 %v2250, %v2180
        %v2252 = vadd.f32 %v2251, %v2181
        %v2253 = vadd.f32 %v2252, %v2182
        %v2254 = vadd.f32 %v2253, %v2183
        %v2255 = vadd.f32 %v2254, %v2184
        %v2256 = vadd.f32 %v2255, %v2185
        %v2257 = vadd.f32 %v2256, %v2186
        %v2258 = vadd.f32 %v2257, %v2187
        %v2259 = vadd.f32 %v2258, %v2188
        %v2260 = vadd.f32 %v2259, %v2189
        %v2261 = vadd.f32 %v2260, %v2190
        %v2262 = vadd.f32 %v2261, %v2191
        %v2263 = vadd.f32 %v2262, %v2192
        %v2264 = vadd.f32 %v2263, %v2193
        %v2265 = vadd.f32 %v2264, %v2194
        %v2266 = vadd.f32 %v2265, %v2195
        %v2267 = vadd.f32 %v2266, %v2196
        %v2268 = vadd.f32 %v2267, %v2197
        %v2269 = vadd.f32 %v2268, %v2198
        %v2270 = vadd.f32 %v2269, %v2199
        %v2271 = vrot.slane %v2270, 4
        %v2272 = vadd.f32 %v2270, %v2271
        %v2273 = vrot.slane %v2272, 2
        %v2274 = vadd.f32 %v2272, %v2273
        %v2275 = vrot.slane %v2274, 1
        %v2276 = vadd.f32 %v2274, %v2275
        %v2277 = vmul.f32 %v2276, 0.0017361111
        %v2278 = vld [vmem:[%s7] sm:$0xff]
        %v2279 = vld [vmem:[%s7 + $0x8] sm:$0xff]
        %v2280 = vld [vmem:[%s7 + $0x10] sm:$0xff]
        %v2281 = vld [vmem:[%s7 + $0x18] sm:$0xff]
        %v2282 = vld [vmem:[%s7 + $0x20] sm:$0xff]
        %v2283 = vld [vmem:[%s7 + $0x28] sm:$0xff]
        %v2284 = vld [vmem:[%s7 + $0x30] sm:$0xff]
        %v2285 = vld [vmem:[%s7 + $0x38] sm:$0xff]
        %v2286 = vld [vmem:[%s7 + $0x40] sm:$0xff]
        %v2287 = vld [vmem:[%s7 + $0x48] sm:$0xff]
        %v2288 = vld [vmem:[%s7 + $0x50] sm:$0xff]
        %v2289 = vld [vmem:[%s7 + $0x58] sm:$0xff]
        %v2290 = vld [vmem:[%s7 + $0x60] sm:$0xff]
        %v2291 = vld [vmem:[%s7 + $0x68] sm:$0xff]
        %v2292 = vld [vmem:[%s7 + $0x70] sm:$0xff]
        %v2293 = vld [vmem:[%s7 + $0x78] sm:$0xff]
        %2294 = vmatprep.subr.mxu0 0.0
        %2295 = vmatpush1.msra.mxu0 %v2293
        %2296 = vmatprep.subr.mxu0 0.0
        %2297 = vmatpush1.msra.mxu0 %v2292
        %2298 = vmatprep.subr.mxu0 0.0
        %2299 = vmatpush1.msra.mxu0 %v2291
        %2300 = vmatprep.subr.mxu0 0.0
        %2301 = vmatpush1.msra.mxu0 %v2290
        %2302 = vmatprep.subr.mxu0 0.0
        %2303 = vmatpush1.msra.mxu0 %v2289
        %2304 = vmatprep.subr.mxu0 0.0
        %2305 = vmatpush1.msra.mxu0 %v2288
        %2306 = vmatprep.subr.mxu0 0.0
        %2307 = vmatpush1.msra.mxu0 %v2287
        %2308 = vmatprep.subr.mxu0 0.0
        %2309 = vmatpush1.msra.mxu0 %v2286
        %2310 = vmatprep.subr.mxu0 0.0
        %2311 = vmatpush1.msra.mxu0 %v2285
        %2312 = vmatprep.subr.mxu0 0.0
        %2313 = vmatpush1.msra.mxu0 %v2284
        %2314 = vmatprep.subr.mxu0 0.0
        %2315 = vmatpush1.msra.mxu0 %v2283
        %2316 = vmatprep.subr.mxu0 0.0
        %2317 = vmatpush1.msra.mxu0 %v2282
        %2318 = vmatprep.subr.mxu0 0.0
        %2319 = vmatpush1.msra.mxu0 %v2281
        %2320 = vmatprep.subr.mxu0 0.0
        %2321 = vmatpush1.msra.mxu0 %v2280
        %2322 = vmatprep.subr.mxu0 0.0
        %2323 = vmatpush1.msra.mxu0 %v2279
        %2324 = vmatprep.subr.mxu0 0.0
        %2325 = vmatpush1.msra.mxu0 %v2278
        %2326 = vmatprep.subr.mxu0 0.0
        %2327 = vmatpush2.msra.mxu0 0.0
        %2328 = vmatprep.subr.mxu0 0.0
        %2329 = vmatpush2.msra.mxu0 0.0
        %2330 = vmatprep.subr.mxu0 0.0
        %2331 = vmatpush2.msra.mxu0 0.0
        %2332 = vmatprep.subr.mxu0 0.0
        %2333 = vmatpush2.msra.mxu0 0.0
        %2334 = vmatprep.subr.mxu0 0.0
        %2335 = vmatpush2.msra.mxu0 0.0
        %2336 = vmatprep.subr.mxu0 0.0
        %2337 = vmatpush2.msra.mxu0 0.0
        %2338 = vmatprep.subr.mxu0 0.0
        %2339 = vmatpush2.msra.mxu0 0.0
        %2340 = vmatprep.subr.mxu0 0.0
        %2341 = vmatpush2.msra.mxu0 0.0
        %2342 = vmatprep.subr.mxu0 0.0
        %2343 = vmatpush2.msra.mxu0 0.0
        %2344 = vmatprep.subr.mxu0 0.0
        %2345 = vmatpush2.msra.mxu0 0.0
        %2346 = vmatprep.subr.mxu0 0.0
        %2347 = vmatpush2.msra.mxu0 0.0
        %2348 = vmatprep.subr.mxu0 0.0
        %2349 = vmatpush2.msra.mxu0 0.0
        %2350 = vmatprep.subr.mxu0 0.0
        %2351 = vmatpush2.msra.mxu0 0.0
        %2352 = vmatprep.subr.mxu0 0.0
        %2353 = vmatpush2.msra.mxu0 0.0
        %2354 = vmatprep.subr.mxu0 0.0
        %2355 = vmatpush2.msra.mxu0 0.0
        %2356 = vmatprep.subr.mxu0 0.0
        %2357 = vmatpush2.msra.mxu0 0.0
        %2358 = vmatprep.mubr.f32.mxu0 0.0
        %2359 = vmatmul.mubr.f32.gmra.mxu0 %v2277
        %v2360 = vpop.f32.mrf.mxu0
        %v2361 = vadd.f32 0.0, %v2360
        %v2362 = vpop.f32.mrf.mxu0
        %2363 = vdwg.mxu0
        %v2364 = vmax.f32 %v2361, 0.0
        %v2365 = vld [vmem:[%s8] sm:$0xff]
        %v2366 = vld [vmem:[%s8 + $0x8] sm:$0xff]
        %v2367 = vld [vmem:[%s8 + $0x10] sm:$0xff]
        %v2368 = vld [vmem:[%s8 + $0x18] sm:$0xff]
        %vm2369 = vcmask 261120
        %v2371 = vsel %vm2369, %v2364, 0
        %2373 = vmatprep.subr.mxu0 0.0
        %2374 = vmatpush1.msra.mxu0 0.0
        %2375 = vmatprep.subr.mxu0 0.0
        %2376 = vmatpush1.msra.mxu0 0.0
        %2377 = vmatprep.subr.mxu0 0.0
        %2378 = vmatpush1.msra.mxu0 0.0
        %2379 = vmatprep.subr.mxu0 0.0
        %2380 = vmatpush1.msra.mxu0 0.0
        %2381 = vmatprep.subr.mxu0 0.0
        %2382 = vmatpush1.msra.mxu0 0.0
        %2383 = vmatprep.subr.mxu0 0.0
        %2384 = vmatpush1.msra.mxu0 0.0
        %2385 = vmatprep.subr.mxu0 0.0
        %2386 = vmatpush1.msra.mxu0 0.0
        %2387 = vmatprep.subr.mxu0 0.0
        %2388 = vmatpush1.msra.mxu0 0.0
        %2389 = vmatprep.subr.mxu0 0.0
        %2390 = vmatpush1.msra.mxu0 0.0
        %2391 = vmatprep.subr.mxu0 0.0
        %2392 = vmatpush1.msra.mxu0 0.0
        %2393 = vmatprep.subr.mxu0 0.0
        %2394 = vmatpush1.msra.mxu0 0.0
        %2395 = vmatprep.subr.mxu0 0.0
        %2396 = vmatpush1.msra.mxu0 0.0
        %2397 = vmatprep.subr.mxu0 0.0
        %2398 = vmatpush1.msra.mxu0 %v2368
        %2399 = vmatprep.subr.mxu0 0.0
        %2400 = vmatpush1.msra.mxu0 %v2367
        %2401 = vmatprep.subr.mxu0 0.0
        %2402 = vmatpush1.msra.mxu0 %v2366
        %2403 = vmatprep.subr.mxu0 0.0
        %2404 = vmatpush1.msra.mxu0 %v2365
        %2405 = vmatprep.subr.mxu0 0.0
        %2406 = vmatpush2.msra.mxu0 0.0
        %2407 = vmatprep.subr.mxu0 0.0
        %2408 = vmatpush2.msra.mxu0 0.0
        %2409 = vmatprep.subr.mxu0 0.0
        %2410 = vmatpush2.msra.mxu0 0.0
        %2411 = vmatprep.subr.mxu0 0.0
        %2412 = vmatpush2.msra.mxu0 0.0
        %2413 = vmatprep.subr.mxu0 0.0
        %2414 = vmatpush2.msra.mxu0 0.0
        %2415 = vmatprep.subr.mxu0 0.0
        %2416 = vmatpush2.msra.mxu0 0.0
        %2417 = vmatprep.subr.mxu0 0.0
        %2418 = vmatpush2.msra.mxu0 0.0
        %2419 = vmatprep.subr.mxu0 0.0
        %2420 = vmatpush2.msra.mxu0 0.0
        %2421 = vmatprep.subr.mxu0 0.0
        %2422 = vmatpush2.msra.mxu0 0.0
        %2423 = vmatprep.subr.mxu0 0.0
        %2424 = vmatpush2.msra.mxu0 0.0
        %2425 = vmatprep.subr.mxu0 0.0
        %2426 = vmatpush2.msra.mxu0 0.0
        %2427 = vmatprep.subr.mxu0 0.0
        %2428 = vmatpush2.msra.mxu0 0.0
        %2429 = vmatprep.subr.mxu0 0.0
        %2430 = vmatpush2.msra.mxu0 0.0
        %2431 = vmatprep.subr.mxu0 0.0
        %2432 = vmatpush2.msra.mxu0 0.0
        %2433 = vmatprep.subr.mxu0 0.0
        %2434 = vmatpush2.msra.mxu0 0.0
        %2435 = vmatprep.subr.mxu0 0.0
        %2436 = vmatpush2.msra.mxu0 0.0
        %2437 = vmatprep.mubr.f32.mxu0 0.0
        %2438 = vmatmul.mubr.f32.gmra.mxu0 %v2371
        %v2439 = vpop.f32.mrf.mxu0
        %v2440 = vadd.f32 0.0, %v2439
        %v2441 = vpop.f32.mrf.mxu0
        %2442 = vdwg.mxu0
        %v2443 = vxor.u32 %v2440, 2147483648
        %v2444 = vmul.f32 %v2443, 1.442695
        %v2445 = vpow.pop %v2444
        %v2446 = vadd.f32 %v2445, 1.0
        %v2447 = vrcp.pop %v2446
        %v2448 = vmul.f32 1.0, %v2447
        %v2449 = vadd.f32 %v2448, 1.0
        %v2450 = vlaneseq
        %v2451 = vshrl.u32 %v2450, 7
        %v2452 = vsub.s32 0, %v2451
        %v2453 = vrot.slane %v2449, %v2452
        %v2454 = vmul.f32 %v2128, %v2453
        %v2455 = vmul.f32 %v2129, %v2453
        %v2456 = vmul.f32 %v2130, %v2453
        %v2457 = vmul.f32 %v2131, %v2453
        %v2458 = vmul.f32 %v2132, %v2453
        %v2459 = vmul.f32 %v2133, %v2453
        %v2460 = vmul.f32 %v2134, %v2453
        %v2461 = vmul.f32 %v2135, %v2453
        %v2462 = vmul.f32 %v2136, %v2453
        %v2463 = vmul.f32 %v2137, %v2453
        %v2464 = vmul.f32 %v2138, %v2453
        %v2465 = vmul.f32 %v2139, %v2453
        %v2466 = vmul.f32 %v2140, %v2453
        %v2467 = vmul.f32 %v2141, %v2453
        %v2468 = vmul.f32 %v2142, %v2453
        %v2469 = vmul.f32 %v2143, %v2453
        %v2470 = vmul.f32 %v2144, %v2453
        %v2471 = vmul.f32 %v2145, %v2453
        %v2472 = vmul.f32 %v2146, %v2453
        %v2473 = vmul.f32 %v2147, %v2453
        %v2474 = vmul.f32 %v2148, %v2453
        %v2475 = vmul.f32 %v2149, %v2453
        %v2476 = vmul.f32 %v2150, %v2453
        %v2477 = vmul.f32 %v2151, %v2453
        %v2478 = vmul.f32 %v2152, %v2453
        %v2479 = vmul.f32 %v2153, %v2453
        %v2480 = vmul.f32 %v2154, %v2453
        %v2481 = vmul.f32 %v2155, %v2453
        %v2482 = vmul.f32 %v2156, %v2453
        %v2483 = vmul.f32 %v2157, %v2453
        %v2484 = vmul.f32 %v2158, %v2453
        %v2485 = vmul.f32 %v2159, %v2453
        %v2486 = vmul.f32 %v2160, %v2453
        %v2487 = vmul.f32 %v2161, %v2453
        %v2488 = vmul.f32 %v2162, %v2453
        %v2489 = vmul.f32 %v2163, %v2453
        %v2490 = vmul.f32 %v2164, %v2453
        %v2491 = vmul.f32 %v2165, %v2453
        %v2492 = vmul.f32 %v2166, %v2453
        %v2493 = vmul.f32 %v2167, %v2453
        %v2494 = vmul.f32 %v2168, %v2453
        %v2495 = vmul.f32 %v2169, %v2453
        %v2496 = vmul.f32 %v2170, %v2453
        %v2497 = vmul.f32 %v2171, %v2453
        %v2498 = vmul.f32 %v2172, %v2453
        %v2499 = vmul.f32 %v2173, %v2453
        %v2500 = vmul.f32 %v2174, %v2453
        %v2501 = vmul.f32 %v2175, %v2453
        %v2502 = vmul.f32 %v2176, %v2453
        %v2503 = vmul.f32 %v2177, %v2453
        %v2504 = vmul.f32 %v2178, %v2453
        %v2505 = vmul.f32 %v2179, %v2453
        %v2506 = vmul.f32 %v2180, %v2453
        %v2507 = vmul.f32 %v2181, %v2453
        %v2508 = vmul.f32 %v2182, %v2453
        %v2509 = vmul.f32 %v2183, %v2453
        %v2510 = vmul.f32 %v2184, %v2453
        %v2511 = vmul.f32 %v2185, %v2453
        %v2512 = vmul.f32 %v2186, %v2453
        %v2513 = vmul.f32 %v2187, %v2453
        %v2514 = vmul.f32 %v2188, %v2453
        %v2515 = vmul.f32 %v2189, %v2453
        %v2516 = vmul.f32 %v2190, %v2453
        %v2517 = vmul.f32 %v2191, %v2453
        %v2518 = vmul.f32 %v2192, %v2453
        %v2519 = vmul.f32 %v2193, %v2453
        %v2520 = vmul.f32 %v2194, %v2453
        %v2521 = vmul.f32 %v2195, %v2453
        %v2522 = vmul.f32 %v2196, %v2453
        %v2523 = vmul.f32 %v2197, %v2453
        %v2524 = vmul.f32 %v2198, %v2453
        %v2525 = vmul.f32 %v2199, %v2453
        %2526 = vst [vmem:[%s478] sm:$0xff] %v2454
        %2527 = vst [vmem:[%s478 + $0x8] sm:$0xff] %v2455
        %2528 = vst [vmem:[%s478 + $0x10] sm:$0xff] %v2456
        %2529 = vst [vmem:[%s478 + $0x18] sm:$0xff] %v2457
        %2530 = vst [vmem:[%s478 + $0x20] sm:$0xff] %v2458
        %2531 = vst [vmem:[%s478 + $0x28] sm:$0xff] %v2459
        %2532 = vst [vmem:[%s478 + $0x30] sm:$0xff] %v2460
        %2533 = vst [vmem:[%s478 + $0x38] sm:$0xff] %v2461
        %2534 = vst [vmem:[%s478 + $0x40] sm:$0xff] %v2462
        %2535 = vst [vmem:[%s478 + $0x48] sm:$0xff] %v2463
        %2536 = vst [vmem:[%s478 + $0x50] sm:$0xff] %v2464
        %2537 = vst [vmem:[%s478 + $0x58] sm:$0xff] %v2465
        %2538 = vst [vmem:[%s478 + $0x60] sm:$0xff] %v2466
        %2539 = vst [vmem:[%s478 + $0x68] sm:$0xff] %v2467
        %2540 = vst [vmem:[%s478 + $0x70] sm:$0xff] %v2468
        %2541 = vst [vmem:[%s478 + $0x78] sm:$0xff] %v2469
        %2542 = vst [vmem:[%s478 + $0x80] sm:$0xff] %v2470
        %2543 = vst [vmem:[%s478 + $0x88] sm:$0xff] %v2471
        %2544 = vst [vmem:[%s478 + $0x90] sm:$0xff] %v2472
        %2545 = vst [vmem:[%s478 + $0x98] sm:$0xff] %v2473
        %2546 = vst [vmem:[%s478 + $0xa0] sm:$0xff] %v2474
        %2547 = vst [vmem:[%s478 + $0xa8] sm:$0xff] %v2475
        %2548 = vst [vmem:[%s478 + $0xb0] sm:$0xff] %v2476
        %2549 = vst [vmem:[%s478 + $0xb8] sm:$0xff] %v2477
        %2550 = vst [vmem:[%s478 + $0xc0] sm:$0xff] %v2478
        %2551 = vst [vmem:[%s478 + $0xc8] sm:$0xff] %v2479
        %2552 = vst [vmem:[%s478 + $0xd0] sm:$0xff] %v2480
        %2553 = vst [vmem:[%s478 + $0xd8] sm:$0xff] %v2481
        %2554 = vst [vmem:[%s478 + $0xe0] sm:$0xff] %v2482
        %2555 = vst [vmem:[%s478 + $0xe8] sm:$0xff] %v2483
        %2556 = vst [vmem:[%s478 + $0xf0] sm:$0xff] %v2484
        %2557 = vst [vmem:[%s478 + $0xf8] sm:$0xff] %v2485
        %2558 = vst [vmem:[%s478 + $0x100] sm:$0xff] %v2486
        %2559 = vst [vmem:[%s478 + $0x108] sm:$0xff] %v2487
        %2560 = vst [vmem:[%s478 + $0x110] sm:$0xff] %v2488
        %2561 = vst [vmem:[%s478 + $0x118] sm:$0xff] %v2489
        %2562 = vst [vmem:[%s478 + $0x120] sm:$0xff] %v2490
        %2563 = vst [vmem:[%s478 + $0x128] sm:$0xff] %v2491
        %2564 = vst [vmem:[%s478 + $0x130] sm:$0xff] %v2492
        %2565 = vst [vmem:[%s478 + $0x138] sm:$0xff] %v2493
        %2566 = vst [vmem:[%s478 + $0x140] sm:$0xff] %v2494
        %2567 = vst [vmem:[%s478 + $0x148] sm:$0xff] %v2495
        %2568 = vst [vmem:[%s478 + $0x150] sm:$0xff] %v2496
        %2569 = vst [vmem:[%s478 + $0x158] sm:$0xff] %v2497
        %2570 = vst [vmem:[%s478 + $0x160] sm:$0xff] %v2498
        %2571 = vst [vmem:[%s478 + $0x168] sm:$0xff] %v2499
        %2572 = vst [vmem:[%s478 + $0x170] sm:$0xff] %v2500
        %2573 = vst [vmem:[%s478 + $0x178] sm:$0xff] %v2501
        %2574 = vst [vmem:[%s478 + $0x180] sm:$0xff] %v2502
        %2575 = vst [vmem:[%s478 + $0x188] sm:$0xff] %v2503
        %2576 = vst [vmem:[%s478 + $0x190] sm:$0xff] %v2504
        %2577 = vst [vmem:[%s478 + $0x198] sm:$0xff] %v2505
        %2578 = vst [vmem:[%s478 + $0x1a0] sm:$0xff] %v2506
        %2579 = vst [vmem:[%s478 + $0x1a8] sm:$0xff] %v2507
        %2580 = vst [vmem:[%s478 + $0x1b0] sm:$0xff] %v2508
        %2581 = vst [vmem:[%s478 + $0x1b8] sm:$0xff] %v2509
        %2582 = vst [vmem:[%s478 + $0x1c0] sm:$0xff] %v2510
        %2583 = vst [vmem:[%s478 + $0x1c8] sm:$0xff] %v2511
        %2584 = vst [vmem:[%s478 + $0x1d0] sm:$0xff] %v2512
        %2585 = vst [vmem:[%s478 + $0x1d8] sm:$0xff] %v2513
        %2586 = vst [vmem:[%s478 + $0x1e0] sm:$0xff] %v2514
        %2587 = vst [vmem:[%s478 + $0x1e8] sm:$0xff] %v2515
        %2588 = vst [vmem:[%s478 + $0x1f0] sm:$0xff] %v2516
        %2589 = vst [vmem:[%s478 + $0x1f8] sm:$0xff] %v2517
        %2590 = vst [vmem:[%s478 + $0x200] sm:$0xff] %v2518
        %2591 = vst [vmem:[%s478 + $0x208] sm:$0xff] %v2519
        %2592 = vst [vmem:[%s478 + $0x210] sm:$0xff] %v2520
        %2593 = vst [vmem:[%s478 + $0x218] sm:$0xff] %v2521
        %2594 = vst [vmem:[%s478 + $0x220] sm:$0xff] %v2522
        %2595 = vst [vmem:[%s478 + $0x228] sm:$0xff] %v2523
        %2596 = vst [vmem:[%s478 + $0x230] sm:$0xff] %v2524
        %2597 = vst [vmem:[%s478 + $0x238] sm:$0xff] %v2525
        %v2598 = vld [vmem:[%s420] sm:$0xff]
        %v2599 = vld [vmem:[%s420 + $0x8] sm:$0xff]
        %v2600 = vld [vmem:[%s420 + $0x10] sm:$0xff]
        %v2601 = vld [vmem:[%s420 + $0x18] sm:$0xff]
        %v2602 = vld [vmem:[%s420 + $0x20] sm:$0xff]
        %v2603 = vld [vmem:[%s420 + $0x28] sm:$0xff]
        %v2604 = vld [vmem:[%s420 + $0x30] sm:$0xff]
        %v2605 = vld [vmem:[%s420 + $0x38] sm:$0xff]
        %v2606 = vld [vmem:[%s420 + $0x40] sm:$0xff]
        %v2607 = vld [vmem:[%s420 + $0x48] sm:$0xff]
        %v2608 = vld [vmem:[%s420 + $0x50] sm:$0xff]
        %v2609 = vld [vmem:[%s420 + $0x58] sm:$0xff]
        %v2610 = vld [vmem:[%s420 + $0x60] sm:$0xff]
        %v2611 = vld [vmem:[%s420 + $0x68] sm:$0xff]
        %v2612 = vld [vmem:[%s420 + $0x70] sm:$0xff]
        %v2613 = vld [vmem:[%s420 + $0x78] sm:$0xff]
        %v2614 = vld [vmem:[%s420 + $0x80] sm:$0xff]
        %v2615 = vld [vmem:[%s420 + $0x88] sm:$0xff]
        %v2616 = vld [vmem:[%s420 + $0x90] sm:$0xff]
        %v2617 = vld [vmem:[%s420 + $0x98] sm:$0xff]
        %v2618 = vld [vmem:[%s420 + $0xa0] sm:$0xff]
        %v2619 = vld [vmem:[%s420 + $0xa8] sm:$0xff]
        %v2620 = vld [vmem:[%s420 + $0xb0] sm:$0xff]
        %v2621 = vld [vmem:[%s420 + $0xb8] sm:$0xff]
        %v2622 = vld [vmem:[%s420 + $0xc0] sm:$0xff]
        %v2623 = vld [vmem:[%s420 + $0xc8] sm:$0xff]
        %v2624 = vld [vmem:[%s420 + $0xd0] sm:$0xff]
        %v2625 = vld [vmem:[%s420 + $0xd8] sm:$0xff]
        %v2626 = vld [vmem:[%s420 + $0xe0] sm:$0xff]
        %v2627 = vld [vmem:[%s420 + $0xe8] sm:$0xff]
        %v2628 = vld [vmem:[%s420 + $0xf0] sm:$0xff]
        %v2629 = vld [vmem:[%s420 + $0xf8] sm:$0xff]
        %v2630 = vld [vmem:[%s420 + $0x100] sm:$0xff]
        %v2631 = vld [vmem:[%s420 + $0x108] sm:$0xff]
        %v2632 = vld [vmem:[%s420 + $0x110] sm:$0xff]
        %v2633 = vld [vmem:[%s420 + $0x118] sm:$0xff]
        %v2634 = vld [vmem:[%s420 + $0x120] sm:$0xff]
        %v2635 = vld [vmem:[%s420 + $0x128] sm:$0xff]
        %v2636 = vld [vmem:[%s420 + $0x130] sm:$0xff]
        %v2637 = vld [vmem:[%s420 + $0x138] sm:$0xff]
        %v2638 = vld [vmem:[%s420 + $0x140] sm:$0xff]
        %v2639 = vld [vmem:[%s420 + $0x148] sm:$0xff]
        %v2640 = vld [vmem:[%s420 + $0x150] sm:$0xff]
        %v2641 = vld [vmem:[%s420 + $0x158] sm:$0xff]
        %v2642 = vld [vmem:[%s420 + $0x160] sm:$0xff]
        %v2643 = vld [vmem:[%s420 + $0x168] sm:$0xff]
        %v2644 = vld [vmem:[%s420 + $0x170] sm:$0xff]
        %v2645 = vld [vmem:[%s420 + $0x178] sm:$0xff]
        %v2646 = vld [vmem:[%s420 + $0x180] sm:$0xff]
        %v2647 = vld [vmem:[%s420 + $0x188] sm:$0xff]
        %v2648 = vld [vmem:[%s420 + $0x190] sm:$0xff]
        %v2649 = vld [vmem:[%s420 + $0x198] sm:$0xff]
        %v2650 = vld [vmem:[%s420 + $0x1a0] sm:$0xff]
        %v2651 = vld [vmem:[%s420 + $0x1a8] sm:$0xff]
        %v2652 = vld [vmem:[%s420 + $0x1b0] sm:$0xff]
        %v2653 = vld [vmem:[%s420 + $0x1b8] sm:$0xff]
        %v2654 = vld [vmem:[%s420 + $0x1c0] sm:$0xff]
        %v2655 = vld [vmem:[%s420 + $0x1c8] sm:$0xff]
        %v2656 = vld [vmem:[%s420 + $0x1d0] sm:$0xff]
        %v2657 = vld [vmem:[%s420 + $0x1d8] sm:$0xff]
        %v2658 = vld [vmem:[%s420 + $0x1e0] sm:$0xff]
        %v2659 = vld [vmem:[%s420 + $0x1e8] sm:$0xff]
        %v2660 = vld [vmem:[%s420 + $0x1f0] sm:$0xff]
        %v2661 = vld [vmem:[%s420 + $0x1f8] sm:$0xff]
        %v2662 = vld [vmem:[%s420 + $0x200] sm:$0xff]
        %v2663 = vld [vmem:[%s420 + $0x208] sm:$0xff]
        %v2664 = vld [vmem:[%s420 + $0x210] sm:$0xff]
        %v2665 = vld [vmem:[%s420 + $0x218] sm:$0xff]
        %v2666 = vld [vmem:[%s420 + $0x220] sm:$0xff]
        %v2667 = vld [vmem:[%s420 + $0x228] sm:$0xff]
        %v2668 = vld [vmem:[%s420 + $0x230] sm:$0xff]
        %v2669 = vld [vmem:[%s420 + $0x238] sm:$0xff]
        %v2670 = vpack.c.bf16 %v2599, %v2598
        %v2671 = vpack.c.bf16 %v2601, %v2600
        %v2672 = vpack.c.bf16 %v2603, %v2602
        %v2673 = vpack.c.bf16 %v2605, %v2604
        %v2674 = vpack.c.bf16 %v2607, %v2606
        %v2675 = vpack.c.bf16 %v2609, %v2608
        %v2676 = vpack.c.bf16 %v2611, %v2610
        %v2677 = vpack.c.bf16 %v2613, %v2612
        %v2678 = vpack.c.bf16 %v2615, %v2614
        %v2679 = vpack.c.bf16 %v2617, %v2616
        %v2680 = vpack.c.bf16 %v2619, %v2618
        %v2681 = vpack.c.bf16 %v2621, %v2620
        %v2682 = vpack.c.bf16 %v2623, %v2622
        %v2683 = vpack.c.bf16 %v2625, %v2624
        %v2684 = vpack.c.bf16 %v2627, %v2626
        %v2685 = vpack.c.bf16 %v2629, %v2628
        %v2686 = vpack.c.bf16 %v2631, %v2630
        %v2687 = vpack.c.bf16 %v2633, %v2632
        %v2688 = vpack.c.bf16 %v2635, %v2634
        %v2689 = vpack.c.bf16 %v2637, %v2636
        %v2690 = vpack.c.bf16 %v2639, %v2638
        %v2691 = vpack.c.bf16 %v2641, %v2640
        %v2692 = vpack.c.bf16 %v2643, %v2642
        %v2693 = vpack.c.bf16 %v2645, %v2644
        %v2694 = vpack.c.bf16 %v2647, %v2646
        %v2695 = vpack.c.bf16 %v2649, %v2648
        %v2696 = vpack.c.bf16 %v2651, %v2650
        %v2697 = vpack.c.bf16 %v2653, %v2652
        %v2698 = vpack.c.bf16 %v2655, %v2654
        %v2699 = vpack.c.bf16 %v2657, %v2656
        %v2700 = vpack.c.bf16 %v2659, %v2658
        %v2701 = vpack.c.bf16 %v2661, %v2660
        %v2702 = vpack.c.bf16 %v2663, %v2662
        %v2703 = vpack.c.bf16 %v2665, %v2664
        %v2704 = vpack.c.bf16 %v2667, %v2666
        %v2705 = vpack.c.bf16 %v2669, %v2668
        %s2706 = scalar_lea.vmem %s5, 64
        %v2707 = vld [vmem:[%s2706] sm:$0xf]
        %v2708 = vld [vmem:[%s2706 + $0x4] sm:$0xf]
        %v2709 = vld [vmem:[%s2706 + $0x8] sm:$0xf]
        %v2710 = vld [vmem:[%s2706 + $0xc] sm:$0xf]
        %v2711 = vld [vmem:[%s2706 + $0x10] sm:$0xf]
        %v2712 = vld [vmem:[%s2706 + $0x14] sm:$0xf]
        %v2713 = vld [vmem:[%s2706 + $0x18] sm:$0xf]
        %v2714 = vld [vmem:[%s2706 + $0x1c] sm:$0xf]
        %v2715 = vld [vmem:[%s2706 + $0x20] sm:$0xf]
        %v2716 = vld [vmem:[%s2706 + $0x24] sm:$0xf]
        %v2717 = vld [vmem:[%s2706 + $0x28] sm:$0xf]
        %v2718 = vld [vmem:[%s2706 + $0x2c] sm:$0xf]
        %v2719 = vld [vmem:[%s2706 + $0x30] sm:$0xf]
        %v2720 = vld [vmem:[%s2706 + $0x34] sm:$0xf]
        %v2721 = vld [vmem:[%s2706 + $0x38] sm:$0xf]
        %v2722 = vld [vmem:[%s2706 + $0x3c] sm:$0xf]
        %v2739 = vunpack.c.l.b16 %v2707
        %v2740 = vunpack.c.l.b16 %v2708
        %v2741 = vunpack.c.l.b16 %v2709
        %v2742 = vunpack.c.l.b16 %v2710
        %v2743 = vunpack.c.l.b16 %v2711
        %v2744 = vunpack.c.l.b16 %v2712
        %v2745 = vunpack.c.l.b16 %v2713
        %v2746 = vunpack.c.l.b16 %v2714
        %v2747 = vunpack.c.l.b16 %v2715
        %v2748 = vunpack.c.l.b16 %v2716
        %v2749 = vunpack.c.l.b16 %v2717
        %v2750 = vunpack.c.l.b16 %v2718
        %v2751 = vunpack.c.l.b16 %v2719
        %v2752 = vunpack.c.l.b16 %v2720
        %v2753 = vunpack.c.l.b16 %v2721
        %v2754 = vunpack.c.l.b16 %v2722
        %v2755 = vpack.c.b16 %v2740, %v2739
        %v2756 = vpack.c.b16 %v2742, %v2741
        %v2757 = vpack.c.b16 %v2744, %v2743
        %v2758 = vpack.c.b16 %v2746, %v2745
        %v2759 = vpack.c.b16 %v2748, %v2747
        %v2760 = vpack.c.b16 %v2750, %v2749
        %v2761 = vpack.c.b16 %v2752, %v2751
        %v2762 = vpack.c.b16 %v2754, %v2753
        %2771 = vmatprep.subr.bf16.mxu0 0
        %2772 = vmatpush1.bf16.msra.mxu0 %v2762
        %2773 = vmatprep.subr.bf16.mxu0 0
        %2774 = vmatpush1.bf16.msra.mxu0 %v2761
        %2775 = vmatprep.subr.bf16.mxu0 0
        %2776 = vmatpush1.bf16.msra.mxu0 %v2760
        %2777 = vmatprep.subr.bf16.mxu0 0
        %2778 = vmatpush1.bf16.msra.mxu0 %v2759
        %2779 = vmatprep.subr.bf16.mxu0 0
        %2780 = vmatpush1.bf16.msra.mxu0 %v2758
        %2781 = vmatprep.subr.bf16.mxu0 0
        %2782 = vmatpush1.bf16.msra.mxu0 %v2757
        %2783 = vmatprep.subr.bf16.mxu0 0
        %2784 = vmatpush1.bf16.msra.mxu0 %v2756
        %2785 = vmatprep.subr.bf16.mxu0 0
        %2786 = vmatpush1.bf16.msra.mxu0 %v2755
        %2787 = vmatprep.subr.bf16.mxu0 0
        %2788 = vmatpush2.bf16.msra.mxu0 0
        %2789 = vmatprep.subr.bf16.mxu0 0
        %2790 = vmatpush2.bf16.msra.mxu0 0
        %2791 = vmatprep.subr.bf16.mxu0 0
        %2792 = vmatpush2.bf16.msra.mxu0 0
        %2793 = vmatprep.subr.bf16.mxu0 0
        %2794 = vmatpush2.bf16.msra.mxu0 0
        %2795 = vmatprep.subr.bf16.mxu0 0
        %2796 = vmatpush2.bf16.msra.mxu0 0
        %2797 = vmatprep.subr.bf16.mxu0 0
        %2798 = vmatpush2.bf16.msra.mxu0 0
        %2799 = vmatprep.subr.bf16.mxu0 0
        %2800 = vmatpush2.bf16.msra.mxu0 0
        %2801 = vmatprep.subr.bf16.mxu0 0
        %2802 = vmatpush2.bf16.msra.mxu0 0
        %2803 = vmatprep.mubr.bf16.mxu0 0
        %2804 = vmatmul.mubr.bf16.gmra.mxu0 %v2670
        %v2805 = vpop.f32.mrf.mxu0
        %v2806 = vadd.f32 0.0, %v2805
        %v2807 = vpop.f32.mrf.mxu0
        %v2808 = vpop.f32.mrf.mxu0
        %v2809 = vadd.f32 0.0, %v2808
        %v2810 = vpop.f32.mrf.mxu0
        %2811 = vmatprep.mubr.bf16.mxu0 0
        %2812 = vmatmul.mubr.bf16.gmra.mxu0 %v2671
        %v2813 = vpop.f32.mrf.mxu0
        %v2814 = vadd.f32 0.0, %v2813
        %v2815 = vpop.f32.mrf.mxu0
        %v2816 = vpop.f32.mrf.mxu0
        %v2817 = vadd.f32 0.0, %v2816
        %v2818 = vpop.f32.mrf.mxu0
        %2819 = vmatprep.mubr.bf16.mxu0 0
        %2820 = vmatmul.mubr.bf16.gmra.mxu0 %v2672
        %v2821 = vpop.f32.mrf.mxu0
        %v2822 = vadd.f32 0.0, %v2821
        %v2823 = vpop.f32.mrf.mxu0
        %v2824 = vpop.f32.mrf.mxu0
        %v2825 = vadd.f32 0.0, %v2824
        %v2826 = vpop.f32.mrf.mxu0
        %2827 = vmatprep.mubr.bf16.mxu0 0
        %2828 = vmatmul.mubr.bf16.gmra.mxu0 %v2673
        %v2829 = vpop.f32.mrf.mxu0
        %v2830 = vadd.f32 0.0, %v2829
        %v2831 = vpop.f32.mrf.mxu0
        %v2832 = vpop.f32.mrf.mxu0
        %v2833 = vadd.f32 0.0, %v2832
        %v2834 = vpop.f32.mrf.mxu0
        %2835 = vmatprep.mubr.bf16.mxu0 0
        %2836 = vmatmul.mubr.bf16.gmra.mxu0 %v2674
        %v2837 = vpop.f32.mrf.mxu0
        %v2838 = vadd.f32 0.0, %v2837
        %v2839 = vpop.f32.mrf.mxu0
        %v2840 = vpop.f32.mrf.mxu0
        %v2841 = vadd.f32 0.0, %v2840
        %v2842 = vpop.f32.mrf.mxu0
        %2843 = vmatprep.mubr.bf16.mxu0 0
        %2844 = vmatmul.mubr.bf16.gmra.mxu0 %v2675
        %v2845 = vpop.f32.mrf.mxu0
        %v2846 = vadd.f32 0.0, %v2845
        %v2847 = vpop.f32.mrf.mxu0
        %v2848 = vpop.f32.mrf.mxu0
        %v2849 = vadd.f32 0.0, %v2848
        %v2850 = vpop.f32.mrf.mxu0
        %2851 = vmatprep.mubr.bf16.mxu0 0
        %2852 = vmatmul.mubr.bf16.gmra.mxu0 %v2676
        %v2853 = vpop.f32.mrf.mxu0
        %v2854 = vadd.f32 0.0, %v2853
        %v2855 = vpop.f32.mrf.mxu0
        %v2856 = vpop.f32.mrf.mxu0
        %v2857 = vadd.f32 0.0, %v2856
        %v2858 = vpop.f32.mrf.mxu0
        %2859 = vmatprep.mubr.bf16.mxu0 0
        %2860 = vmatmul.mubr.bf16.gmra.mxu0 %v2677
        %v2861 = vpop.f32.mrf.mxu0
        %v2862 = vadd.f32 0.0, %v2861
        %v2863 = vpop.f32.mrf.mxu0
        %v2864 = vpop.f32.mrf.mxu0
        %v2865 = vadd.f32 0.0, %v2864
        %v2866 = vpop.f32.mrf.mxu0
        %2867 = vmatprep.mubr.bf16.mxu0 0
        %2868 = vmatmul.mubr.bf16.gmra.mxu0 %v2678
        %v2869 = vpop.f32.mrf.mxu0
        %v2870 = vadd.f32 0.0, %v2869
        %v2871 = vpop.f32.mrf.mxu0
        %v2872 = vpop.f32.mrf.mxu0
        %v2873 = vadd.f32 0.0, %v2872
        %v2874 = vpop.f32.mrf.mxu0
        %2875 = vmatprep.mubr.bf16.mxu0 0
        %2876 = vmatmul.mubr.bf16.gmra.mxu0 %v2679
        %v2877 = vpop.f32.mrf.mxu0
        %v2878 = vadd.f32 0.0, %v2877
        %v2879 = vpop.f32.mrf.mxu0
        %v2880 = vpop.f32.mrf.mxu0
        %v2881 = vadd.f32 0.0, %v2880
        %v2882 = vpop.f32.mrf.mxu0
        %2883 = vmatprep.mubr.bf16.mxu0 0
        %2884 = vmatmul.mubr.bf16.gmra.mxu0 %v2680
        %v2885 = vpop.f32.mrf.mxu0
        %v2886 = vadd.f32 0.0, %v2885
        %v2887 = vpop.f32.mrf.mxu0
        %v2888 = vpop.f32.mrf.mxu0
        %v2889 = vadd.f32 0.0, %v2888
        %v2890 = vpop.f32.mrf.mxu0
        %2891 = vmatprep.mubr.bf16.mxu0 0
        %2892 = vmatmul.mubr.bf16.gmra.mxu0 %v2681
        %v2893 = vpop.f32.mrf.mxu0
        %v2894 = vadd.f32 0.0, %v2893
        %v2895 = vpop.f32.mrf.mxu0
        %v2896 = vpop.f32.mrf.mxu0
        %v2897 = vadd.f32 0.0, %v2896
        %v2898 = vpop.f32.mrf.mxu0
        %2899 = vmatprep.mubr.bf16.mxu0 0
        %2900 = vmatmul.mubr.bf16.gmra.mxu0 %v2682
        %v2901 = vpop.f32.mrf.mxu0
        %v2902 = vadd.f32 0.0, %v2901
        %v2903 = vpop.f32.mrf.mxu0
        %v2904 = vpop.f32.mrf.mxu0
        %v2905 = vadd.f32 0.0, %v2904
        %v2906 = vpop.f32.mrf.mxu0
        %2907 = vmatprep.mubr.bf16.mxu0 0
        %2908 = vmatmul.mubr.bf16.gmra.mxu0 %v2683
        %v2909 = vpop.f32.mrf.mxu0
        %v2910 = vadd.f32 0.0, %v2909
        %v2911 = vpop.f32.mrf.mxu0
        %v2912 = vpop.f32.mrf.mxu0
        %v2913 = vadd.f32 0.0, %v2912
        %v2914 = vpop.f32.mrf.mxu0
        %2915 = vmatprep.mubr.bf16.mxu0 0
        %2916 = vmatmul.mubr.bf16.gmra.mxu0 %v2684
        %v2917 = vpop.f32.mrf.mxu0
        %v2918 = vadd.f32 0.0, %v2917
        %v2919 = vpop.f32.mrf.mxu0
        %v2920 = vpop.f32.mrf.mxu0
        %v2921 = vadd.f32 0.0, %v2920
        %v2922 = vpop.f32.mrf.mxu0
        %2923 = vmatprep.mubr.bf16.mxu0 0
        %2924 = vmatmul.mubr.bf16.gmra.mxu0 %v2685
        %v2925 = vpop.f32.mrf.mxu0
        %v2926 = vadd.f32 0.0, %v2925
        %v2927 = vpop.f32.mrf.mxu0
        %v2928 = vpop.f32.mrf.mxu0
        %v2929 = vadd.f32 0.0, %v2928
        %v2930 = vpop.f32.mrf.mxu0
        %2931 = vmatprep.mubr.bf16.mxu0 0
        %2932 = vmatmul.mubr.bf16.gmra.mxu0 %v2686
        %v2933 = vpop.f32.mrf.mxu0
        %v2934 = vadd.f32 0.0, %v2933
        %v2935 = vpop.f32.mrf.mxu0
        %v2936 = vpop.f32.mrf.mxu0
        %v2937 = vadd.f32 0.0, %v2936
        %v2938 = vpop.f32.mrf.mxu0
        %2939 = vmatprep.mubr.bf16.mxu0 0
        %2940 = vmatmul.mubr.bf16.gmra.mxu0 %v2687
        %v2941 = vpop.f32.mrf.mxu0
        %v2942 = vadd.f32 0.0, %v2941
        %v2943 = vpop.f32.mrf.mxu0
        %v2944 = vpop.f32.mrf.mxu0
        %v2945 = vadd.f32 0.0, %v2944
        %v2946 = vpop.f32.mrf.mxu0
        %2947 = vmatprep.mubr.bf16.mxu0 0
        %2948 = vmatmul.mubr.bf16.gmra.mxu0 %v2688
        %v2949 = vpop.f32.mrf.mxu0
        %v2950 = vadd.f32 0.0, %v2949
        %v2951 = vpop.f32.mrf.mxu0
        %v2952 = vpop.f32.mrf.mxu0
        %v2953 = vadd.f32 0.0, %v2952
        %v2954 = vpop.f32.mrf.mxu0
        %2955 = vmatprep.mubr.bf16.mxu0 0
        %2956 = vmatmul.mubr.bf16.gmra.mxu0 %v2689
        %v2957 = vpop.f32.mrf.mxu0
        %v2958 = vadd.f32 0.0, %v2957
        %v2959 = vpop.f32.mrf.mxu0
        %v2960 = vpop.f32.mrf.mxu0
        %v2961 = vadd.f32 0.0, %v2960
        %v2962 = vpop.f32.mrf.mxu0
        %2963 = vmatprep.mubr.bf16.mxu0 0
        %2964 = vmatmul.mubr.bf16.gmra.mxu0 %v2690
        %v2965 = vpop.f32.mrf.mxu0
        %v2966 = vadd.f32 0.0, %v2965
        %v2967 = vpop.f32.mrf.mxu0
        %v2968 = vpop.f32.mrf.mxu0
        %v2969 = vadd.f32 0.0, %v2968
        %v2970 = vpop.f32.mrf.mxu0
        %2971 = vmatprep.mubr.bf16.mxu0 0
        %2972 = vmatmul.mubr.bf16.gmra.mxu0 %v2691
        %v2973 = vpop.f32.mrf.mxu0
        %v2974 = vadd.f32 0.0, %v2973
        %v2975 = vpop.f32.mrf.mxu0
        %v2976 = vpop.f32.mrf.mxu0
        %v2977 = vadd.f32 0.0, %v2976
        %v2978 = vpop.f32.mrf.mxu0
        %2979 = vmatprep.mubr.bf16.mxu0 0
        %2980 = vmatmul.mubr.bf16.gmra.mxu0 %v2692
        %v2981 = vpop.f32.mrf.mxu0
        %v2982 = vadd.f32 0.0, %v2981
        %v2983 = vpop.f32.mrf.mxu0
        %v2984 = vpop.f32.mrf.mxu0
        %v2985 = vadd.f32 0.0, %v2984
        %v2986 = vpop.f32.mrf.mxu0
        %2987 = vmatprep.mubr.bf16.mxu0 0
        %2988 = vmatmul.mubr.bf16.gmra.mxu0 %v2693
        %v2989 = vpop.f32.mrf.mxu0
        %v2990 = vadd.f32 0.0, %v2989
        %v2991 = vpop.f32.mrf.mxu0
        %v2992 = vpop.f32.mrf.mxu0
        %v2993 = vadd.f32 0.0, %v2992
        %v2994 = vpop.f32.mrf.mxu0
        %2995 = vmatprep.mubr.bf16.mxu0 0
        %2996 = vmatmul.mubr.bf16.gmra.mxu0 %v2694
        %v2997 = vpop.f32.mrf.mxu0
        %v2998 = vadd.f32 0.0, %v2997
        %v2999 = vpop.f32.mrf.mxu0
        %v3000 = vpop.f32.mrf.mxu0
        %v3001 = vadd.f32 0.0, %v3000
        %v3002 = vpop.f32.mrf.mxu0
        %3003 = vmatprep.mubr.bf16.mxu0 0
        %3004 = vmatmul.mubr.bf16.gmra.mxu0 %v2695
        %v3005 = vpop.f32.mrf.mxu0
        %v3006 = vadd.f32 0.0, %v3005
        %v3007 = vpop.f32.mrf.mxu0
        %v3008 = vpop.f32.mrf.mxu0
        %v3009 = vadd.f32 0.0, %v3008
        %v3010 = vpop.f32.mrf.mxu0
        %3011 = vmatprep.mubr.bf16.mxu0 0
        %3012 = vmatmul.mubr.bf16.gmra.mxu0 %v2696
        %v3013 = vpop.f32.mrf.mxu0
        %v3014 = vadd.f32 0.0, %v3013
        %v3015 = vpop.f32.mrf.mxu0
        %v3016 = vpop.f32.mrf.mxu0
        %v3017 = vadd.f32 0.0, %v3016
        %v3018 = vpop.f32.mrf.mxu0
        %3019 = vmatprep.mubr.bf16.mxu0 0
        %3020 = vmatmul.mubr.bf16.gmra.mxu0 %v2697
        %v3021 = vpop.f32.mrf.mxu0
        %v3022 = vadd.f32 0.0, %v3021
        %v3023 = vpop.f32.mrf.mxu0
        %v3024 = vpop.f32.mrf.mxu0
        %v3025 = vadd.f32 0.0, %v3024
        %v3026 = vpop.f32.mrf.mxu0
        %3027 = vmatprep.mubr.bf16.mxu0 0
        %3028 = vmatmul.mubr.bf16.gmra.mxu0 %v2698
        %v3029 = vpop.f32.mrf.mxu0
        %v3030 = vadd.f32 0.0, %v3029
        %v3031 = vpop.f32.mrf.mxu0
        %v3032 = vpop.f32.mrf.mxu0
        %v3033 = vadd.f32 0.0, %v3032
        %v3034 = vpop.f32.mrf.mxu0
        %3035 = vmatprep.mubr.bf16.mxu0 0
        %3036 = vmatmul.mubr.bf16.gmra.mxu0 %v2699
        %v3037 = vpop.f32.mrf.mxu0
        %v3038 = vadd.f32 0.0, %v3037
        %v3039 = vpop.f32.mrf.mxu0
        %v3040 = vpop.f32.mrf.mxu0
        %v3041 = vadd.f32 0.0, %v3040
        %v3042 = vpop.f32.mrf.mxu0
        %3043 = vmatprep.mubr.bf16.mxu0 0
        %3044 = vmatmul.mubr.bf16.gmra.mxu0 %v2700
        %v3045 = vpop.f32.mrf.mxu0
        %v3046 = vadd.f32 0.0, %v3045
        %v3047 = vpop.f32.mrf.mxu0
        %v3048 = vpop.f32.mrf.mxu0
        %v3049 = vadd.f32 0.0, %v3048
        %v3050 = vpop.f32.mrf.mxu0
        %3051 = vmatprep.mubr.bf16.mxu0 0
        %3052 = vmatmul.mubr.bf16.gmra.mxu0 %v2701
        %v3053 = vpop.f32.mrf.mxu0
        %v3054 = vadd.f32 0.0, %v3053
        %v3055 = vpop.f32.mrf.mxu0
        %v3056 = vpop.f32.mrf.mxu0
        %v3057 = vadd.f32 0.0, %v3056
        %v3058 = vpop.f32.mrf.mxu0
        %3059 = vmatprep.mubr.bf16.mxu0 0
        %3060 = vmatmul.mubr.bf16.gmra.mxu0 %v2702
        %v3061 = vpop.f32.mrf.mxu0
        %v3062 = vadd.f32 0.0, %v3061
        %v3063 = vpop.f32.mrf.mxu0
        %v3064 = vpop.f32.mrf.mxu0
        %v3065 = vadd.f32 0.0, %v3064
        %v3066 = vpop.f32.mrf.mxu0
        %3067 = vmatprep.mubr.bf16.mxu0 0
        %3068 = vmatmul.mubr.bf16.gmra.mxu0 %v2703
        %v3069 = vpop.f32.mrf.mxu0
        %v3070 = vadd.f32 0.0, %v3069
        %v3071 = vpop.f32.mrf.mxu0
        %v3072 = vpop.f32.mrf.mxu0
        %v3073 = vadd.f32 0.0, %v3072
        %v3074 = vpop.f32.mrf.mxu0
        %3075 = vmatprep.mubr.bf16.mxu0 0
        %3076 = vmatmul.mubr.bf16.gmra.mxu0 %v2704
        %v3077 = vpop.f32.mrf.mxu0
        %v3078 = vadd.f32 0.0, %v3077
        %v3079 = vpop.f32.mrf.mxu0
        %v3080 = vpop.f32.mrf.mxu0
        %v3081 = vadd.f32 0.0, %v3080
        %v3082 = vpop.f32.mrf.mxu0
        %3083 = vmatprep.mubr.bf16.mxu0 0
        %3084 = vmatmul.mubr.bf16.gmra.mxu0 %v2705
        %v3085 = vpop.f32.mrf.mxu0
        %v3086 = vadd.f32 0.0, %v3085
        %v3087 = vpop.f32.mrf.mxu0
        %v3088 = vpop.f32.mrf.mxu0
        %v3089 = vadd.f32 0.0, %v3088
        %v3090 = vpop.f32.mrf.mxu0
        %3091 = vdwg.mxu0
        %v3092 = vadd.f32 %v809, %v2806
        %v3093 = vadd.f32 %v813, %v2809
        %v3094 = vadd.f32 %v819, %v2814
        %v3095 = vadd.f32 %v823, %v2817
        %v3096 = vadd.f32 %v829, %v2822
        %v3097 = vadd.f32 %v833, %v2825
        %v3098 = vadd.f32 %v839, %v2830
        %v3099 = vadd.f32 %v843, %v2833
        %v3100 = vadd.f32 %v849, %v2838
        %v3101 = vadd.f32 %v853, %v2841
        %v3102 = vadd.f32 %v859, %v2846
        %v3103 = vadd.f32 %v863, %v2849
        %v3104 = vadd.f32 %v869, %v2854
        %v3105 = vadd.f32 %v873, %v2857
        %v3106 = vadd.f32 %v879, %v2862
        %v3107 = vadd.f32 %v883, %v2865
        %v3108 = vadd.f32 %v889, %v2870
        %v3109 = vadd.f32 %v893, %v2873
        %v3110 = vadd.f32 %v899, %v2878
        %v3111 = vadd.f32 %v903, %v2881
        %v3112 = vadd.f32 %v909, %v2886
        %v3113 = vadd.f32 %v913, %v2889
        %v3114 = vadd.f32 %v919, %v2894
        %v3115 = vadd.f32 %v923, %v2897
        %v3116 = vadd.f32 %v929, %v2902
        %v3117 = vadd.f32 %v933, %v2905
        %v3118 = vadd.f32 %v939, %v2910
        %v3119 = vadd.f32 %v943, %v2913
        %v3120 = vadd.f32 %v949, %v2918
        %v3121 = vadd.f32 %v953, %v2921
        %v3122 = vadd.f32 %v959, %v2926
        %v3123 = vadd.f32 %v963, %v2929
        %v3124 = vadd.f32 %v969, %v2934
        %v3125 = vadd.f32 %v973, %v2937
        %v3126 = vadd.f32 %v979, %v2942
        %v3127 = vadd.f32 %v983, %v2945
        %v3128 = vadd.f32 %v989, %v2950
        %v3129 = vadd.f32 %v993, %v2953
        %v3130 = vadd.f32 %v999, %v2958
        %v3131 = vadd.f32 %v1003, %v2961
        %v3132 = vadd.f32 %v1009, %v2966
        %v3133 = vadd.f32 %v1013, %v2969
        %v3134 = vadd.f32 %v1019, %v2974
        %v3135 = vadd.f32 %v1023, %v2977
        %v3136 = vadd.f32 %v1029, %v2982
        %v3137 = vadd.f32 %v1033, %v2985
        %v3138 = vadd.f32 %v1039, %v2990
        %v3139 = vadd.f32 %v1043, %v2993
        %v3140 = vadd.f32 %v1049, %v2998
        %v3141 = vadd.f32 %v1053, %v3001
        %v3142 = vadd.f32 %v1059, %v3006
        %v3143 = vadd.f32 %v1063, %v3009
        %v3144 = vadd.f32 %v1069, %v3014
        %v3145 = vadd.f32 %v1073, %v3017
        %v3146 = vadd.f32 %v1079, %v3022
        %v3147 = vadd.f32 %v1083, %v3025
        %v3148 = vadd.f32 %v1089, %v3030
        %v3149 = vadd.f32 %v1093, %v3033
        %v3150 = vadd.f32 %v1099, %v3038
        %v3151 = vadd.f32 %v1103, %v3041
        %v3152 = vadd.f32 %v1109, %v3046
        %v3153 = vadd.f32 %v1113, %v3049
        %v3154 = vadd.f32 %v1119, %v3054
        %v3155 = vadd.f32 %v1123, %v3057
        %v3156 = vadd.f32 %v1129, %v3062
        %v3157 = vadd.f32 %v1133, %v3065
        %v3158 = vadd.f32 %v1139, %v3070
        %v3159 = vadd.f32 %v1143, %v3073
        %v3160 = vadd.f32 %v1149, %v3078
        %v3161 = vadd.f32 %v1153, %v3081
        %v3162 = vadd.f32 %v1159, %v3086
        %v3163 = vadd.f32 %v1163, %v3089
        %v3164 = vld [vmem:[%s6 + $0x1] sm:$0x1]
        %v3165 = vlaneseq
        %v3166 = vshrl.u32 %v3165, 7
        %v3167 = vsub.s32 0, %v3166
        %v3168 = vrot.slane %v3164, %v3167
        %v3169 = vadd.f32 %v3092, %v3168
        %v3170 = vadd.f32 %v3093, %v3168
        %v3171 = vadd.f32 %v3094, %v3168
        %v3172 = vadd.f32 %v3095, %v3168
        %v3173 = vadd.f32 %v3096, %v3168
        %v3174 = vadd.f32 %v3097, %v3168
        %v3175 = vadd.f32 %v3098, %v3168
        %v3176 = vadd.f32 %v3099, %v3168
        %v3177 = vadd.f32 %v3100, %v3168
        %v3178 = vadd.f32 %v3101, %v3168
        %v3179 = vadd.f32 %v3102, %v3168
        %v3180 = vadd.f32 %v3103, %v3168
        %v3181 = vadd.f32 %v3104, %v3168
        %v3182 = vadd.f32 %v3105, %v3168
        %v3183 = vadd.f32 %v3106, %v3168
        %v3184 = vadd.f32 %v3107, %v3168
        %v3185 = vadd.f32 %v3108, %v3168
        %v3186 = vadd.f32 %v3109, %v3168
        %v3187 = vadd.f32 %v3110, %v3168
        %v3188 = vadd.f32 %v3111, %v3168
        %v3189 = vadd.f32 %v3112, %v3168
        %v3190 = vadd.f32 %v3113, %v3168
        %v3191 = vadd.f32 %v3114, %v3168
        %v3192 = vadd.f32 %v3115, %v3168
        %v3193 = vadd.f32 %v3116, %v3168
        %v3194 = vadd.f32 %v3117, %v3168
        %v3195 = vadd.f32 %v3118, %v3168
        %v3196 = vadd.f32 %v3119, %v3168
        %v3197 = vadd.f32 %v3120, %v3168
        %v3198 = vadd.f32 %v3121, %v3168
        %v3199 = vadd.f32 %v3122, %v3168
        %v3200 = vadd.f32 %v3123, %v3168
        %v3201 = vadd.f32 %v3124, %v3168
        %v3202 = vadd.f32 %v3125, %v3168
        %v3203 = vadd.f32 %v3126, %v3168
        %v3204 = vadd.f32 %v3127, %v3168
        %v3205 = vadd.f32 %v3128, %v3168
        %v3206 = vadd.f32 %v3129, %v3168
        %v3207 = vadd.f32 %v3130, %v3168
        %v3208 = vadd.f32 %v3131, %v3168
        %v3209 = vadd.f32 %v3132, %v3168
        %v3210 = vadd.f32 %v3133, %v3168
        %v3211 = vadd.f32 %v3134, %v3168
        %v3212 = vadd.f32 %v3135, %v3168
        %v3213 = vadd.f32 %v3136, %v3168
        %v3214 = vadd.f32 %v3137, %v3168
        %v3215 = vadd.f32 %v3138, %v3168
        %v3216 = vadd.f32 %v3139, %v3168
        %v3217 = vadd.f32 %v3140, %v3168
        %v3218 = vadd.f32 %v3141, %v3168
        %v3219 = vadd.f32 %v3142, %v3168
        %v3220 = vadd.f32 %v3143, %v3168
        %v3221 = vadd.f32 %v3144, %v3168
        %v3222 = vadd.f32 %v3145, %v3168
        %v3223 = vadd.f32 %v3146, %v3168
        %v3224 = vadd.f32 %v3147, %v3168
        %v3225 = vadd.f32 %v3148, %v3168
        %v3226 = vadd.f32 %v3149, %v3168
        %v3227 = vadd.f32 %v3150, %v3168
        %v3228 = vadd.f32 %v3151, %v3168
        %v3229 = vadd.f32 %v3152, %v3168
        %v3230 = vadd.f32 %v3153, %v3168
        %v3231 = vadd.f32 %v3154, %v3168
        %v3232 = vadd.f32 %v3155, %v3168
        %v3233 = vadd.f32 %v3156, %v3168
        %v3234 = vadd.f32 %v3157, %v3168
        %v3235 = vadd.f32 %v3158, %v3168
        %v3236 = vadd.f32 %v3159, %v3168
        %v3237 = vadd.f32 %v3160, %v3168
        %v3238 = vadd.f32 %v3161, %v3168
        %v3239 = vadd.f32 %v3162, %v3168
        %v3240 = vadd.f32 %v3163, %v3168
        %v3241 = vmax.f32 %v3169, 0.0
        %v3242 = vmax.f32 %v3170, 0.0
        %v3243 = vmax.f32 %v3171, 0.0
        %v3244 = vmax.f32 %v3172, 0.0
        %v3245 = vmax.f32 %v3173, 0.0
        %v3246 = vmax.f32 %v3174, 0.0
        %v3247 = vmax.f32 %v3175, 0.0
        %v3248 = vmax.f32 %v3176, 0.0
        %v3249 = vmax.f32 %v3177, 0.0
        %v3250 = vmax.f32 %v3178, 0.0
        %v3251 = vmax.f32 %v3179, 0.0
        %v3252 = vmax.f32 %v3180, 0.0
        %v3253 = vmax.f32 %v3181, 0.0
        %v3254 = vmax.f32 %v3182, 0.0
        %v3255 = vmax.f32 %v3183, 0.0
        %v3256 = vmax.f32 %v3184, 0.0
        %v3257 = vmax.f32 %v3185, 0.0
        %v3258 = vmax.f32 %v3186, 0.0
        %v3259 = vmax.f32 %v3187, 0.0
        %v3260 = vmax.f32 %v3188, 0.0
        %v3261 = vmax.f32 %v3189, 0.0
        %v3262 = vmax.f32 %v3190, 0.0
        %v3263 = vmax.f32 %v3191, 0.0
        %v3264 = vmax.f32 %v3192, 0.0
        %v3265 = vmax.f32 %v3193, 0.0
        %v3266 = vmax.f32 %v3194, 0.0
        %v3267 = vmax.f32 %v3195, 0.0
        %v3268 = vmax.f32 %v3196, 0.0
        %v3269 = vmax.f32 %v3197, 0.0
        %v3270 = vmax.f32 %v3198, 0.0
        %v3271 = vmax.f32 %v3199, 0.0
        %v3272 = vmax.f32 %v3200, 0.0
        %v3273 = vmax.f32 %v3201, 0.0
        %v3274 = vmax.f32 %v3202, 0.0
        %v3275 = vmax.f32 %v3203, 0.0
        %v3276 = vmax.f32 %v3204, 0.0
        %v3277 = vmax.f32 %v3205, 0.0
        %v3278 = vmax.f32 %v3206, 0.0
        %v3279 = vmax.f32 %v3207, 0.0
        %v3280 = vmax.f32 %v3208, 0.0
        %v3281 = vmax.f32 %v3209, 0.0
        %v3282 = vmax.f32 %v3210, 0.0
        %v3283 = vmax.f32 %v3211, 0.0
        %v3284 = vmax.f32 %v3212, 0.0
        %v3285 = vmax.f32 %v3213, 0.0
        %v3286 = vmax.f32 %v3214, 0.0
        %v3287 = vmax.f32 %v3215, 0.0
        %v3288 = vmax.f32 %v3216, 0.0
        %v3289 = vmax.f32 %v3217, 0.0
        %v3290 = vmax.f32 %v3218, 0.0
        %v3291 = vmax.f32 %v3219, 0.0
        %v3292 = vmax.f32 %v3220, 0.0
        %v3293 = vmax.f32 %v3221, 0.0
        %v3294 = vmax.f32 %v3222, 0.0
        %v3295 = vmax.f32 %v3223, 0.0
        %v3296 = vmax.f32 %v3224, 0.0
        %v3297 = vmax.f32 %v3225, 0.0
        %v3298 = vmax.f32 %v3226, 0.0
        %v3299 = vmax.f32 %v3227, 0.0
        %v3300 = vmax.f32 %v3228, 0.0
        %v3301 = vmax.f32 %v3229, 0.0
        %v3302 = vmax.f32 %v3230, 0.0
        %v3303 = vmax.f32 %v3231, 0.0
        %v3304 = vmax.f32 %v3232, 0.0
        %v3305 = vmax.f32 %v3233, 0.0
        %v3306 = vmax.f32 %v3234, 0.0
        %v3307 = vmax.f32 %v3235, 0.0
        %v3308 = vmax.f32 %v3236, 0.0
        %v3309 = vmax.f32 %v3237, 0.0
        %v3310 = vmax.f32 %v3238, 0.0
        %v3311 = vmax.f32 %v3239, 0.0
        %v3312 = vmax.f32 %v3240, 0.0
        %v3313 = vadd.f32 %v3241, %v3242
        %v3314 = vadd.f32 %v3313, %v3243
        %v3315 = vadd.f32 %v3314, %v3244
        %v3316 = vadd.f32 %v3315, %v3245
        %v3317 = vadd.f32 %v3316, %v3246
        %v3318 = vadd.f32 %v3317, %v3247
        %v3319 = vadd.f32 %v3318, %v3248
        %v3320 = vadd.f32 %v3319, %v3249
        %v3321 = vadd.f32 %v3320, %v3250
        %v3322 = vadd.f32 %v3321, %v3251
        %v3323 = vadd.f32 %v3322, %v3252
        %v3324 = vadd.f32 %v3323, %v3253
        %v3325 = vadd.f32 %v3324, %v3254
        %v3326 = vadd.f32 %v3325, %v3255
        %v3327 = vadd.f32 %v3326, %v3256
        %v3328 = vadd.f32 %v3327, %v3257
        %v3329 = vadd.f32 %v3328, %v3258
        %v3330 = vadd.f32 %v3329, %v3259
        %v3331 = vadd.f32 %v3330, %v3260
        %v3332 = vadd.f32 %v3331, %v3261
        %v3333 = vadd.f32 %v3332, %v3262
        %v3334 = vadd.f32 %v3333, %v3263
        %v3335 = vadd.f32 %v3334, %v3264
        %v3336 = vadd.f32 %v3335, %v3265
        %v3337 = vadd.f32 %v3336, %v3266
        %v3338 = vadd.f32 %v3337, %v3267
        %v3339 = vadd.f32 %v3338, %v3268
        %v3340 = vadd.f32 %v3339, %v3269
        %v3341 = vadd.f32 %v3340, %v3270
        %v3342 = vadd.f32 %v3341, %v3271
        %v3343 = vadd.f32 %v3342, %v3272
        %v3344 = vadd.f32 %v3343, %v3273
        %v3345 = vadd.f32 %v3344, %v3274
        %v3346 = vadd.f32 %v3345, %v3275
        %v3347 = vadd.f32 %v3346, %v3276
        %v3348 = vadd.f32 %v3347, %v3277
        %v3349 = vadd.f32 %v3348, %v3278
        %v3350 = vadd.f32 %v3349, %v3279
        %v3351 = vadd.f32 %v3350, %v3280
        %v3352 = vadd.f32 %v3351, %v3281
        %v3353 = vadd.f32 %v3352, %v3282
        %v3354 = vadd.f32 %v3353, %v3283
        %v3355 = vadd.f32 %v3354, %v3284
        %v3356 = vadd.f32 %v3355, %v3285
        %v3357 = vadd.f32 %v3356, %v3286
        %v3358 = vadd.f32 %v3357, %v3287
        %v3359 = vadd.f32 %v3358, %v3288
        %v3360 = vadd.f32 %v3359, %v3289
        %v3361 = vadd.f32 %v3360, %v3290
        %v3362 = vadd.f32 %v3361, %v3291
        %v3363 = vadd.f32 %v3362, %v3292
        %v3364 = vadd.f32 %v3363, %v3293
        %v3365 = vadd.f32 %v3364, %v3294
        %v3366 = vadd.f32 %v3365, %v3295
        %v3367 = vadd.f32 %v3366, %v3296
        %v3368 = vadd.f32 %v3367, %v3297
        %v3369 = vadd.f32 %v3368, %v3298
        %v3370 = vadd.f32 %v3369, %v3299
        %v3371 = vadd.f32 %v3370, %v3300
        %v3372 = vadd.f32 %v3371, %v3301
        %v3373 = vadd.f32 %v3372, %v3302
        %v3374 = vadd.f32 %v3373, %v3303
        %v3375 = vadd.f32 %v3374, %v3304
        %v3376 = vadd.f32 %v3375, %v3305
        %v3377 = vadd.f32 %v3376, %v3306
        %v3378 = vadd.f32 %v3377, %v3307
        %v3379 = vadd.f32 %v3378, %v3308
        %v3380 = vadd.f32 %v3379, %v3309
        %v3381 = vadd.f32 %v3380, %v3310
        %v3382 = vadd.f32 %v3381, %v3311
        %v3383 = vadd.f32 %v3382, %v3312
        %v3384 = vrot.slane %v3383, 4
        %v3385 = vadd.f32 %v3383, %v3384
        %v3386 = vrot.slane %v3385, 2
        %v3387 = vadd.f32 %v3385, %v3386
        %v3388 = vrot.slane %v3387, 1
        %v3389 = vadd.f32 %v3387, %v3388
        %v3390 = vmul.f32 %v3389, 0.0017361111
        %s3391 = scalar_lea.vmem %s7, 128
        %v3392 = vld [vmem:[%s3391] sm:$0xff]
        %v3393 = vld [vmem:[%s3391 + $0x8] sm:$0xff]
        %v3394 = vld [vmem:[%s3391 + $0x10] sm:$0xff]
        %v3395 = vld [vmem:[%s3391 + $0x18] sm:$0xff]
        %v3396 = vld [vmem:[%s3391 + $0x20] sm:$0xff]
        %v3397 = vld [vmem:[%s3391 + $0x28] sm:$0xff]
        %v3398 = vld [vmem:[%s3391 + $0x30] sm:$0xff]
        %v3399 = vld [vmem:[%s3391 + $0x38] sm:$0xff]
        %v3400 = vld [vmem:[%s3391 + $0x40] sm:$0xff]
        %v3401 = vld [vmem:[%s3391 + $0x48] sm:$0xff]
        %v3402 = vld [vmem:[%s3391 + $0x50] sm:$0xff]
        %v3403 = vld [vmem:[%s3391 + $0x58] sm:$0xff]
        %v3404 = vld [vmem:[%s3391 + $0x60] sm:$0xff]
        %v3405 = vld [vmem:[%s3391 + $0x68] sm:$0xff]
        %v3406 = vld [vmem:[%s3391 + $0x70] sm:$0xff]
        %v3407 = vld [vmem:[%s3391 + $0x78] sm:$0xff]
        %3408 = vmatprep.subr.mxu0 0.0
        %3409 = vmatpush1.msra.mxu0 %v3407
        %3410 = vmatprep.subr.mxu0 0.0
        %3411 = vmatpush1.msra.mxu0 %v3406
        %3412 = vmatprep.subr.mxu0 0.0
        %3413 = vmatpush1.msra.mxu0 %v3405
        %3414 = vmatprep.subr.mxu0 0.0
        %3415 = vmatpush1.msra.mxu0 %v3404
        %3416 = vmatprep.subr.mxu0 0.0
        %3417 = vmatpush1.msra.mxu0 %v3403
        %3418 = vmatprep.subr.mxu0 0.0
        %3419 = vmatpush1.msra.mxu0 %v3402
        %3420 = vmatprep.subr.mxu0 0.0
        %3421 = vmatpush1.msra.mxu0 %v3401
        %3422 = vmatprep.subr.mxu0 0.0
        %3423 = vmatpush1.msra.mxu0 %v3400
        %3424 = vmatprep.subr.mxu0 0.0
        %3425 = vmatpush1.msra.mxu0 %v3399
        %3426 = vmatprep.subr.mxu0 0.0
        %3427 = vmatpush1.msra.mxu0 %v3398
        %3428 = vmatprep.subr.mxu0 0.0
        %3429 = vmatpush1.msra.mxu0 %v3397
        %3430 = vmatprep.subr.mxu0 0.0
        %3431 = vmatpush1.msra.mxu0 %v3396
        %3432 = vmatprep.subr.mxu0 0.0
        %3433 = vmatpush1.msra.mxu0 %v3395
        %3434 = vmatprep.subr.mxu0 0.0
        %3435 = vmatpush1.msra.mxu0 %v3394
        %3436 = vmatprep.subr.mxu0 0.0
        %3437 = vmatpush1.msra.mxu0 %v3393
        %3438 = vmatprep.subr.mxu0 0.0
        %3439 = vmatpush1.msra.mxu0 %v3392
        %3440 = vmatprep.subr.mxu0 0.0
        %3441 = vmatpush2.msra.mxu0 0.0
        %3442 = vmatprep.subr.mxu0 0.0
        %3443 = vmatpush2.msra.mxu0 0.0
        %3444 = vmatprep.subr.mxu0 0.0
        %3445 = vmatpush2.msra.mxu0 0.0
        %3446 = vmatprep.subr.mxu0 0.0
        %3447 = vmatpush2.msra.mxu0 0.0
        %3448 = vmatprep.subr.mxu0 0.0
        %3449 = vmatpush2.msra.mxu0 0.0
        %3450 = vmatprep.subr.mxu0 0.0
        %3451 = vmatpush2.msra.mxu0 0.0
        %3452 = vmatprep.subr.mxu0 0.0
        %3453 = vmatpush2.msra.mxu0 0.0
        %3454 = vmatprep.subr.mxu0 0.0
        %3455 = vmatpush2.msra.mxu0 0.0
        %3456 = vmatprep.subr.mxu0 0.0
        %3457 = vmatpush2.msra.mxu0 0.0
        %3458 = vmatprep.subr.mxu0 0.0
        %3459 = vmatpush2.msra.mxu0 0.0
        %3460 = vmatprep.subr.mxu0 0.0
        %3461 = vmatpush2.msra.mxu0 0.0
        %3462 = vmatprep.subr.mxu0 0.0
        %3463 = vmatpush2.msra.mxu0 0.0
        %3464 = vmatprep.subr.mxu0 0.0
        %3465 = vmatpush2.msra.mxu0 0.0
        %3466 = vmatprep.subr.mxu0 0.0
        %3467 = vmatpush2.msra.mxu0 0.0
        %3468 = vmatprep.subr.mxu0 0.0
        %3469 = vmatpush2.msra.mxu0 0.0
        %3470 = vmatprep.subr.mxu0 0.0
        %3471 = vmatpush2.msra.mxu0 0.0
        %3472 = vmatprep.mubr.f32.mxu0 0.0
        %3473 = vmatmul.mubr.f32.gmra.mxu0 %v3390
        %v3474 = vpop.f32.mrf.mxu0
        %v3475 = vadd.f32 0.0, %v3474
        %v3476 = vpop.f32.mrf.mxu0
        %3477 = vdwg.mxu0
        %v3478 = vmax.f32 %v3475, 0.0
        %s3479 = scalar_lea.vmem %s8, 32
        %v3480 = vld [vmem:[%s3479] sm:$0xff]
        %v3481 = vld [vmem:[%s3479 + $0x8] sm:$0xff]
        %v3482 = vld [vmem:[%s3479 + $0x10] sm:$0xff]
        %v3483 = vld [vmem:[%s3479 + $0x18] sm:$0xff]
        %v3485 = vsel %vm2369, %v3478, 0
        %3487 = vmatprep.subr.mxu0 0.0
        %3488 = vmatpush1.msra.mxu0 0.0
        %3489 = vmatprep.subr.mxu0 0.0
        %3490 = vmatpush1.msra.mxu0 0.0
        %3491 = vmatprep.subr.mxu0 0.0
        %3492 = vmatpush1.msra.mxu0 0.0
        %3493 = vmatprep.subr.mxu0 0.0
        %3494 = vmatpush1.msra.mxu0 0.0
        %3495 = vmatprep.subr.mxu0 0.0
        %3496 = vmatpush1.msra.mxu0 0.0
        %3497 = vmatprep.subr.mxu0 0.0
        %3498 = vmatpush1.msra.mxu0 0.0
        %3499 = vmatprep.subr.mxu0 0.0
        %3500 = vmatpush1.msra.mxu0 0.0
        %3501 = vmatprep.subr.mxu0 0.0
        %3502 = vmatpush1.msra.mxu0 0.0
        %3503 = vmatprep.subr.mxu0 0.0
        %3504 = vmatpush1.msra.mxu0 0.0
        %3505 = vmatprep.subr.mxu0 0.0
        %3506 = vmatpush1.msra.mxu0 0.0
        %3507 = vmatprep.subr.mxu0 0.0
        %3508 = vmatpush1.msra.mxu0 0.0
        %3509 = vmatprep.subr.mxu0 0.0
        %3510 = vmatpush1.msra.mxu0 0.0
        %3511 = vmatprep.subr.mxu0 0.0
        %3512 = vmatpush1.msra.mxu0 %v3483
        %3513 = vmatprep.subr.mxu0 0.0
        %3514 = vmatpush1.msra.mxu0 %v3482
        %3515 = vmatprep.subr.mxu0 0.0
        %3516 = vmatpush1.msra.mxu0 %v3481
        %3517 = vmatprep.subr.mxu0 0.0
        %3518 = vmatpush1.msra.mxu0 %v3480
        %3519 = vmatprep.subr.mxu0 0.0
        %3520 = vmatpush2.msra.mxu0 0.0
        %3521 = vmatprep.subr.mxu0 0.0
        %3522 = vmatpush2.msra.mxu0 0.0
        %3523 = vmatprep.subr.mxu0 0.0
        %3524 = vmatpush2.msra.mxu0 0.0
        %3525 = vmatprep.subr.mxu0 0.0
        %3526 = vmatpush2.msra.mxu0 0.0
        %3527 = vmatprep.subr.mxu0 0.0
        %3528 = vmatpush2.msra.mxu0 0.0
        %3529 = vmatprep.subr.mxu0 0.0
        %3530 = vmatpush2.msra.mxu0 0.0
        %3531 = vmatprep.subr.mxu0 0.0
        %3532 = vmatpush2.msra.mxu0 0.0
        %3533 = vmatprep.subr.mxu0 0.0
        %3534 = vmatpush2.msra.mxu0 0.0
        %3535 = vmatprep.subr.mxu0 0.0
        %3536 = vmatpush2.msra.mxu0 0.0
        %3537 = vmatprep.subr.mxu0 0.0
        %3538 = vmatpush2.msra.mxu0 0.0
        %3539 = vmatprep.subr.mxu0 0.0
        %3540 = vmatpush2.msra.mxu0 0.0
        %3541 = vmatprep.subr.mxu0 0.0
        %3542 = vmatpush2.msra.mxu0 0.0
        %3543 = vmatprep.subr.mxu0 0.0
        %3544 = vmatpush2.msra.mxu0 0.0
        %3545 = vmatprep.subr.mxu0 0.0
        %3546 = vmatpush2.msra.mxu0 0.0
        %3547 = vmatprep.subr.mxu0 0.0
        %3548 = vmatpush2.msra.mxu0 0.0
        %3549 = vmatprep.subr.mxu0 0.0
        %3550 = vmatpush2.msra.mxu0 0.0
        %3551 = vmatprep.mubr.f32.mxu0 0.0
        %3552 = vmatmul.mubr.f32.gmra.mxu0 %v3485
        %v3553 = vpop.f32.mrf.mxu0
        %v3554 = vadd.f32 0.0, %v3553
        %v3555 = vpop.f32.mrf.mxu0
        %3556 = vdwg.mxu0
        %v3557 = vxor.u32 %v3554, 2147483648
        %v3558 = vmul.f32 %v3557, 1.442695
        %v3559 = vpow.pop %v3558
        %v3560 = vadd.f32 %v3559, 1.0
        %v3561 = vrcp.pop %v3560
        %v3562 = vmul.f32 1.0, %v3561
        %v3563 = vadd.f32 %v3562, 1.0
        %v3564 = vlaneseq
        %v3565 = vshrl.u32 %v3564, 7
        %v3566 = vsub.s32 0, %v3565
        %v3567 = vrot.slane %v3563, %v3566
        %v3568 = vmul.f32 %v3241, %v3567
        %v3569 = vmul.f32 %v3242, %v3567
        %v3570 = vmul.f32 %v3243, %v3567
        %v3571 = vmul.f32 %v3244, %v3567
        %v3572 = vmul.f32 %v3245, %v3567
        %v3573 = vmul.f32 %v3246, %v3567
        %v3574 = vmul.f32 %v3247, %v3567
        %v3575 = vmul.f32 %v3248, %v3567
        %v3576 = vmul.f32 %v3249, %v3567
        %v3577 = vmul.f32 %v3250, %v3567
        %v3578 = vmul.f32 %v3251, %v3567
        %v3579 = vmul.f32 %v3252, %v3567
        %v3580 = vmul.f32 %v3253, %v3567
        %v3581 = vmul.f32 %v3254, %v3567
        %v3582 = vmul.f32 %v3255, %v3567
        %v3583 = vmul.f32 %v3256, %v3567
        %v3584 = vmul.f32 %v3257, %v3567
        %v3585 = vmul.f32 %v3258, %v3567
        %v3586 = vmul.f32 %v3259, %v3567
        %v3587 = vmul.f32 %v3260, %v3567
        %v3588 = vmul.f32 %v3261, %v3567
        %v3589 = vmul.f32 %v3262, %v3567
        %v3590 = vmul.f32 %v3263, %v3567
        %v3591 = vmul.f32 %v3264, %v3567
        %v3592 = vmul.f32 %v3265, %v3567
        %v3593 = vmul.f32 %v3266, %v3567
        %v3594 = vmul.f32 %v3267, %v3567
        %v3595 = vmul.f32 %v3268, %v3567
        %v3596 = vmul.f32 %v3269, %v3567
        %v3597 = vmul.f32 %v3270, %v3567
        %v3598 = vmul.f32 %v3271, %v3567
        %v3599 = vmul.f32 %v3272, %v3567
        %v3600 = vmul.f32 %v3273, %v3567
        %v3601 = vmul.f32 %v3274, %v3567
        %v3602 = vmul.f32 %v3275, %v3567
        %v3603 = vmul.f32 %v3276, %v3567
        %v3604 = vmul.f32 %v3277, %v3567
        %v3605 = vmul.f32 %v3278, %v3567
        %v3606 = vmul.f32 %v3279, %v3567
        %v3607 = vmul.f32 %v3280, %v3567
        %v3608 = vmul.f32 %v3281, %v3567
        %v3609 = vmul.f32 %v3282, %v3567
        %v3610 = vmul.f32 %v3283, %v3567
        %v3611 = vmul.f32 %v3284, %v3567
        %v3612 = vmul.f32 %v3285, %v3567
        %v3613 = vmul.f32 %v3286, %v3567
        %v3614 = vmul.f32 %v3287, %v3567
        %v3615 = vmul.f32 %v3288, %v3567
        %v3616 = vmul.f32 %v3289, %v3567
        %v3617 = vmul.f32 %v3290, %v3567
        %v3618 = vmul.f32 %v3291, %v3567
        %v3619 = vmul.f32 %v3292, %v3567
        %v3620 = vmul.f32 %v3293, %v3567
        %v3621 = vmul.f32 %v3294, %v3567
        %v3622 = vmul.f32 %v3295, %v3567
        %v3623 = vmul.f32 %v3296, %v3567
        %v3624 = vmul.f32 %v3297, %v3567
        %v3625 = vmul.f32 %v3298, %v3567
        %v3626 = vmul.f32 %v3299, %v3567
        %v3627 = vmul.f32 %v3300, %v3567
        %v3628 = vmul.f32 %v3301, %v3567
        %v3629 = vmul.f32 %v3302, %v3567
        %v3630 = vmul.f32 %v3303, %v3567
        %v3631 = vmul.f32 %v3304, %v3567
        %v3632 = vmul.f32 %v3305, %v3567
        %v3633 = vmul.f32 %v3306, %v3567
        %v3634 = vmul.f32 %v3307, %v3567
        %v3635 = vmul.f32 %v3308, %v3567
        %v3636 = vmul.f32 %v3309, %v3567
        %v3637 = vmul.f32 %v3310, %v3567
        %v3638 = vmul.f32 %v3311, %v3567
        %v3639 = vmul.f32 %v3312, %v3567
        %3640 = vst [vmem:[%s485] sm:$0xff] %v3568
        %3641 = vst [vmem:[%s485 + $0x8] sm:$0xff] %v3569
        %3642 = vst [vmem:[%s485 + $0x10] sm:$0xff] %v3570
        %3643 = vst [vmem:[%s485 + $0x18] sm:$0xff] %v3571
        %3644 = vst [vmem:[%s485 + $0x20] sm:$0xff] %v3572
        %3645 = vst [vmem:[%s485 + $0x28] sm:$0xff] %v3573
        %3646 = vst [vmem:[%s485 + $0x30] sm:$0xff] %v3574
        %3647 = vst [vmem:[%s485 + $0x38] sm:$0xff] %v3575
        %3648 = vst [vmem:[%s485 + $0x40] sm:$0xff] %v3576
        %3649 = vst [vmem:[%s485 + $0x48] sm:$0xff] %v3577
        %3650 = vst [vmem:[%s485 + $0x50] sm:$0xff] %v3578
        %3651 = vst [vmem:[%s485 + $0x58] sm:$0xff] %v3579
        %3652 = vst [vmem:[%s485 + $0x60] sm:$0xff] %v3580
        %3653 = vst [vmem:[%s485 + $0x68] sm:$0xff] %v3581
        %3654 = vst [vmem:[%s485 + $0x70] sm:$0xff] %v3582
        %3655 = vst [vmem:[%s485 + $0x78] sm:$0xff] %v3583
        %3656 = vst [vmem:[%s485 + $0x80] sm:$0xff] %v3584
        %3657 = vst [vmem:[%s485 + $0x88] sm:$0xff] %v3585
        %3658 = vst [vmem:[%s485 + $0x90] sm:$0xff] %v3586
        %3659 = vst [vmem:[%s485 + $0x98] sm:$0xff] %v3587
        %3660 = vst [vmem:[%s485 + $0xa0] sm:$0xff] %v3588
        %3661 = vst [vmem:[%s485 + $0xa8] sm:$0xff] %v3589
        %3662 = vst [vmem:[%s485 + $0xb0] sm:$0xff] %v3590
        %3663 = vst [vmem:[%s485 + $0xb8] sm:$0xff] %v3591
        %3664 = vst [vmem:[%s485 + $0xc0] sm:$0xff] %v3592
        %3665 = vst [vmem:[%s485 + $0xc8] sm:$0xff] %v3593
        %3666 = vst [vmem:[%s485 + $0xd0] sm:$0xff] %v3594
        %3667 = vst [vmem:[%s485 + $0xd8] sm:$0xff] %v3595
        %3668 = vst [vmem:[%s485 + $0xe0] sm:$0xff] %v3596
        %3669 = vst [vmem:[%s485 + $0xe8] sm:$0xff] %v3597
        %3670 = vst [vmem:[%s485 + $0xf0] sm:$0xff] %v3598
        %3671 = vst [vmem:[%s485 + $0xf8] sm:$0xff] %v3599
        %3672 = vst [vmem:[%s485 + $0x100] sm:$0xff] %v3600
        %3673 = vst [vmem:[%s485 + $0x108] sm:$0xff] %v3601
        %3674 = vst [vmem:[%s485 + $0x110] sm:$0xff] %v3602
        %3675 = vst [vmem:[%s485 + $0x118] sm:$0xff] %v3603
        %3676 = vst [vmem:[%s485 + $0x120] sm:$0xff] %v3604
        %3677 = vst [vmem:[%s485 + $0x128] sm:$0xff] %v3605
        %3678 = vst [vmem:[%s485 + $0x130] sm:$0xff] %v3606
        %3679 = vst [vmem:[%s485 + $0x138] sm:$0xff] %v3607
        %3680 = vst [vmem:[%s485 + $0x140] sm:$0xff] %v3608
        %3681 = vst [vmem:[%s485 + $0x148] sm:$0xff] %v3609
        %3682 = vst [vmem:[%s485 + $0x150] sm:$0xff] %v3610
        %3683 = vst [vmem:[%s485 + $0x158] sm:$0xff] %v3611
        %3684 = vst [vmem:[%s485 + $0x160] sm:$0xff] %v3612
        %3685 = vst [vmem:[%s485 + $0x168] sm:$0xff] %v3613
        %3686 = vst [vmem:[%s485 + $0x170] sm:$0xff] %v3614
        %3687 = vst [vmem:[%s485 + $0x178] sm:$0xff] %v3615
        %3688 = vst [vmem:[%s485 + $0x180] sm:$0xff] %v3616
        %3689 = vst [vmem:[%s485 + $0x188] sm:$0xff] %v3617
        %3690 = vst [vmem:[%s485 + $0x190] sm:$0xff] %v3618
        %3691 = vst [vmem:[%s485 + $0x198] sm:$0xff] %v3619
        %3692 = vst [vmem:[%s485 + $0x1a0] sm:$0xff] %v3620
        %3693 = vst [vmem:[%s485 + $0x1a8] sm:$0xff] %v3621
        %3694 = vst [vmem:[%s485 + $0x1b0] sm:$0xff] %v3622
        %3695 = vst [vmem:[%s485 + $0x1b8] sm:$0xff] %v3623
        %3696 = vst [vmem:[%s485 + $0x1c0] sm:$0xff] %v3624
        %3697 = vst [vmem:[%s485 + $0x1c8] sm:$0xff] %v3625
        %3698 = vst [vmem:[%s485 + $0x1d0] sm:$0xff] %v3626
        %3699 = vst [vmem:[%s485 + $0x1d8] sm:$0xff] %v3627
        %3700 = vst [vmem:[%s485 + $0x1e0] sm:$0xff] %v3628
        %3701 = vst [vmem:[%s485 + $0x1e8] sm:$0xff] %v3629
        %3702 = vst [vmem:[%s485 + $0x1f0] sm:$0xff] %v3630
        %3703 = vst [vmem:[%s485 + $0x1f8] sm:$0xff] %v3631
        %3704 = vst [vmem:[%s485 + $0x200] sm:$0xff] %v3632
        %3705 = vst [vmem:[%s485 + $0x208] sm:$0xff] %v3633
        %3706 = vst [vmem:[%s485 + $0x210] sm:$0xff] %v3634
        %3707 = vst [vmem:[%s485 + $0x218] sm:$0xff] %v3635
        %3708 = vst [vmem:[%s485 + $0x220] sm:$0xff] %v3636
        %3709 = vst [vmem:[%s485 + $0x228] sm:$0xff] %v3637
        %3710 = vst [vmem:[%s485 + $0x230] sm:$0xff] %v3638
        %3711 = vst [vmem:[%s485 + $0x238] sm:$0xff] %v3639
        %v3712 = vld [vmem:[%s429] sm:$0xff]
        %v3713 = vld [vmem:[%s429 + $0x8] sm:$0xff]
        %v3714 = vld [vmem:[%s429 + $0x10] sm:$0xff]
        %v3715 = vld [vmem:[%s429 + $0x18] sm:$0xff]
        %v3716 = vld [vmem:[%s429 + $0x20] sm:$0xff]
        %v3717 = vld [vmem:[%s429 + $0x28] sm:$0xff]
        %v3718 = vld [vmem:[%s429 + $0x30] sm:$0xff]
        %v3719 = vld [vmem:[%s429 + $0x38] sm:$0xff]
        %v3720 = vld [vmem:[%s429 + $0x40] sm:$0xff]
        %v3721 = vld [vmem:[%s429 + $0x48] sm:$0xff]
        %v3722 = vld [vmem:[%s429 + $0x50] sm:$0xff]
        %v3723 = vld [vmem:[%s429 + $0x58] sm:$0xff]
        %v3724 = vld [vmem:[%s429 + $0x60] sm:$0xff]
        %v3725 = vld [vmem:[%s429 + $0x68] sm:$0xff]
        %v3726 = vld [vmem:[%s429 + $0x70] sm:$0xff]
        %v3727 = vld [vmem:[%s429 + $0x78] sm:$0xff]
        %v3728 = vld [vmem:[%s429 + $0x80] sm:$0xff]
        %v3729 = vld [vmem:[%s429 + $0x88] sm:$0xff]
        %v3730 = vld [vmem:[%s429 + $0x90] sm:$0xff]
        %v3731 = vld [vmem:[%s429 + $0x98] sm:$0xff]
        %v3732 = vld [vmem:[%s429 + $0xa0] sm:$0xff]
        %v3733 = vld [vmem:[%s429 + $0xa8] sm:$0xff]
        %v3734 = vld [vmem:[%s429 + $0xb0] sm:$0xff]
        %v3735 = vld [vmem:[%s429 + $0xb8] sm:$0xff]
        %v3736 = vld [vmem:[%s429 + $0xc0] sm:$0xff]
        %v3737 = vld [vmem:[%s429 + $0xc8] sm:$0xff]
        %v3738 = vld [vmem:[%s429 + $0xd0] sm:$0xff]
        %v3739 = vld [vmem:[%s429 + $0xd8] sm:$0xff]
        %v3740 = vld [vmem:[%s429 + $0xe0] sm:$0xff]
        %v3741 = vld [vmem:[%s429 + $0xe8] sm:$0xff]
        %v3742 = vld [vmem:[%s429 + $0xf0] sm:$0xff]
        %v3743 = vld [vmem:[%s429 + $0xf8] sm:$0xff]
        %v3744 = vld [vmem:[%s429 + $0x100] sm:$0xff]
        %v3745 = vld [vmem:[%s429 + $0x108] sm:$0xff]
        %v3746 = vld [vmem:[%s429 + $0x110] sm:$0xff]
        %v3747 = vld [vmem:[%s429 + $0x118] sm:$0xff]
        %v3748 = vld [vmem:[%s429 + $0x120] sm:$0xff]
        %v3749 = vld [vmem:[%s429 + $0x128] sm:$0xff]
        %v3750 = vld [vmem:[%s429 + $0x130] sm:$0xff]
        %v3751 = vld [vmem:[%s429 + $0x138] sm:$0xff]
        %v3752 = vld [vmem:[%s429 + $0x140] sm:$0xff]
        %v3753 = vld [vmem:[%s429 + $0x148] sm:$0xff]
        %v3754 = vld [vmem:[%s429 + $0x150] sm:$0xff]
        %v3755 = vld [vmem:[%s429 + $0x158] sm:$0xff]
        %v3756 = vld [vmem:[%s429 + $0x160] sm:$0xff]
        %v3757 = vld [vmem:[%s429 + $0x168] sm:$0xff]
        %v3758 = vld [vmem:[%s429 + $0x170] sm:$0xff]
        %v3759 = vld [vmem:[%s429 + $0x178] sm:$0xff]
        %v3760 = vld [vmem:[%s429 + $0x180] sm:$0xff]
        %v3761 = vld [vmem:[%s429 + $0x188] sm:$0xff]
        %v3762 = vld [vmem:[%s429 + $0x190] sm:$0xff]
        %v3763 = vld [vmem:[%s429 + $0x198] sm:$0xff]
        %v3764 = vld [vmem:[%s429 + $0x1a0] sm:$0xff]
        %v3765 = vld [vmem:[%s429 + $0x1a8] sm:$0xff]
        %v3766 = vld [vmem:[%s429 + $0x1b0] sm:$0xff]
        %v3767 = vld [vmem:[%s429 + $0x1b8] sm:$0xff]
        %v3768 = vld [vmem:[%s429 + $0x1c0] sm:$0xff]
        %v3769 = vld [vmem:[%s429 + $0x1c8] sm:$0xff]
        %v3770 = vld [vmem:[%s429 + $0x1d0] sm:$0xff]
        %v3771 = vld [vmem:[%s429 + $0x1d8] sm:$0xff]
        %v3772 = vld [vmem:[%s429 + $0x1e0] sm:$0xff]
        %v3773 = vld [vmem:[%s429 + $0x1e8] sm:$0xff]
        %v3774 = vld [vmem:[%s429 + $0x1f0] sm:$0xff]
        %v3775 = vld [vmem:[%s429 + $0x1f8] sm:$0xff]
        %v3776 = vld [vmem:[%s429 + $0x200] sm:$0xff]
        %v3777 = vld [vmem:[%s429 + $0x208] sm:$0xff]
        %v3778 = vld [vmem:[%s429 + $0x210] sm:$0xff]
        %v3779 = vld [vmem:[%s429 + $0x218] sm:$0xff]
        %v3780 = vld [vmem:[%s429 + $0x220] sm:$0xff]
        %v3781 = vld [vmem:[%s429 + $0x228] sm:$0xff]
        %v3782 = vld [vmem:[%s429 + $0x230] sm:$0xff]
        %v3783 = vld [vmem:[%s429 + $0x238] sm:$0xff]
        %v3784 = vpack.c.bf16 %v3713, %v3712
        %v3785 = vpack.c.bf16 %v3715, %v3714
        %v3786 = vpack.c.bf16 %v3717, %v3716
        %v3787 = vpack.c.bf16 %v3719, %v3718
        %v3788 = vpack.c.bf16 %v3721, %v3720
        %v3789 = vpack.c.bf16 %v3723, %v3722
        %v3790 = vpack.c.bf16 %v3725, %v3724
        %v3791 = vpack.c.bf16 %v3727, %v3726
        %v3792 = vpack.c.bf16 %v3729, %v3728
        %v3793 = vpack.c.bf16 %v3731, %v3730
        %v3794 = vpack.c.bf16 %v3733, %v3732
        %v3795 = vpack.c.bf16 %v3735, %v3734
        %v3796 = vpack.c.bf16 %v3737, %v3736
        %v3797 = vpack.c.bf16 %v3739, %v3738
        %v3798 = vpack.c.bf16 %v3741, %v3740
        %v3799 = vpack.c.bf16 %v3743, %v3742
        %v3800 = vpack.c.bf16 %v3745, %v3744
        %v3801 = vpack.c.bf16 %v3747, %v3746
        %v3802 = vpack.c.bf16 %v3749, %v3748
        %v3803 = vpack.c.bf16 %v3751, %v3750
        %v3804 = vpack.c.bf16 %v3753, %v3752
        %v3805 = vpack.c.bf16 %v3755, %v3754
        %v3806 = vpack.c.bf16 %v3757, %v3756
        %v3807 = vpack.c.bf16 %v3759, %v3758
        %v3808 = vpack.c.bf16 %v3761, %v3760
        %v3809 = vpack.c.bf16 %v3763, %v3762
        %v3810 = vpack.c.bf16 %v3765, %v3764
        %v3811 = vpack.c.bf16 %v3767, %v3766
        %v3812 = vpack.c.bf16 %v3769, %v3768
        %v3813 = vpack.c.bf16 %v3771, %v3770
        %v3814 = vpack.c.bf16 %v3773, %v3772
        %v3815 = vpack.c.bf16 %v3775, %v3774
        %v3816 = vpack.c.bf16 %v3777, %v3776
        %v3817 = vpack.c.bf16 %v3779, %v3778
        %v3818 = vpack.c.bf16 %v3781, %v3780
        %v3819 = vpack.c.bf16 %v3783, %v3782
        %s3820 = scalar_lea.vmem %s5, 128
        %v3821 = vld [vmem:[%s3820] sm:$0xf]
        %v3822 = vld [vmem:[%s3820 + $0x4] sm:$0xf]
        %v3823 = vld [vmem:[%s3820 + $0x8] sm:$0xf]
        %v3824 = vld [vmem:[%s3820 + $0xc] sm:$0xf]
        %v3825 = vld [vmem:[%s3820 + $0x10] sm:$0xf]
        %v3826 = vld [vmem:[%s3820 + $0x14] sm:$0xf]
        %v3827 = vld [vmem:[%s3820 + $0x18] sm:$0xf]
        %v3828 = vld [vmem:[%s3820 + $0x1c] sm:$0xf]
        %v3829 = vld [vmem:[%s3820 + $0x20] sm:$0xf]
        %v3830 = vld [vmem:[%s3820 + $0x24] sm:$0xf]
        %v3831 = vld [vmem:[%s3820 + $0x28] sm:$0xf]
        %v3832 = vld [vmem:[%s3820 + $0x2c] sm:$0xf]
        %v3833 = vld [vmem:[%s3820 + $0x30] sm:$0xf]
        %v3834 = vld [vmem:[%s3820 + $0x34] sm:$0xf]
        %v3835 = vld [vmem:[%s3820 + $0x38] sm:$0xf]
        %v3836 = vld [vmem:[%s3820 + $0x3c] sm:$0xf]
        %v3853 = vunpack.c.l.b16 %v3821
        %v3854 = vunpack.c.l.b16 %v3822
        %v3855 = vunpack.c.l.b16 %v3823
        %v3856 = vunpack.c.l.b16 %v3824
        %v3857 = vunpack.c.l.b16 %v3825
        %v3858 = vunpack.c.l.b16 %v3826
        %v3859 = vunpack.c.l.b16 %v3827
        %v3860 = vunpack.c.l.b16 %v3828
        %v3861 = vunpack.c.l.b16 %v3829
        %v3862 = vunpack.c.l.b16 %v3830
        %v3863 = vunpack.c.l.b16 %v3831
        %v3864 = vunpack.c.l.b16 %v3832
        %v3865 = vunpack.c.l.b16 %v3833
        %v3866 = vunpack.c.l.b16 %v3834
        %v3867 = vunpack.c.l.b16 %v3835
        %v3868 = vunpack.c.l.b16 %v3836
        %v3869 = vpack.c.b16 %v3854, %v3853
        %v3870 = vpack.c.b16 %v3856, %v3855
        %v3871 = vpack.c.b16 %v3858, %v3857
        %v3872 = vpack.c.b16 %v3860, %v3859
        %v3873 = vpack.c.b16 %v3862, %v3861
        %v3874 = vpack.c.b16 %v3864, %v3863
        %v3875 = vpack.c.b16 %v3866, %v3865
        %v3876 = vpack.c.b16 %v3868, %v3867
        %3885 = vmatprep.subr.bf16.mxu0 0
        %3886 = vmatpush1.bf16.msra.mxu0 %v3876
        %3887 = vmatprep.subr.bf16.mxu0 0
        %3888 = vmatpush1.bf16.msra.mxu0 %v3875
        %3889 = vmatprep.subr.bf16.mxu0 0
        %3890 = vmatpush1.bf16.msra.mxu0 %v3874
        %3891 = vmatprep.subr.bf16.mxu0 0
        %3892 = vmatpush1.bf16.msra.mxu0 %v3873
        %3893 = vmatprep.subr.bf16.mxu0 0
        %3894 = vmatpush1.bf16.msra.mxu0 %v3872
        %3895 = vmatprep.subr.bf16.mxu0 0
        %3896 = vmatpush1.bf16.msra.mxu0 %v3871
        %3897 = vmatprep.subr.bf16.mxu0 0
        %3898 = vmatpush1.bf16.msra.mxu0 %v3870
        %3899 = vmatprep.subr.bf16.mxu0 0
        %3900 = vmatpush1.bf16.msra.mxu0 %v3869
        %3901 = vmatprep.subr.bf16.mxu0 0
        %3902 = vmatpush2.bf16.msra.mxu0 0
        %3903 = vmatprep.subr.bf16.mxu0 0
        %3904 = vmatpush2.bf16.msra.mxu0 0
        %3905 = vmatprep.subr.bf16.mxu0 0
        %3906 = vmatpush2.bf16.msra.mxu0 0
        %3907 = vmatprep.subr.bf16.mxu0 0
        %3908 = vmatpush2.bf16.msra.mxu0 0
        %3909 = vmatprep.subr.bf16.mxu0 0
        %3910 = vmatpush2.bf16.msra.mxu0 0
        %3911 = vmatprep.subr.bf16.mxu0 0
        %3912 = vmatpush2.bf16.msra.mxu0 0
        %3913 = vmatprep.subr.bf16.mxu0 0
        %3914 = vmatpush2.bf16.msra.mxu0 0
        %3915 = vmatprep.subr.bf16.mxu0 0
        %3916 = vmatpush2.bf16.msra.mxu0 0
        %3917 = vmatprep.mubr.bf16.mxu0 0
        %3918 = vmatmul.mubr.bf16.gmra.mxu0 %v3784
        %v3919 = vpop.f32.mrf.mxu0
        %v3920 = vadd.f32 0.0, %v3919
        %v3921 = vpop.f32.mrf.mxu0
        %v3922 = vpop.f32.mrf.mxu0
        %v3923 = vadd.f32 0.0, %v3922
        %v3924 = vpop.f32.mrf.mxu0
        %3925 = vmatprep.mubr.bf16.mxu0 0
        %3926 = vmatmul.mubr.bf16.gmra.mxu0 %v3785
        %v3927 = vpop.f32.mrf.mxu0
        %v3928 = vadd.f32 0.0, %v3927
        %v3929 = vpop.f32.mrf.mxu0
        %v3930 = vpop.f32.mrf.mxu0
        %v3931 = vadd.f32 0.0, %v3930
        %v3932 = vpop.f32.mrf.mxu0
        %3933 = vmatprep.mubr.bf16.mxu0 0
        %3934 = vmatmul.mubr.bf16.gmra.mxu0 %v3786
        %v3935 = vpop.f32.mrf.mxu0
        %v3936 = vadd.f32 0.0, %v3935
        %v3937 = vpop.f32.mrf.mxu0
        %v3938 = vpop.f32.mrf.mxu0
        %v3939 = vadd.f32 0.0, %v3938
        %v3940 = vpop.f32.mrf.mxu0
        %3941 = vmatprep.mubr.bf16.mxu0 0
        %3942 = vmatmul.mubr.bf16.gmra.mxu0 %v3787
        %v3943 = vpop.f32.mrf.mxu0
        %v3944 = vadd.f32 0.0, %v3943
        %v3945 = vpop.f32.mrf.mxu0
        %v3946 = vpop.f32.mrf.mxu0
        %v3947 = vadd.f32 0.0, %v3946
        %v3948 = vpop.f32.mrf.mxu0
        %3949 = vmatprep.mubr.bf16.mxu0 0
        %3950 = vmatmul.mubr.bf16.gmra.mxu0 %v3788
        %v3951 = vpop.f32.mrf.mxu0
        %v3952 = vadd.f32 0.0, %v3951
        %v3953 = vpop.f32.mrf.mxu0
        %v3954 = vpop.f32.mrf.mxu0
        %v3955 = vadd.f32 0.0, %v3954
        %v3956 = vpop.f32.mrf.mxu0
        %3957 = vmatprep.mubr.bf16.mxu0 0
        %3958 = vmatmul.mubr.bf16.gmra.mxu0 %v3789
        %v3959 = vpop.f32.mrf.mxu0
        %v3960 = vadd.f32 0.0, %v3959
        %v3961 = vpop.f32.mrf.mxu0
        %v3962 = vpop.f32.mrf.mxu0
        %v3963 = vadd.f32 0.0, %v3962
        %v3964 = vpop.f32.mrf.mxu0
        %3965 = vmatprep.mubr.bf16.mxu0 0
        %3966 = vmatmul.mubr.bf16.gmra.mxu0 %v3790
        %v3967 = vpop.f32.mrf.mxu0
        %v3968 = vadd.f32 0.0, %v3967
        %v3969 = vpop.f32.mrf.mxu0
        %v3970 = vpop.f32.mrf.mxu0
        %v3971 = vadd.f32 0.0, %v3970
        %v3972 = vpop.f32.mrf.mxu0
        %3973 = vmatprep.mubr.bf16.mxu0 0
        %3974 = vmatmul.mubr.bf16.gmra.mxu0 %v3791
        %v3975 = vpop.f32.mrf.mxu0
        %v3976 = vadd.f32 0.0, %v3975
        %v3977 = vpop.f32.mrf.mxu0
        %v3978 = vpop.f32.mrf.mxu0
        %v3979 = vadd.f32 0.0, %v3978
        %v3980 = vpop.f32.mrf.mxu0
        %3981 = vmatprep.mubr.bf16.mxu0 0
        %3982 = vmatmul.mubr.bf16.gmra.mxu0 %v3792
        %v3983 = vpop.f32.mrf.mxu0
        %v3984 = vadd.f32 0.0, %v3983
        %v3985 = vpop.f32.mrf.mxu0
        %v3986 = vpop.f32.mrf.mxu0
        %v3987 = vadd.f32 0.0, %v3986
        %v3988 = vpop.f32.mrf.mxu0
        %3989 = vmatprep.mubr.bf16.mxu0 0
        %3990 = vmatmul.mubr.bf16.gmra.mxu0 %v3793
        %v3991 = vpop.f32.mrf.mxu0
        %v3992 = vadd.f32 0.0, %v3991
        %v3993 = vpop.f32.mrf.mxu0
        %v3994 = vpop.f32.mrf.mxu0
        %v3995 = vadd.f32 0.0, %v3994
        %v3996 = vpop.f32.mrf.mxu0
        %3997 = vmatprep.mubr.bf16.mxu0 0
        %3998 = vmatmul.mubr.bf16.gmra.mxu0 %v3794
        %v3999 = vpop.f32.mrf.mxu0
        %v4000 = vadd.f32 0.0, %v3999
        %v4001 = vpop.f32.mrf.mxu0
        %v4002 = vpop.f32.mrf.mxu0
        %v4003 = vadd.f32 0.0, %v4002
        %v4004 = vpop.f32.mrf.mxu0
        %4005 = vmatprep.mubr.bf16.mxu0 0
        %4006 = vmatmul.mubr.bf16.gmra.mxu0 %v3795
        %v4007 = vpop.f32.mrf.mxu0
        %v4008 = vadd.f32 0.0, %v4007
        %v4009 = vpop.f32.mrf.mxu0
        %v4010 = vpop.f32.mrf.mxu0
        %v4011 = vadd.f32 0.0, %v4010
        %v4012 = vpop.f32.mrf.mxu0
        %4013 = vmatprep.mubr.bf16.mxu0 0
        %4014 = vmatmul.mubr.bf16.gmra.mxu0 %v3796
        %v4015 = vpop.f32.mrf.mxu0
        %v4016 = vadd.f32 0.0, %v4015
        %v4017 = vpop.f32.mrf.mxu0
        %v4018 = vpop.f32.mrf.mxu0
        %v4019 = vadd.f32 0.0, %v4018
        %v4020 = vpop.f32.mrf.mxu0
        %4021 = vmatprep.mubr.bf16.mxu0 0
        %4022 = vmatmul.mubr.bf16.gmra.mxu0 %v3797
        %v4023 = vpop.f32.mrf.mxu0
        %v4024 = vadd.f32 0.0, %v4023
        %v4025 = vpop.f32.mrf.mxu0
        %v4026 = vpop.f32.mrf.mxu0
        %v4027 = vadd.f32 0.0, %v4026
        %v4028 = vpop.f32.mrf.mxu0
        %4029 = vmatprep.mubr.bf16.mxu0 0
        %4030 = vmatmul.mubr.bf16.gmra.mxu0 %v3798
        %v4031 = vpop.f32.mrf.mxu0
        %v4032 = vadd.f32 0.0, %v4031
        %v4033 = vpop.f32.mrf.mxu0
        %v4034 = vpop.f32.mrf.mxu0
        %v4035 = vadd.f32 0.0, %v4034
        %v4036 = vpop.f32.mrf.mxu0
        %4037 = vmatprep.mubr.bf16.mxu0 0
        %4038 = vmatmul.mubr.bf16.gmra.mxu0 %v3799
        %v4039 = vpop.f32.mrf.mxu0
        %v4040 = vadd.f32 0.0, %v4039
        %v4041 = vpop.f32.mrf.mxu0
        %v4042 = vpop.f32.mrf.mxu0
        %v4043 = vadd.f32 0.0, %v4042
        %v4044 = vpop.f32.mrf.mxu0
        %4045 = vmatprep.mubr.bf16.mxu0 0
        %4046 = vmatmul.mubr.bf16.gmra.mxu0 %v3800
        %v4047 = vpop.f32.mrf.mxu0
        %v4048 = vadd.f32 0.0, %v4047
        %v4049 = vpop.f32.mrf.mxu0
        %v4050 = vpop.f32.mrf.mxu0
        %v4051 = vadd.f32 0.0, %v4050
        %v4052 = vpop.f32.mrf.mxu0
        %4053 = vmatprep.mubr.bf16.mxu0 0
        %4054 = vmatmul.mubr.bf16.gmra.mxu0 %v3801
        %v4055 = vpop.f32.mrf.mxu0
        %v4056 = vadd.f32 0.0, %v4055
        %v4057 = vpop.f32.mrf.mxu0
        %v4058 = vpop.f32.mrf.mxu0
        %v4059 = vadd.f32 0.0, %v4058
        %v4060 = vpop.f32.mrf.mxu0
        %4061 = vmatprep.mubr.bf16.mxu0 0
        %4062 = vmatmul.mubr.bf16.gmra.mxu0 %v3802
        %v4063 = vpop.f32.mrf.mxu0
        %v4064 = vadd.f32 0.0, %v4063
        %v4065 = vpop.f32.mrf.mxu0
        %v4066 = vpop.f32.mrf.mxu0
        %v4067 = vadd.f32 0.0, %v4066
        %v4068 = vpop.f32.mrf.mxu0
        %4069 = vmatprep.mubr.bf16.mxu0 0
        %4070 = vmatmul.mubr.bf16.gmra.mxu0 %v3803
        %v4071 = vpop.f32.mrf.mxu0
        %v4072 = vadd.f32 0.0, %v4071
        %v4073 = vpop.f32.mrf.mxu0
        %v4074 = vpop.f32.mrf.mxu0
        %v4075 = vadd.f32 0.0, %v4074
        %v4076 = vpop.f32.mrf.mxu0
        %4077 = vmatprep.mubr.bf16.mxu0 0
        %4078 = vmatmul.mubr.bf16.gmra.mxu0 %v3804
        %v4079 = vpop.f32.mrf.mxu0
        %v4080 = vadd.f32 0.0, %v4079
        %v4081 = vpop.f32.mrf.mxu0
        %v4082 = vpop.f32.mrf.mxu0
        %v4083 = vadd.f32 0.0, %v4082
        %v4084 = vpop.f32.mrf.mxu0
        %4085 = vmatprep.mubr.bf16.mxu0 0
        %4086 = vmatmul.mubr.bf16.gmra.mxu0 %v3805
        %v4087 = vpop.f32.mrf.mxu0
        %v4088 = vadd.f32 0.0, %v4087
        %v4089 = vpop.f32.mrf.mxu0
        %v4090 = vpop.f32.mrf.mxu0
        %v4091 = vadd.f32 0.0, %v4090
        %v4092 = vpop.f32.mrf.mxu0
        %4093 = vmatprep.mubr.bf16.mxu0 0
        %4094 = vmatmul.mubr.bf16.gmra.mxu0 %v3806
        %v4095 = vpop.f32.mrf.mxu0
        %v4096 = vadd.f32 0.0, %v4095
        %v4097 = vpop.f32.mrf.mxu0
        %v4098 = vpop.f32.mrf.mxu0
        %v4099 = vadd.f32 0.0, %v4098
        %v4100 = vpop.f32.mrf.mxu0
        %4101 = vmatprep.mubr.bf16.mxu0 0
        %4102 = vmatmul.mubr.bf16.gmra.mxu0 %v3807
        %v4103 = vpop.f32.mrf.mxu0
        %v4104 = vadd.f32 0.0, %v4103
        %v4105 = vpop.f32.mrf.mxu0
        %v4106 = vpop.f32.mrf.mxu0
        %v4107 = vadd.f32 0.0, %v4106
        %v4108 = vpop.f32.mrf.mxu0
        %4109 = vmatprep.mubr.bf16.mxu0 0
        %4110 = vmatmul.mubr.bf16.gmra.mxu0 %v3808
        %v4111 = vpop.f32.mrf.mxu0
        %v4112 = vadd.f32 0.0, %v4111
        %v4113 = vpop.f32.mrf.mxu0
        %v4114 = vpop.f32.mrf.mxu0
        %v4115 = vadd.f32 0.0, %v4114
        %v4116 = vpop.f32.mrf.mxu0
        %4117 = vmatprep.mubr.bf16.mxu0 0
        %4118 = vmatmul.mubr.bf16.gmra.mxu0 %v3809
        %v4119 = vpop.f32.mrf.mxu0
        %v4120 = vadd.f32 0.0, %v4119
        %v4121 = vpop.f32.mrf.mxu0
        %v4122 = vpop.f32.mrf.mxu0
        %v4123 = vadd.f32 0.0, %v4122
        %v4124 = vpop.f32.mrf.mxu0
        %4125 = vmatprep.mubr.bf16.mxu0 0
        %4126 = vmatmul.mubr.bf16.gmra.mxu0 %v3810
        %v4127 = vpop.f32.mrf.mxu0
        %v4128 = vadd.f32 0.0, %v4127
        %v4129 = vpop.f32.mrf.mxu0
        %v4130 = vpop.f32.mrf.mxu0
        %v4131 = vadd.f32 0.0, %v4130
        %v4132 = vpop.f32.mrf.mxu0
        %4133 = vmatprep.mubr.bf16.mxu0 0
        %4134 = vmatmul.mubr.bf16.gmra.mxu0 %v3811
        %v4135 = vpop.f32.mrf.mxu0
        %v4136 = vadd.f32 0.0, %v4135
        %v4137 = vpop.f32.mrf.mxu0
        %v4138 = vpop.f32.mrf.mxu0
        %v4139 = vadd.f32 0.0, %v4138
        %v4140 = vpop.f32.mrf.mxu0
        %4141 = vmatprep.mubr.bf16.mxu0 0
        %4142 = vmatmul.mubr.bf16.gmra.mxu0 %v3812
        %v4143 = vpop.f32.mrf.mxu0
        %v4144 = vadd.f32 0.0, %v4143
        %v4145 = vpop.f32.mrf.mxu0
        %v4146 = vpop.f32.mrf.mxu0
        %v4147 = vadd.f32 0.0, %v4146
        %v4148 = vpop.f32.mrf.mxu0
        %4149 = vmatprep.mubr.bf16.mxu0 0
        %4150 = vmatmul.mubr.bf16.gmra.mxu0 %v3813
        %v4151 = vpop.f32.mrf.mxu0
        %v4152 = vadd.f32 0.0, %v4151
        %v4153 = vpop.f32.mrf.mxu0
        %v4154 = vpop.f32.mrf.mxu0
        %v4155 = vadd.f32 0.0, %v4154
        %v4156 = vpop.f32.mrf.mxu0
        %4157 = vmatprep.mubr.bf16.mxu0 0
        %4158 = vmatmul.mubr.bf16.gmra.mxu0 %v3814
        %v4159 = vpop.f32.mrf.mxu0
        %v4160 = vadd.f32 0.0, %v4159
        %v4161 = vpop.f32.mrf.mxu0
        %v4162 = vpop.f32.mrf.mxu0
        %v4163 = vadd.f32 0.0, %v4162
        %v4164 = vpop.f32.mrf.mxu0
        %4165 = vmatprep.mubr.bf16.mxu0 0
        %4166 = vmatmul.mubr.bf16.gmra.mxu0 %v3815
        %v4167 = vpop.f32.mrf.mxu0
        %v4168 = vadd.f32 0.0, %v4167
        %v4169 = vpop.f32.mrf.mxu0
        %v4170 = vpop.f32.mrf.mxu0
        %v4171 = vadd.f32 0.0, %v4170
        %v4172 = vpop.f32.mrf.mxu0
        %4173 = vmatprep.mubr.bf16.mxu0 0
        %4174 = vmatmul.mubr.bf16.gmra.mxu0 %v3816
        %v4175 = vpop.f32.mrf.mxu0
        %v4176 = vadd.f32 0.0, %v4175
        %v4177 = vpop.f32.mrf.mxu0
        %v4178 = vpop.f32.mrf.mxu0
        %v4179 = vadd.f32 0.0, %v4178
        %v4180 = vpop.f32.mrf.mxu0
        %4181 = vmatprep.mubr.bf16.mxu0 0
        %4182 = vmatmul.mubr.bf16.gmra.mxu0 %v3817
        %v4183 = vpop.f32.mrf.mxu0
        %v4184 = vadd.f32 0.0, %v4183
        %v4185 = vpop.f32.mrf.mxu0
        %v4186 = vpop.f32.mrf.mxu0
        %v4187 = vadd.f32 0.0, %v4186
        %v4188 = vpop.f32.mrf.mxu0
        %4189 = vmatprep.mubr.bf16.mxu0 0
        %4190 = vmatmul.mubr.bf16.gmra.mxu0 %v3818
        %v4191 = vpop.f32.mrf.mxu0
        %v4192 = vadd.f32 0.0, %v4191
        %v4193 = vpop.f32.mrf.mxu0
        %v4194 = vpop.f32.mrf.mxu0
        %v4195 = vadd.f32 0.0, %v4194
        %v4196 = vpop.f32.mrf.mxu0
        %4197 = vmatprep.mubr.bf16.mxu0 0
        %4198 = vmatmul.mubr.bf16.gmra.mxu0 %v3819
        %v4199 = vpop.f32.mrf.mxu0
        %v4200 = vadd.f32 0.0, %v4199
        %v4201 = vpop.f32.mrf.mxu0
        %v4202 = vpop.f32.mrf.mxu0
        %v4203 = vadd.f32 0.0, %v4202
        %v4204 = vpop.f32.mrf.mxu0
        %4205 = vdwg.mxu0
        %v4206 = vadd.f32 %v1200, %v3920
        %v4207 = vadd.f32 %v1203, %v3923
        %v4208 = vadd.f32 %v1208, %v3928
        %v4209 = vadd.f32 %v1211, %v3931
        %v4210 = vadd.f32 %v1216, %v3936
        %v4211 = vadd.f32 %v1219, %v3939
        %v4212 = vadd.f32 %v1224, %v3944
        %v4213 = vadd.f32 %v1227, %v3947
        %v4214 = vadd.f32 %v1232, %v3952
        %v4215 = vadd.f32 %v1235, %v3955
        %v4216 = vadd.f32 %v1240, %v3960
        %v4217 = vadd.f32 %v1243, %v3963
        %v4218 = vadd.f32 %v1248, %v3968
        %v4219 = vadd.f32 %v1251, %v3971
        %v4220 = vadd.f32 %v1256, %v3976
        %v4221 = vadd.f32 %v1259, %v3979
        %v4222 = vadd.f32 %v1264, %v3984
        %v4223 = vadd.f32 %v1267, %v3987
        %v4224 = vadd.f32 %v1272, %v3992
        %v4225 = vadd.f32 %v1275, %v3995
        %v4226 = vadd.f32 %v1280, %v4000
        %v4227 = vadd.f32 %v1283, %v4003
        %v4228 = vadd.f32 %v1288, %v4008
        %v4229 = vadd.f32 %v1291, %v4011
        %v4230 = vadd.f32 %v1296, %v4016
        %v4231 = vadd.f32 %v1299, %v4019
        %v4232 = vadd.f32 %v1304, %v4024
        %v4233 = vadd.f32 %v1307, %v4027
        %v4234 = vadd.f32 %v1312, %v4032
        %v4235 = vadd.f32 %v1315, %v4035
        %v4236 = vadd.f32 %v1320, %v4040
        %v4237 = vadd.f32 %v1323, %v4043
        %v4238 = vadd.f32 %v1328, %v4048
        %v4239 = vadd.f32 %v1331, %v4051
        %v4240 = vadd.f32 %v1336, %v4056
        %v4241 = vadd.f32 %v1339, %v4059
        %v4242 = vadd.f32 %v1344, %v4064
        %v4243 = vadd.f32 %v1347, %v4067
        %v4244 = vadd.f32 %v1352, %v4072
        %v4245 = vadd.f32 %v1355, %v4075
        %v4246 = vadd.f32 %v1360, %v4080
        %v4247 = vadd.f32 %v1363, %v4083
        %v4248 = vadd.f32 %v1368, %v4088
        %v4249 = vadd.f32 %v1371, %v4091
        %v4250 = vadd.f32 %v1376, %v4096
        %v4251 = vadd.f32 %v1379, %v4099
        %v4252 = vadd.f32 %v1384, %v4104
        %v4253 = vadd.f32 %v1387, %v4107
        %v4254 = vadd.f32 %v1392, %v4112
        %v4255 = vadd.f32 %v1395, %v4115
        %v4256 = vadd.f32 %v1400, %v4120
        %v4257 = vadd.f32 %v1403, %v4123
        %v4258 = vadd.f32 %v1408, %v4128
        %v4259 = vadd.f32 %v1411, %v4131
        %v4260 = vadd.f32 %v1416, %v4136
        %v4261 = vadd.f32 %v1419, %v4139
        %v4262 = vadd.f32 %v1424, %v4144
        %v4263 = vadd.f32 %v1427, %v4147
        %v4264 = vadd.f32 %v1432, %v4152
        %v4265 = vadd.f32 %v1435, %v4155
        %v4266 = vadd.f32 %v1440, %v4160
        %v4267 = vadd.f32 %v1443, %v4163
        %v4268 = vadd.f32 %v1448, %v4168
        %v4269 = vadd.f32 %v1451, %v4171
        %v4270 = vadd.f32 %v1456, %v4176
        %v4271 = vadd.f32 %v1459, %v4179
        %v4272 = vadd.f32 %v1464, %v4184
        %v4273 = vadd.f32 %v1467, %v4187
        %v4274 = vadd.f32 %v1472, %v4192
        %v4275 = vadd.f32 %v1475, %v4195
        %v4276 = vadd.f32 %v1480, %v4200
        %v4277 = vadd.f32 %v1483, %v4203
        %v4278 = vld [vmem:[%s6 + $0x2] sm:$0x1]
        %v4279 = vlaneseq
        %v4280 = vshrl.u32 %v4279, 7
        %v4281 = vsub.s32 0, %v4280
        %v4282 = vrot.slane %v4278, %v4281
        %v4283 = vadd.f32 %v4206, %v4282
        %v4284 = vadd.f32 %v4207, %v4282
        %v4285 = vadd.f32 %v4208, %v4282
        %v4286 = vadd.f32 %v4209, %v4282
        %v4287 = vadd.f32 %v4210, %v4282
        %v4288 = vadd.f32 %v4211, %v4282
        %v4289 = vadd.f32 %v4212, %v4282
        %v4290 = vadd.f32 %v4213, %v4282
        %v4291 = vadd.f32 %v4214, %v4282
        %v4292 = vadd.f32 %v4215, %v4282
        %v4293 = vadd.f32 %v4216, %v4282
        %v4294 = vadd.f32 %v4217, %v4282
        %v4295 = vadd.f32 %v4218, %v4282
        %v4296 = vadd.f32 %v4219, %v4282
        %v4297 = vadd.f32 %v4220, %v4282
        %v4298 = vadd.f32 %v4221, %v4282
        %v4299 = vadd.f32 %v4222, %v4282
        %v4300 = vadd.f32 %v4223, %v4282
        %v4301 = vadd.f32 %v4224, %v4282
        %v4302 = vadd.f32 %v4225, %v4282
        %v4303 = vadd.f32 %v4226, %v4282
        %v4304 = vadd.f32 %v4227, %v4282
        %v4305 = vadd.f32 %v4228, %v4282
        %v4306 = vadd.f32 %v4229, %v4282
        %v4307 = vadd.f32 %v4230, %v4282
        %v4308 = vadd.f32 %v4231, %v4282
        %v4309 = vadd.f32 %v4232, %v4282
        %v4310 = vadd.f32 %v4233, %v4282
        %v4311 = vadd.f32 %v4234, %v4282
        %v4312 = vadd.f32 %v4235, %v4282
        %v4313 = vadd.f32 %v4236, %v4282
        %v4314 = vadd.f32 %v4237, %v4282
        %v4315 = vadd.f32 %v4238, %v4282
        %v4316 = vadd.f32 %v4239, %v4282
        %v4317 = vadd.f32 %v4240, %v4282
        %v4318 = vadd.f32 %v4241, %v4282
        %v4319 = vadd.f32 %v4242, %v4282
        %v4320 = vadd.f32 %v4243, %v4282
        %v4321 = vadd.f32 %v4244, %v4282
        %v4322 = vadd.f32 %v4245, %v4282
        %v4323 = vadd.f32 %v4246, %v4282
        %v4324 = vadd.f32 %v4247, %v4282
        %v4325 = vadd.f32 %v4248, %v4282
        %v4326 = vadd.f32 %v4249, %v4282
        %v4327 = vadd.f32 %v4250, %v4282
        %v4328 = vadd.f32 %v4251, %v4282
        %v4329 = vadd.f32 %v4252, %v4282
        %v4330 = vadd.f32 %v4253, %v4282
        %v4331 = vadd.f32 %v4254, %v4282
        %v4332 = vadd.f32 %v4255, %v4282
        %v4333 = vadd.f32 %v4256, %v4282
        %v4334 = vadd.f32 %v4257, %v4282
        %v4335 = vadd.f32 %v4258, %v4282
        %v4336 = vadd.f32 %v4259, %v4282
        %v4337 = vadd.f32 %v4260, %v4282
        %v4338 = vadd.f32 %v4261, %v4282
        %v4339 = vadd.f32 %v4262, %v4282
        %v4340 = vadd.f32 %v4263, %v4282
        %v4341 = vadd.f32 %v4264, %v4282
        %v4342 = vadd.f32 %v4265, %v4282
        %v4343 = vadd.f32 %v4266, %v4282
        %v4344 = vadd.f32 %v4267, %v4282
        %v4345 = vadd.f32 %v4268, %v4282
        %v4346 = vadd.f32 %v4269, %v4282
        %v4347 = vadd.f32 %v4270, %v4282
        %v4348 = vadd.f32 %v4271, %v4282
        %v4349 = vadd.f32 %v4272, %v4282
        %v4350 = vadd.f32 %v4273, %v4282
        %v4351 = vadd.f32 %v4274, %v4282
        %v4352 = vadd.f32 %v4275, %v4282
        %v4353 = vadd.f32 %v4276, %v4282
        %v4354 = vadd.f32 %v4277, %v4282
        %v4355 = vmax.f32 %v4283, 0.0
        %v4356 = vmax.f32 %v4284, 0.0
        %v4357 = vmax.f32 %v4285, 0.0
        %v4358 = vmax.f32 %v4286, 0.0
        %v4359 = vmax.f32 %v4287, 0.0
        %v4360 = vmax.f32 %v4288, 0.0
        %v4361 = vmax.f32 %v4289, 0.0
        %v4362 = vmax.f32 %v4290, 0.0
        %v4363 = vmax.f32 %v4291, 0.0
        %v4364 = vmax.f32 %v4292, 0.0
        %v4365 = vmax.f32 %v4293, 0.0
        %v4366 = vmax.f32 %v4294, 0.0
        %v4367 = vmax.f32 %v4295, 0.0
        %v4368 = vmax.f32 %v4296, 0.0
        %v4369 = vmax.f32 %v4297, 0.0
        %v4370 = vmax.f32 %v4298, 0.0
        %v4371 = vmax.f32 %v4299, 0.0
        %v4372 = vmax.f32 %v4300, 0.0
        %v4373 = vmax.f32 %v4301, 0.0
        %v4374 = vmax.f32 %v4302, 0.0
        %v4375 = vmax.f32 %v4303, 0.0
        %v4376 = vmax.f32 %v4304, 0.0
        %v4377 = vmax.f32 %v4305, 0.0
        %v4378 = vmax.f32 %v4306, 0.0
        %v4379 = vmax.f32 %v4307, 0.0
        %v4380 = vmax.f32 %v4308, 0.0
        %v4381 = vmax.f32 %v4309, 0.0
        %v4382 = vmax.f32 %v4310, 0.0
        %v4383 = vmax.f32 %v4311, 0.0
        %v4384 = vmax.f32 %v4312, 0.0
        %v4385 = vmax.f32 %v4313, 0.0
        %v4386 = vmax.f32 %v4314, 0.0
        %v4387 = vmax.f32 %v4315, 0.0
        %v4388 = vmax.f32 %v4316, 0.0
        %v4389 = vmax.f32 %v4317, 0.0
        %v4390 = vmax.f32 %v4318, 0.0
        %v4391 = vmax.f32 %v4319, 0.0
        %v4392 = vmax.f32 %v4320, 0.0
        %v4393 = vmax.f32 %v4321, 0.0
        %v4394 = vmax.f32 %v4322, 0.0
        %v4395 = vmax.f32 %v4323, 0.0
        %v4396 = vmax.f32 %v4324, 0.0
        %v4397 = vmax.f32 %v4325, 0.0
        %v4398 = vmax.f32 %v4326, 0.0
        %v4399 = vmax.f32 %v4327, 0.0
        %v4400 = vmax.f32 %v4328, 0.0
        %v4401 = vmax.f32 %v4329, 0.0
        %v4402 = vmax.f32 %v4330, 0.0
        %v4403 = vmax.f32 %v4331, 0.0
        %v4404 = vmax.f32 %v4332, 0.0
        %v4405 = vmax.f32 %v4333, 0.0
        %v4406 = vmax.f32 %v4334, 0.0
        %v4407 = vmax.f32 %v4335, 0.0
        %v4408 = vmax.f32 %v4336, 0.0
        %v4409 = vmax.f32 %v4337, 0.0
        %v4410 = vmax.f32 %v4338, 0.0
        %v4411 = vmax.f32 %v4339, 0.0
        %v4412 = vmax.f32 %v4340, 0.0
        %v4413 = vmax.f32 %v4341, 0.0
        %v4414 = vmax.f32 %v4342, 0.0
        %v4415 = vmax.f32 %v4343, 0.0
        %v4416 = vmax.f32 %v4344, 0.0
        %v4417 = vmax.f32 %v4345, 0.0
        %v4418 = vmax.f32 %v4346, 0.0
        %v4419 = vmax.f32 %v4347, 0.0
        %v4420 = vmax.f32 %v4348, 0.0
        %v4421 = vmax.f32 %v4349, 0.0
        %v4422 = vmax.f32 %v4350, 0.0
        %v4423 = vmax.f32 %v4351, 0.0
        %v4424 = vmax.f32 %v4352, 0.0
        %v4425 = vmax.f32 %v4353, 0.0
        %v4426 = vmax.f32 %v4354, 0.0
        %v4427 = vadd.f32 %v4355, %v4356
        %v4428 = vadd.f32 %v4427, %v4357
        %v4429 = vadd.f32 %v4428, %v4358
        %v4430 = vadd.f32 %v4429, %v4359
        %v4431 = vadd.f32 %v4430, %v4360
        %v4432 = vadd.f32 %v4431, %v4361
        %v4433 = vadd.f32 %v4432, %v4362
        %v4434 = vadd.f32 %v4433, %v4363
        %v4435 = vadd.f32 %v4434, %v4364
        %v4436 = vadd.f32 %v4435, %v4365
        %v4437 = vadd.f32 %v4436, %v4366
        %v4438 = vadd.f32 %v4437, %v4367
        %v4439 = vadd.f32 %v4438, %v4368
        %v4440 = vadd.f32 %v4439, %v4369
        %v4441 = vadd.f32 %v4440, %v4370
        %v4442 = vadd.f32 %v4441, %v4371
        %v4443 = vadd.f32 %v4442, %v4372
        %v4444 = vadd.f32 %v4443, %v4373
        %v4445 = vadd.f32 %v4444, %v4374
        %v4446 = vadd.f32 %v4445, %v4375
        %v4447 = vadd.f32 %v4446, %v4376
        %v4448 = vadd.f32 %v4447, %v4377
        %v4449 = vadd.f32 %v4448, %v4378
        %v4450 = vadd.f32 %v4449, %v4379
        %v4451 = vadd.f32 %v4450, %v4380
        %v4452 = vadd.f32 %v4451, %v4381
        %v4453 = vadd.f32 %v4452, %v4382
        %v4454 = vadd.f32 %v4453, %v4383
        %v4455 = vadd.f32 %v4454, %v4384
        %v4456 = vadd.f32 %v4455, %v4385
        %v4457 = vadd.f32 %v4456, %v4386
        %v4458 = vadd.f32 %v4457, %v4387
        %v4459 = vadd.f32 %v4458, %v4388
        %v4460 = vadd.f32 %v4459, %v4389
        %v4461 = vadd.f32 %v4460, %v4390
        %v4462 = vadd.f32 %v4461, %v4391
        %v4463 = vadd.f32 %v4462, %v4392
        %v4464 = vadd.f32 %v4463, %v4393
        %v4465 = vadd.f32 %v4464, %v4394
        %v4466 = vadd.f32 %v4465, %v4395
        %v4467 = vadd.f32 %v4466, %v4396
        %v4468 = vadd.f32 %v4467, %v4397
        %v4469 = vadd.f32 %v4468, %v4398
        %v4470 = vadd.f32 %v4469, %v4399
        %v4471 = vadd.f32 %v4470, %v4400
        %v4472 = vadd.f32 %v4471, %v4401
        %v4473 = vadd.f32 %v4472, %v4402
        %v4474 = vadd.f32 %v4473, %v4403
        %v4475 = vadd.f32 %v4474, %v4404
        %v4476 = vadd.f32 %v4475, %v4405
        %v4477 = vadd.f32 %v4476, %v4406
        %v4478 = vadd.f32 %v4477, %v4407
        %v4479 = vadd.f32 %v4478, %v4408
        %v4480 = vadd.f32 %v4479, %v4409
        %v4481 = vadd.f32 %v4480, %v4410
        %v4482 = vadd.f32 %v4481, %v4411
        %v4483 = vadd.f32 %v4482, %v4412
        %v4484 = vadd.f32 %v4483, %v4413
        %v4485 = vadd.f32 %v4484, %v4414
        %v4486 = vadd.f32 %v4485, %v4415
        %v4487 = vadd.f32 %v4486, %v4416
        %v4488 = vadd.f32 %v4487, %v4417
        %v4489 = vadd.f32 %v4488, %v4418
        %v4490 = vadd.f32 %v4489, %v4419
        %v4491 = vadd.f32 %v4490, %v4420
        %v4492 = vadd.f32 %v4491, %v4421
        %v4493 = vadd.f32 %v4492, %v4422
        %v4494 = vadd.f32 %v4493, %v4423
        %v4495 = vadd.f32 %v4494, %v4424
        %v4496 = vadd.f32 %v4495, %v4425
        %v4497 = vadd.f32 %v4496, %v4426
        %v4498 = vrot.slane %v4497, 4
        %v4499 = vadd.f32 %v4497, %v4498
        %v4500 = vrot.slane %v4499, 2
        %v4501 = vadd.f32 %v4499, %v4500
        %v4502 = vrot.slane %v4501, 1
        %v4503 = vadd.f32 %v4501, %v4502
        %v4504 = vmul.f32 %v4503, 0.0017361111
        %s4505 = scalar_lea.vmem %s7, 256
        %v4506 = vld [vmem:[%s4505] sm:$0xff]
        %v4507 = vld [vmem:[%s4505 + $0x8] sm:$0xff]
        %v4508 = vld [vmem:[%s4505 + $0x10] sm:$0xff]
        %v4509 = vld [vmem:[%s4505 + $0x18] sm:$0xff]
        %v4510 = vld [vmem:[%s4505 + $0x20] sm:$0xff]
        %v4511 = vld [vmem:[%s4505 + $0x28] sm:$0xff]
        %v4512 = vld [vmem:[%s4505 + $0x30] sm:$0xff]
        %v4513 = vld [vmem:[%s4505 + $0x38] sm:$0xff]
        %v4514 = vld [vmem:[%s4505 + $0x40] sm:$0xff]
        %v4515 = vld [vmem:[%s4505 + $0x48] sm:$0xff]
        %v4516 = vld [vmem:[%s4505 + $0x50] sm:$0xff]
        %v4517 = vld [vmem:[%s4505 + $0x58] sm:$0xff]
        %v4518 = vld [vmem:[%s4505 + $0x60] sm:$0xff]
        %v4519 = vld [vmem:[%s4505 + $0x68] sm:$0xff]
        %v4520 = vld [vmem:[%s4505 + $0x70] sm:$0xff]
        %v4521 = vld [vmem:[%s4505 + $0x78] sm:$0xff]
        %4522 = vmatprep.subr.mxu0 0.0
        %4523 = vmatpush1.msra.mxu0 %v4521
        %4524 = vmatprep.subr.mxu0 0.0
        %4525 = vmatpush1.msra.mxu0 %v4520
        %4526 = vmatprep.subr.mxu0 0.0
        %4527 = vmatpush1.msra.mxu0 %v4519
        %4528 = vmatprep.subr.mxu0 0.0
        %4529 = vmatpush1.msra.mxu0 %v4518
        %4530 = vmatprep.subr.mxu0 0.0
        %4531 = vmatpush1.msra.mxu0 %v4517
        %4532 = vmatprep.subr.mxu0 0.0
        %4533 = vmatpush1.msra.mxu0 %v4516
        %4534 = vmatprep.subr.mxu0 0.0
        %4535 = vmatpush1.msra.mxu0 %v4515
        %4536 = vmatprep.subr.mxu0 0.0
        %4537 = vmatpush1.msra.mxu0 %v4514
        %4538 = vmatprep.subr.mxu0 0.0
        %4539 = vmatpush1.msra.mxu0 %v4513
        %4540 = vmatprep.subr.mxu0 0.0
        %4541 = vmatpush1.msra.mxu0 %v4512
        %4542 = vmatprep.subr.mxu0 0.0
        %4543 = vmatpush1.msra.mxu0 %v4511
        %4544 = vmatprep.subr.mxu0 0.0
        %4545 = vmatpush1.msra.mxu0 %v4510
        %4546 = vmatprep.subr.mxu0 0.0
        %4547 = vmatpush1.msra.mxu0 %v4509
        %4548 = vmatprep.subr.mxu0 0.0
        %4549 = vmatpush1.msra.mxu0 %v4508
        %4550 = vmatprep.subr.mxu0 0.0
        %4551 = vmatpush1.msra.mxu0 %v4507
        %4552 = vmatprep.subr.mxu0 0.0
        %4553 = vmatpush1.msra.mxu0 %v4506
        %4554 = vmatprep.subr.mxu0 0.0
        %4555 = vmatpush2.msra.mxu0 0.0
        %4556 = vmatprep.subr.mxu0 0.0
        %4557 = vmatpush2.msra.mxu0 0.0
        %4558 = vmatprep.subr.mxu0 0.0
        %4559 = vmatpush2.msra.mxu0 0.0
        %4560 = vmatprep.subr.mxu0 0.0
        %4561 = vmatpush2.msra.mxu0 0.0
        %4562 = vmatprep.subr.mxu0 0.0
        %4563 = vmatpush2.msra.mxu0 0.0
        %4564 = vmatprep.subr.mxu0 0.0
        %4565 = vmatpush2.msra.mxu0 0.0
        %4566 = vmatprep.subr.mxu0 0.0
        %4567 = vmatpush2.msra.mxu0 0.0
        %4568 = vmatprep.subr.mxu0 0.0
        %4569 = vmatpush2.msra.mxu0 0.0
        %4570 = vmatprep.subr.mxu0 0.0
        %4571 = vmatpush2.msra.mxu0 0.0
        %4572 = vmatprep.subr.mxu0 0.0
        %4573 = vmatpush2.msra.mxu0 0.0
        %4574 = vmatprep.subr.mxu0 0.0
        %4575 = vmatpush2.msra.mxu0 0.0
        %4576 = vmatprep.subr.mxu0 0.0
        %4577 = vmatpush2.msra.mxu0 0.0
        %4578 = vmatprep.subr.mxu0 0.0
        %4579 = vmatpush2.msra.mxu0 0.0
        %4580 = vmatprep.subr.mxu0 0.0
        %4581 = vmatpush2.msra.mxu0 0.0
        %4582 = vmatprep.subr.mxu0 0.0
        %4583 = vmatpush2.msra.mxu0 0.0
        %4584 = vmatprep.subr.mxu0 0.0
        %4585 = vmatpush2.msra.mxu0 0.0
        %4586 = vmatprep.mubr.f32.mxu0 0.0
        %4587 = vmatmul.mubr.f32.gmra.mxu0 %v4504
        %v4588 = vpop.f32.mrf.mxu0
        %v4589 = vadd.f32 0.0, %v4588
        %v4590 = vpop.f32.mrf.mxu0
        %4591 = vdwg.mxu0
        %v4592 = vmax.f32 %v4589, 0.0
        %s4593 = scalar_lea.vmem %s8, 64
        %v4594 = vld [vmem:[%s4593] sm:$0xff]
        %v4595 = vld [vmem:[%s4593 + $0x8] sm:$0xff]
        %v4596 = vld [vmem:[%s4593 + $0x10] sm:$0xff]
        %v4597 = vld [vmem:[%s4593 + $0x18] sm:$0xff]
        %v4599 = vsel %vm2369, %v4592, 0
        %4601 = vmatprep.subr.mxu0 0.0
        %4602 = vmatpush1.msra.mxu0 0.0
        %4603 = vmatprep.subr.mxu0 0.0
        %4604 = vmatpush1.msra.mxu0 0.0
        %4605 = vmatprep.subr.mxu0 0.0
        %4606 = vmatpush1.msra.mxu0 0.0
        %4607 = vmatprep.subr.mxu0 0.0
        %4608 = vmatpush1.msra.mxu0 0.0
        %4609 = vmatprep.subr.mxu0 0.0
        %4610 = vmatpush1.msra.mxu0 0.0
        %4611 = vmatprep.subr.mxu0 0.0
        %4612 = vmatpush1.msra.mxu0 0.0
        %4613 = vmatprep.subr.mxu0 0.0
        %4614 = vmatpush1.msra.mxu0 0.0
        %4615 = vmatprep.subr.mxu0 0.0
        %4616 = vmatpush1.msra.mxu0 0.0
        %4617 = vmatprep.subr.mxu0 0.0
        %4618 = vmatpush1.msra.mxu0 0.0
        %4619 = vmatprep.subr.mxu0 0.0
        %4620 = vmatpush1.msra.mxu0 0.0
        %4621 = vmatprep.subr.mxu0 0.0
        %4622 = vmatpush1.msra.mxu0 0.0
        %4623 = vmatprep.subr.mxu0 0.0
        %4624 = vmatpush1.msra.mxu0 0.0
        %4625 = vmatprep.subr.mxu0 0.0
        %4626 = vmatpush1.msra.mxu0 %v4597
        %4627 = vmatprep.subr.mxu0 0.0
        %4628 = vmatpush1.msra.mxu0 %v4596
        %4629 = vmatprep.subr.mxu0 0.0
        %4630 = vmatpush1.msra.mxu0 %v4595
        %4631 = vmatprep.subr.mxu0 0.0
        %4632 = vmatpush1.msra.mxu0 %v4594
        %4633 = vmatprep.subr.mxu0 0.0
        %4634 = vmatpush2.msra.mxu0 0.0
        %4635 = vmatprep.subr.mxu0 0.0
        %4636 = vmatpush2.msra.mxu0 0.0
        %4637 = vmatprep.subr.mxu0 0.0
        %4638 = vmatpush2.msra.mxu0 0.0
        %4639 = vmatprep.subr.mxu0 0.0
        %4640 = vmatpush2.msra.mxu0 0.0
        %4641 = vmatprep.subr.mxu0 0.0
        %4642 = vmatpush2.msra.mxu0 0.0
        %4643 = vmatprep.subr.mxu0 0.0
        %4644 = vmatpush2.msra.mxu0 0.0
        %4645 = vmatprep.subr.mxu0 0.0
        %4646 = vmatpush2.msra.mxu0 0.0
        %4647 = vmatprep.subr.mxu0 0.0
        %4648 = vmatpush2.msra.mxu0 0.0
        %4649 = vmatprep.subr.mxu0 0.0
        %4650 = vmatpush2.msra.mxu0 0.0
        %4651 = vmatprep.subr.mxu0 0.0
        %4652 = vmatpush2.msra.mxu0 0.0
        %4653 = vmatprep.subr.mxu0 0.0
        %4654 = vmatpush2.msra.mxu0 0.0
        %4655 = vmatprep.subr.mxu0 0.0
        %4656 = vmatpush2.msra.mxu0 0.0
        %4657 = vmatprep.subr.mxu0 0.0
        %4658 = vmatpush2.msra.mxu0 0.0
        %4659 = vmatprep.subr.mxu0 0.0
        %4660 = vmatpush2.msra.mxu0 0.0
        %4661 = vmatprep.subr.mxu0 0.0
        %4662 = vmatpush2.msra.mxu0 0.0
        %4663 = vmatprep.subr.mxu0 0.0
        %4664 = vmatpush2.msra.mxu0 0.0
        %4665 = vmatprep.mubr.f32.mxu0 0.0
        %4666 = vmatmul.mubr.f32.gmra.mxu0 %v4599
        %v4667 = vpop.f32.mrf.mxu0
        %v4668 = vadd.f32 0.0, %v4667
        %v4669 = vpop.f32.mrf.mxu0
        %4670 = vdwg.mxu0
        %v4671 = vxor.u32 %v4668, 2147483648
        %v4672 = vmul.f32 %v4671, 1.442695
        %v4673 = vpow.pop %v4672
        %v4674 = vadd.f32 %v4673, 1.0
        %v4675 = vrcp.pop %v4674
        %v4676 = vmul.f32 1.0, %v4675
        %v4677 = vadd.f32 %v4676, 1.0
        %v4678 = vlaneseq
        %v4679 = vshrl.u32 %v4678, 7
        %v4680 = vsub.s32 0, %v4679
        %v4681 = vrot.slane %v4677, %v4680
        %v4682 = vmul.f32 %v4355, %v4681
        %v4683 = vmul.f32 %v4356, %v4681
        %v4684 = vmul.f32 %v4357, %v4681
        %v4685 = vmul.f32 %v4358, %v4681
        %v4686 = vmul.f32 %v4359, %v4681
        %v4687 = vmul.f32 %v4360, %v4681
        %v4688 = vmul.f32 %v4361, %v4681
        %v4689 = vmul.f32 %v4362, %v4681
        %v4690 = vmul.f32 %v4363, %v4681
        %v4691 = vmul.f32 %v4364, %v4681
        %v4692 = vmul.f32 %v4365, %v4681
        %v4693 = vmul.f32 %v4366, %v4681
        %v4694 = vmul.f32 %v4367, %v4681
        %v4695 = vmul.f32 %v4368, %v4681
        %v4696 = vmul.f32 %v4369, %v4681
        %v4697 = vmul.f32 %v4370, %v4681
        %v4698 = vmul.f32 %v4371, %v4681
        %v4699 = vmul.f32 %v4372, %v4681
        %v4700 = vmul.f32 %v4373, %v4681
        %v4701 = vmul.f32 %v4374, %v4681
        %v4702 = vmul.f32 %v4375, %v4681
        %v4703 = vmul.f32 %v4376, %v4681
        %v4704 = vmul.f32 %v4377, %v4681
        %v4705 = vmul.f32 %v4378, %v4681
        %v4706 = vmul.f32 %v4379, %v4681
        %v4707 = vmul.f32 %v4380, %v4681
        %v4708 = vmul.f32 %v4381, %v4681
        %v4709 = vmul.f32 %v4382, %v4681
        %v4710 = vmul.f32 %v4383, %v4681
        %v4711 = vmul.f32 %v4384, %v4681
        %v4712 = vmul.f32 %v4385, %v4681
        %v4713 = vmul.f32 %v4386, %v4681
        %v4714 = vmul.f32 %v4387, %v4681
        %v4715 = vmul.f32 %v4388, %v4681
        %v4716 = vmul.f32 %v4389, %v4681
        %v4717 = vmul.f32 %v4390, %v4681
        %v4718 = vmul.f32 %v4391, %v4681
        %v4719 = vmul.f32 %v4392, %v4681
        %v4720 = vmul.f32 %v4393, %v4681
        %v4721 = vmul.f32 %v4394, %v4681
        %v4722 = vmul.f32 %v4395, %v4681
        %v4723 = vmul.f32 %v4396, %v4681
        %v4724 = vmul.f32 %v4397, %v4681
        %v4725 = vmul.f32 %v4398, %v4681
        %v4726 = vmul.f32 %v4399, %v4681
        %v4727 = vmul.f32 %v4400, %v4681
        %v4728 = vmul.f32 %v4401, %v4681
        %v4729 = vmul.f32 %v4402, %v4681
        %v4730 = vmul.f32 %v4403, %v4681
        %v4731 = vmul.f32 %v4404, %v4681
        %v4732 = vmul.f32 %v4405, %v4681
        %v4733 = vmul.f32 %v4406, %v4681
        %v4734 = vmul.f32 %v4407, %v4681
        %v4735 = vmul.f32 %v4408, %v4681
        %v4736 = vmul.f32 %v4409, %v4681
        %v4737 = vmul.f32 %v4410, %v4681
        %v4738 = vmul.f32 %v4411, %v4681
        %v4739 = vmul.f32 %v4412, %v4681
        %v4740 = vmul.f32 %v4413, %v4681
        %v4741 = vmul.f32 %v4414, %v4681
        %v4742 = vmul.f32 %v4415, %v4681
        %v4743 = vmul.f32 %v4416, %v4681
        %v4744 = vmul.f32 %v4417, %v4681
        %v4745 = vmul.f32 %v4418, %v4681
        %v4746 = vmul.f32 %v4419, %v4681
        %v4747 = vmul.f32 %v4420, %v4681
        %v4748 = vmul.f32 %v4421, %v4681
        %v4749 = vmul.f32 %v4422, %v4681
        %v4750 = vmul.f32 %v4423, %v4681
        %v4751 = vmul.f32 %v4424, %v4681
        %v4752 = vmul.f32 %v4425, %v4681
        %v4753 = vmul.f32 %v4426, %v4681
        %4754 = vst [vmem:[%s492] sm:$0xff] %v4682
        %4755 = vst [vmem:[%s492 + $0x8] sm:$0xff] %v4683
        %4756 = vst [vmem:[%s492 + $0x10] sm:$0xff] %v4684
        %4757 = vst [vmem:[%s492 + $0x18] sm:$0xff] %v4685
        %4758 = vst [vmem:[%s492 + $0x20] sm:$0xff] %v4686
        %4759 = vst [vmem:[%s492 + $0x28] sm:$0xff] %v4687
        %4760 = vst [vmem:[%s492 + $0x30] sm:$0xff] %v4688
        %4761 = vst [vmem:[%s492 + $0x38] sm:$0xff] %v4689
        %4762 = vst [vmem:[%s492 + $0x40] sm:$0xff] %v4690
        %4763 = vst [vmem:[%s492 + $0x48] sm:$0xff] %v4691
        %4764 = vst [vmem:[%s492 + $0x50] sm:$0xff] %v4692
        %4765 = vst [vmem:[%s492 + $0x58] sm:$0xff] %v4693
        %4766 = vst [vmem:[%s492 + $0x60] sm:$0xff] %v4694
        %4767 = vst [vmem:[%s492 + $0x68] sm:$0xff] %v4695
        %4768 = vst [vmem:[%s492 + $0x70] sm:$0xff] %v4696
        %4769 = vst [vmem:[%s492 + $0x78] sm:$0xff] %v4697
        %4770 = vst [vmem:[%s492 + $0x80] sm:$0xff] %v4698
        %4771 = vst [vmem:[%s492 + $0x88] sm:$0xff] %v4699
        %4772 = vst [vmem:[%s492 + $0x90] sm:$0xff] %v4700
        %4773 = vst [vmem:[%s492 + $0x98] sm:$0xff] %v4701
        %4774 = vst [vmem:[%s492 + $0xa0] sm:$0xff] %v4702
        %4775 = vst [vmem:[%s492 + $0xa8] sm:$0xff] %v4703
        %4776 = vst [vmem:[%s492 + $0xb0] sm:$0xff] %v4704
        %4777 = vst [vmem:[%s492 + $0xb8] sm:$0xff] %v4705
        %4778 = vst [vmem:[%s492 + $0xc0] sm:$0xff] %v4706
        %4779 = vst [vmem:[%s492 + $0xc8] sm:$0xff] %v4707
        %4780 = vst [vmem:[%s492 + $0xd0] sm:$0xff] %v4708
        %4781 = vst [vmem:[%s492 + $0xd8] sm:$0xff] %v4709
        %4782 = vst [vmem:[%s492 + $0xe0] sm:$0xff] %v4710
        %4783 = vst [vmem:[%s492 + $0xe8] sm:$0xff] %v4711
        %4784 = vst [vmem:[%s492 + $0xf0] sm:$0xff] %v4712
        %4785 = vst [vmem:[%s492 + $0xf8] sm:$0xff] %v4713
        %4786 = vst [vmem:[%s492 + $0x100] sm:$0xff] %v4714
        %4787 = vst [vmem:[%s492 + $0x108] sm:$0xff] %v4715
        %4788 = vst [vmem:[%s492 + $0x110] sm:$0xff] %v4716
        %4789 = vst [vmem:[%s492 + $0x118] sm:$0xff] %v4717
        %4790 = vst [vmem:[%s492 + $0x120] sm:$0xff] %v4718
        %4791 = vst [vmem:[%s492 + $0x128] sm:$0xff] %v4719
        %4792 = vst [vmem:[%s492 + $0x130] sm:$0xff] %v4720
        %4793 = vst [vmem:[%s492 + $0x138] sm:$0xff] %v4721
        %4794 = vst [vmem:[%s492 + $0x140] sm:$0xff] %v4722
        %4795 = vst [vmem:[%s492 + $0x148] sm:$0xff] %v4723
        %4796 = vst [vmem:[%s492 + $0x150] sm:$0xff] %v4724
        %4797 = vst [vmem:[%s492 + $0x158] sm:$0xff] %v4725
        %4798 = vst [vmem:[%s492 + $0x160] sm:$0xff] %v4726
        %4799 = vst [vmem:[%s492 + $0x168] sm:$0xff] %v4727
        %4800 = vst [vmem:[%s492 + $0x170] sm:$0xff] %v4728
        %4801 = vst [vmem:[%s492 + $0x178] sm:$0xff] %v4729
        %4802 = vst [vmem:[%s492 + $0x180] sm:$0xff] %v4730
        %4803 = vst [vmem:[%s492 + $0x188] sm:$0xff] %v4731
        %4804 = vst [vmem:[%s492 + $0x190] sm:$0xff] %v4732
        %4805 = vst [vmem:[%s492 + $0x198] sm:$0xff] %v4733
        %4806 = vst [vmem:[%s492 + $0x1a0] sm:$0xff] %v4734
        %4807 = vst [vmem:[%s492 + $0x1a8] sm:$0xff] %v4735
        %4808 = vst [vmem:[%s492 + $0x1b0] sm:$0xff] %v4736
        %4809 = vst [vmem:[%s492 + $0x1b8] sm:$0xff] %v4737
        %4810 = vst [vmem:[%s492 + $0x1c0] sm:$0xff] %v4738
        %4811 = vst [vmem:[%s492 + $0x1c8] sm:$0xff] %v4739
        %4812 = vst [vmem:[%s492 + $0x1d0] sm:$0xff] %v4740
        %4813 = vst [vmem:[%s492 + $0x1d8] sm:$0xff] %v4741
        %4814 = vst [vmem:[%s492 + $0x1e0] sm:$0xff] %v4742
        %4815 = vst [vmem:[%s492 + $0x1e8] sm:$0xff] %v4743
        %4816 = vst [vmem:[%s492 + $0x1f0] sm:$0xff] %v4744
        %4817 = vst [vmem:[%s492 + $0x1f8] sm:$0xff] %v4745
        %4818 = vst [vmem:[%s492 + $0x200] sm:$0xff] %v4746
        %4819 = vst [vmem:[%s492 + $0x208] sm:$0xff] %v4747
        %4820 = vst [vmem:[%s492 + $0x210] sm:$0xff] %v4748
        %4821 = vst [vmem:[%s492 + $0x218] sm:$0xff] %v4749
        %4822 = vst [vmem:[%s492 + $0x220] sm:$0xff] %v4750
        %4823 = vst [vmem:[%s492 + $0x228] sm:$0xff] %v4751
        %4824 = vst [vmem:[%s492 + $0x230] sm:$0xff] %v4752
        %4825 = vst [vmem:[%s492 + $0x238] sm:$0xff] %v4753
        %s4826 = sand.u32 %s252, 1
        %s4827 = scalar_lea.sflag [#allocation4], %s4826
        %s4828 = sand.u32 %s252, 1
        %s4829 = smul.addr %s4828, 576
        %s4830 = scalar_lea.vmem [#allocation7], %s4829
        %s4831 = sand.u32 %s35, 1
        %s4832 = scalar_lea.sflag [#allocation9], %s4831
        %s4833 = sand.u32 %s278, 1
        %s4834 = smul.addr %s4833, 576
        %s4835 = scalar_lea.vmem [#allocation8], %s4834
        %s4836 = sand.u32 %s35, 1
        %s4837 = scalar_lea.sflag [#allocation9], %s4836
        %s4838 = sand.u32 %s304, 1
        %s4839 = smul.addr %s4838, 576
        %s4840 = scalar_lea.vmem [#allocation10], %s4839
        // Predicated region
        $region65: #{ffm_forward.1} parent=55 // pred_check
          %p4841 = pneg %p262
        $region66: #{ffm_forward.1} parent=55 // pred_check_branch
          %4843 = sbr.rel (%p4841) target = $region68
        $region67: #{ffm_forward.1} parent=55 // pred_region
          %s4845 = ssub.s32 9216, 9216
          %4846 = vsyncadd %s4827, %s4845
          %s4847 = smul.addr %s35, 72
          %s4848 = smul.addr %s4847, 128
          %s4849 = scalar_lea.hbm %s9, %s4848
          %s4850 = sshll.u32 %s4830, 4
          %s4851 = int_to_ptr.vmem [resolvable:$true] %s4850
          %4856 = dma.vmem_to_hbm [thread:$0]  %s4851, 9216, %s4849, %s4827, 128, 128, 8
        $region68: #{ffm_forward.1} parent=55 // pred_fallthru
          _
        // Predicated region
        $region69: #{ffm_forward.1} parent=55 // pred_check
          %p4857 = pneg %p288
        $region70: #{ffm_forward.1} parent=55 // pred_check_branch
          %4859 = sbr.rel (%p4857) target = $region72
        $region71: #{ffm_forward.1} parent=55 // pred_region
          %s4861 = ssub.s32 9216, 9216
          %4862 = vsyncadd %s4832, %s4861
          %s4863 = smul.addr %s35, 72
          %s4864 = smul.addr %s4863, 128
          %s4865 = scalar_lea.hbm %s10, %s4864
          %s4866 = sshll.u32 %s4835, 4
          %s4867 = int_to_ptr.vmem [resolvable:$true] %s4866
          %4872 = dma.vmem_to_hbm [thread:$0]  %s4867, 9216, %s4865, %s4832, 128, 128, 8
        $region72: #{ffm_forward.1} parent=55 // pred_fallthru
          _
        // Predicated region
        $region73: #{ffm_forward.1} parent=55 // pred_check
          %p4873 = pneg %p314
        $region74: #{ffm_forward.1} parent=55 // pred_check_branch
          %4875 = sbr.rel (%p4873) target = $region76
        $region75: #{ffm_forward.1} parent=55 // pred_region
          %s4877 = ssub.s32 9216, 9216
          %4878 = vsyncadd %s4837, %s4877
          %s4879 = smul.addr %s35, 72
          %s4880 = smul.addr %s4879, 128
          %s4881 = scalar_lea.hbm %s11, %s4880
          %s4882 = sshll.u32 %s4840, 4
          %s4883 = int_to_ptr.vmem [resolvable:$true] %s4882
          %4888 = dma.vmem_to_hbm [thread:$0]  %s4883, 9216, %s4881, %s4837, 128, 128, 8
        $region76: #{ffm_forward.1} parent=55 // pred_fallthru
          _
      $region56: #{ffm_forward.1} parent=5 // pred_fallthru
        _
      %p4889 = scmp.le.s32.totalorder 2, %s30
      // Predicated region
      $region77: #{ffm_forward.1} parent=5 // pred_check
        %p4890 = pneg %p4889
      $region78: #{ffm_forward.1} parent=5 // pred_check_branch
        %4892 = sbr.rel (%p4890) target = $region80
      $region79: #{ffm_forward.1} parent=5 // pred_region
        %s4893 = ssub.s32 %s30, 2
        // Predicated region
        $region81: #{ffm_forward.1} parent=79 // pred_check
          %p4894 = pneg %p268
        $region82: #{ffm_forward.1} parent=79 // pred_check_branch
          %4896 = sbr.rel (%p4894) target = $region84
        $region83: #{ffm_forward.1} parent=79 // pred_region
          %s4897 = sand.u32 %s253, 1
          %s4898 = scalar_lea.sflag [#allocation4], %s4897
          %s4899 = sand.u32 %s253, 1
          %s4900 = smul.addr %s4899, 576
          %s4901 = scalar_lea.vmem [#allocation7], %s4900
          %4902 = dma.done %s4898, 9216
        $region84: #{ffm_forward.1} parent=79 // pred_fallthru
          _
        // Predicated region
        $region85: #{ffm_forward.1} parent=79 // pred_check
          %p4903 = pneg %p294
        $region86: #{ffm_forward.1} parent=79 // pred_check_branch
          %4905 = sbr.rel (%p4903) target = $region88
        $region87: #{ffm_forward.1} parent=79 // pred_region
          %s4906 = sand.u32 %s36, 1
          %s4907 = scalar_lea.sflag [#allocation9], %s4906
          %s4908 = sand.u32 %s279, 1
          %s4909 = smul.addr %s4908, 576
          %s4910 = scalar_lea.vmem [#allocation8], %s4909
          %4911 = dma.done %s4907, 9216
        $region88: #{ffm_forward.1} parent=79 // pred_fallthru
          _
        // Predicated region
        $region89: #{ffm_forward.1} parent=79 // pred_check
          %p4912 = pneg %p320
        $region90: #{ffm_forward.1} parent=79 // pred_check_branch
          %4914 = sbr.rel (%p4912) target = $region92
        $region91: #{ffm_forward.1} parent=79 // pred_region
          %s4915 = sand.u32 %s36, 1
          %s4916 = scalar_lea.sflag [#allocation9], %s4915
          %s4917 = sand.u32 %s305, 1
          %s4918 = smul.addr %s4917, 576
          %s4919 = scalar_lea.vmem [#allocation10], %s4918
          %4920 = dma.done %s4916, 9216
        $region92: #{ffm_forward.1} parent=79 // pred_fallthru
          _
      $region80: #{ffm_forward.1} parent=5 // pred_fallthru
        _
    $region6: #{ffm_forward.1} parent=1 // loop_footer
      %s34 = sadd.s32 1, %s30
    $region7: #{ffm_forward.1} parent=1 // loop_footer_branch
      %29 = sbr.rel target = $region3
    $region8: #{ffm_forward.1} parent=1 // loop_exit
      _
    %4921 = vsyncpa [#allocation3], 1
    %s4922 = scalar_lea.sflag [#allocation3], 1
    %4923 = vsyncpa %s4922, 1
    %4924 = vsyncpa [#allocation6], 1
    %s4925 = scalar_lea.sflag [#allocation6], 1
    %4926 = vsyncpa %s4925, 1
    %4927 = vsyncpa [#allocation4], 1
    %s4928 = scalar_lea.sflag [#allocation4], 1
    %4929 = vsyncpa %s4928, 1
    %4930 = vsyncpa [#allocation9], 1
    %s4931 = scalar_lea.sflag [#allocation9], 1
    %4932 = vsyncpa %s4931, 1

</llo_original>
